<compile_context>
chip_gen: v7x
topology: tpu7x:2x2x1
jax: 0.10.0
libtpu: 0.0.40
codegen_flags: <defaults>
</compile_context>

<pallas_src>
import functools
import math

import jax
import jax.numpy as jnp
from jax import lax
from jax.experimental import pallas as pl
from jax.experimental.pallas import tpu as pltpu


def _round_up(x, m):
    return (x + m - 1) // m * m


_SQRT_HALF = 0.7071067811865476


def _gelu_exact(x):
    """Exact (erf-based) GELU, matching torch.nn.GELU() default.

    erf uses the Abramowitz & Stegun 7.1.26 rational approximation (|err|<1.5e-7);
    the divide goes through pl.reciprocal(approx=True) -> EUP slot, not VALU.
    """
    z = x * _SQRT_HALF
    az = jnp.abs(z)
    t = pl.reciprocal(1.0 + 0.3275911 * az, approx=True)
    poly = ((((1.061405429 * t - 1.453152027) * t + 1.421413741) * t
             - 0.284496736) * t + 0.254829592) * t
    erf_abs = 1.0 - poly * jnp.exp(-az * az)
    erf = jnp.where(z >= 0.0, erf_abs, -erf_abs)
    return 0.5 * x * (1.0 + erf)


def _conv_acc(xv_ref, halo_ref, wq_ref, win_ref, *, n_taps, tile_t, fuse):
    """f32 conv accumulator (tile_t, Cout_pad) for the current time tile.

    xv_ref  : (1, tile_t, s_cin)          stride-folded input view tile
    halo_ref: (1, 1, n_taps-1, s_cin)     first view rows of the next tile (n_taps>1)
    wq_ref  : (n_taps*s_cin, Cout_pad)    fused packed weights          (fuse=True)
              (n_taps, s_cin, Cout_pad)   per-tap packed weights        (fuse=False)
    win_ref : (tile_t + n_taps-1, s_cin)  VMEM window scratch           (n_taps>1)
    """
    if n_taps == 1:
        # K == stride: no halo / window copy -- dot straight off the input tile.
        return jnp.dot(xv_ref[0], wq_ref[...], preferred_element_type=jnp.float32)
    win_ref[:tile_t, :] = xv_ref[0]
    win_ref[tile_t:, :] = halo_ref[0, 0]
    if fuse:
        # Lane-aligned (s_cin % 128 == 0): concatenate the taps along lanes and run
        # a single MXU matmul (one fill/drain, one accumulator pass).
        lhs = jnp.concatenate([win_ref[q:q + tile_t, :] for q in range(n_taps)],
                              axis=1)
        return jnp.dot(lhs, wq_ref[...], preferred_element_type=jnp.float32)
    # Small unaligned lane width (layer 0, Cin=1): per-tap matmuls are tiny and the
    # layer is HBM-write bound anyway.
    acc = jnp.zeros((tile_t, wq_ref.shape[-1]), jnp.float32)
    for q in range(n_taps):
        acc += jnp.dot(win_ref[q:q + tile_t, :], wq_ref[q],
                       preferred_element_type=jnp.float32)
    return acc


def _conv_stats_kernel(*args, n_taps, tile_t, t_out, fuse):
    """GroupNorm pass 1: per-tile partial per-channel sum / sum-of-squares of the
    conv output (time padding masked).  Both grid axes are 'parallel'; the final
    reduction over tiles happens in the wrapper in f32."""
    if n_taps > 1:
        xv_ref, halo_ref, wq_ref, sum_ref, ssq_ref, win_ref = args
    else:
        xv_ref, wq_ref, sum_ref, ssq_ref = args
        halo_ref = win_ref = None
    t = pl.program_id(1)
    acc = _conv_acc(xv_ref, halo_ref, wq_ref, win_ref,
                    n_taps=n_taps, tile_t=tile_t, fuse=fuse)
    rows = t * tile_t + lax.broadcasted_iota(jnp.int32, (tile_t, 1), 0)
    acc = jnp.where(rows < t_out, acc, 0.0)              # mask time padding
    part_sum = jnp.sum(acc, axis=0, keepdims=True)       # (1, Cout_pad)
    part_ssq = jnp.sum(acc * acc, axis=0, keepdims=True)
    # Output block is (1, 8, Cout_pad): row 0 carries the partial, rows 1..7 are 0
    # so the wrapper reduces with a plain sum over the tile axis.
    row = lax.broadcasted_iota(jnp.int32, (8, acc.shape[-1]), 0)
    sum_ref[...] = jnp.where(row == 0, part_sum, 0.0)[None]
    ssq_ref[...] = jnp.where(row == 0, part_ssq, 0.0)[None]


def _conv_fwd_kernel(*args, n_taps, tile_t, apply_gn, fuse):
    """Pass 2: Conv1d tile -> [GroupNorm via precomputed scale/shift] -> GELU."""
    idx = 0
    xv_ref = args[idx]
    idx += 1
    halo_ref = None
    if n_taps > 1:
        halo_ref = args[idx]
        idx += 1
    wq_ref = args[idx]
    idx += 1
    scale_ref = shift_ref = None
    if apply_gn:
        scale_ref, shift_ref = args[idx], args[idx + 1]
        idx += 2
    o_ref = args[idx]
    idx += 1
    win_ref = args[idx] if n_taps > 1 else None

    acc = _conv_acc(xv_ref, halo_ref, wq_ref, win_ref,
                    n_taps=n_taps, tile_t=tile_t, fuse=fuse)
    if apply_gn:
        acc = acc * scale_ref[0] + shift_ref[0]           # f32 affine from stats
    o_ref[...] = _gelu_exact(acc)[None].astype(o_ref.dtype)


def _plan_layers(conv_layers, t_in, tile_t):
    """Plan tiling back-to-front so every layer's (finite) padded output already
    covers the next layer's stride-folded view -- no inter-layer jnp.pad / copies."""
    n = len(conv_layers)
    t_true = [t_in]
    for _, k, s in conv_layers:
        t_true.append((t_true[-1] - k) // s + 1)
    plans = [None] * n
    need_next, stride_next = 0, 1
    for i in range(n - 1, -1, -1):
        dim, k, s = conv_layers[i]
        n_taps = -(-k // s)                       # ceil(K / stride)
        t_out = t_true[i + 1]
        t_target = max(t_out, need_next)
        # Tile must be a sublane multiple (16 for bf16) and a multiple of the next
        # layer's stride so the consumer's reshape view stays a free bitcast.
        mult = 16 * stride_next // math.gcd(16, stride_next)
        tt = min(_round_up(tile_t, mult), _round_up(t_target, mult))
        num_t = -(-t_target // tt)
        t_alloc = num_t * tt
        need_in = (t_alloc + n_taps - 1) * s
        plans[i] = dict(dim=dim, k=k, stride=s, t_out=t_out, n_taps=n_taps,
                        tt=tt, num_t=num_t, t_alloc=t_alloc, need_in=need_in)
        need_next, stride_next = need_in, s
    return plans, t_true


def _conv_layer(x_nwc, c_in, lp, plan, *, apply_gn, compute_dtype, out_dtype,
                eps=1e-5):
    """One conv block in NWC layout on a time/channel padded activation.

    x_nwc: (B, t_rows, c_arr) in compute_dtype with t_rows % stride == 0 and
    t_rows >= plan['need_in']; padded channels are exactly zero and padded time
    rows are finite.  Returns (B, t_alloc, Cout_pad) in out_dtype with the same
    invariants (valid outputs never read garbage rows).
    """
    B, t_rows, c_arr = x_nwc.shape
    k, stride, c_out = plan["k"], plan["stride"], plan["dim"]
    tt, num_t, t_alloc = plan["tt"], plan["num_t"], plan["t_alloc"]
    t_out, n_taps = plan["t_out"], plan["n_taps"]
    assert t_rows % stride == 0 and t_rows >= plan["need_in"], (t_rows, plan)

    c_out_pad = _round_up(c_out, 128)             # lane-dense output (unmasked vst)
    s_cin = stride * c_arr
    hp = n_taps - 1
    fuse = (n_taps == 1) or (s_cin % 128 == 0)
    tv = t_rows // stride

    # Stride-folded view xv[b, t, r*c_arr + c] = x[b, t*stride + r, c]: a free,
    # layout-preserving reshape (t_rows is a multiple of stride by construction).
    xv = x_nwc.reshape(B, tv, s_cin)

    args = [xv]
    in_specs = [pl.BlockSpec((1, tt, s_cin), lambda b, t: (b, t, 0))]
    scratch = []
    if n_taps > 1:
        # Tiny per-tile halo: the first n_taps-1 view rows of the next tile.
        hidx = (jnp.arange(num_t)[:, None] + 1) * tt + jnp.arange(hp)[None, :]
        halo = jnp.take(xv, hidx, axis=1)         # (B, num_t, hp, s_cin)
        args.append(halo)
        in_specs.append(pl.BlockSpec((1, 1, hp, s_cin), lambda b, t: (b, t, 0, 0)))
        scratch.append(pltpu.VMEM((tt + hp, s_cin), compute_dtype))

    # Pack the conv weight: row q*s_cin + r*c_arr + c <-> kernel tap q*stride + r,
    # input channel c (zero rows for padded channels / taps past K).
    w = lp["w"].astype(jnp.float32)               # (c_out, c_in, k)
    wt = jnp.transpose(w, (2, 1, 0))              # (k, c_in, c_out)
    wq = jnp.zeros((n_taps, stride, c_arr, c_out_pad), jnp.float32)
    for kk in range(k):
        q, r = divmod(kk, stride)
        wq = wq.at[q, r, :c_in, :c_out].set(wt[kk])
    if fuse:
        wq = wq.reshape(n_taps * s_cin, c_out_pad).astype(compute_dtype)
        in_specs.append(pl.BlockSpec((n_taps * s_cin, c_out_pad),
                                     lambda b, t: (0, 0)))
    else:
        wq = wq.reshape(n_taps, s_cin, c_out_pad).astype(compute_dtype)
        in_specs.append(pl.BlockSpec((n_taps, s_cin, c_out_pad),
                                     lambda b, t: (0, 0, 0)))
    args.append(wq)

    # VMEM budget: always set the limit (v5e's default scoped limit is only 16 MiB)
    # and cap at 56 MiB so there is headroom inside v7x's 64 MiB per TensorCore.
    itm = jnp.dtype(compute_dtype).itemsize
    o_itm = jnp.dtype(out_dtype).itemsize
    vmem_est = (2 * tt * s_cin * itm                      # xv tile, double-buffered
                + 2 * hp * s_cin * itm                    # halo
                + 2 * wq.size * itm                       # weights, double-buffered
                + 2 * tt * c_out_pad * o_itm              # output, double-buffered
                + (tt + hp) * s_cin * itm                 # window scratch
                + n_taps * tt * s_cin * itm               # fused lhs temporary
                + 4 * tt * c_out_pad * 4                  # f32 acc + GELU temps
                + (2 << 20))
    vmem_limit = int(min(max(vmem_est, 24 << 20), 56 << 20))

    if apply_gn:
        # Pass 1: per-tile partial sums (both axes parallel -> both v7x TCs busy
        # even at B == 1); reduce + compute scale/shift once in f32 here.
        stat_spec = pl.BlockSpec((1, 8, c_out_pad), lambda b, t: (b, t, 0))
        ssum, ssq = pl.pallas_call(
            functools.partial(_conv_stats_kernel, n_taps=n_taps, tile_t=tt,
                              t_out=t_out, fuse=fuse),
            out_shape=(jax.ShapeDtypeStruct((B, 8 * num_t, c_out_pad), jnp.float32),
                       jax.ShapeDtypeStruct((B, 8 * num_t, c_out_pad), jnp.float32)),
            grid=(B, num_t),
            in_specs=list(in_specs),
            out_specs=(stat_spec, stat_spec),
            scratch_shapes=list(scratch),
            compiler_params=pltpu.CompilerParams(
                dimension_semantics=("parallel", "parallel"),
                vmem_limit_bytes=vmem_limit),
        )(*args)
        inv_n = 1.0 / float(t_out)
        mean = jnp.sum(ssum, axis=1) * inv_n              # (B, Cout_pad)
        var = jnp.maximum(jnp.sum(ssq, axis=1) * inv_n - mean * mean, 0.0)
        gamma = jnp.zeros((c_out_pad,), jnp.float32).at[:c_out].set(
            lp["gamma"].reshape(-1).astype(jnp.float32))
        beta = jnp.zeros((c_out_pad,), jnp.float32).at[:c_out].set(
            lp["beta"].reshape(-1).astype(jnp.float32))
        scale = jax.lax.rsqrt(var + eps) * gamma[None]    # (B, Cout_pad)
        shift = beta[None] - mean * scale
        args = args + [scale[:, None, :], shift[:, None, :]]
        in_specs = in_specs + [
            pl.BlockSpec((1, 1, c_out_pad), lambda b, t: (b, 0, 0)),
            pl.BlockSpec((1, 1, c_out_pad), lambda b, t: (b, 0, 0)),
        ]

    flops = 2 * B * t_alloc * (n_taps * s_cin) * c_out_pad
    bytes_accessed = (xv.size * itm + wq.size * itm
                      + B * t_alloc * c_out_pad * o_itm)

    y = pl.pallas_call(
        functools.partial(_conv_fwd_kernel, n_taps=n_taps, tile_t=tt,
                          apply_gn=apply_gn, fuse=fuse),
        out_shape=jax.ShapeDtypeStruct((B, t_alloc, c_out_pad), out_dtype),
        grid=(B, num_t),
        in_specs=in_specs,
        out_specs=pl.BlockSpec((1, tt, c_out_pad), lambda b, t: (b, t, 0)),
        scratch_shapes=list(scratch),
        compiler_params=pltpu.CompilerParams(
            dimension_semantics=("parallel", "parallel"),
            vmem_limit_bytes=vmem_limit),
        cost_estimate=pl.CostEstimate(flops=flops,
                                      transcendentals=B * t_alloc * c_out_pad,
                                      bytes_accessed=bytes_accessed),
    )(*args)
    return y


def conv_feature_extraction(x, params, conv_layers, mode="default", *,
                            tile_t=1024, compute_dtype=jnp.bfloat16):
    """Forward pass of ConvFeatureExtraction.

    x: (B, T) or (B, Cin, T) in the PyTorch NCW layout.  Returns (B, C_last, T_last)
    float32, matching the PyTorch module.  Activations stay in NWC between layers,
    stored in compute_dtype (bf16) with time/channel padding; padding is sliced off
    at the end.
    """
    assert mode in ("default", "layer_norm")
    if x.ndim < 3:
        x = x[:, None, :]                         # unsqueeze(1)
    B, c_true, t_true = x.shape
    plans, t_trues = _plan_layers(conv_layers, t_true, tile_t)

    # One NCW->NWC transpose + one zero-pad of the raw waveform (cheap: C == in_d);
    # every later layer over-allocates its own output so no inter-layer pad / cast.
    x_nwc = jnp.transpose(x, (0, 2, 1)).astype(compute_dtype)
    s0 = conv_layers[0][2]
    rows0 = _round_up(max(plans[0]["need_in"], t_true), s0)
    if rows0 > t_true:
        x_nwc = jnp.pad(x_nwc, ((0, 0), (0, rows0 - t_true), (0, 0)))

    n_layers = len(conv_layers)
    for i, (plan, lp) in enumerate(zip(plans, params)):
        # In this module, GroupNorm is only on the first block in 'default' mode
        # (the given source applies no norm at all in 'layer_norm' mode).
        apply_gn = (mode == "default" and i == 0)
        out_dtype = jnp.float32 if i == n_layers - 1 else compute_dtype
        x_nwc = _conv_layer(x_nwc, c_true, lp, plan, apply_gn=apply_gn,
                            compute_dtype=compute_dtype, out_dtype=out_dtype)
        c_true = plan["dim"]

    y = x_nwc[:, :t_trues[-1], :c_true]           # drop time / channel padding
    return jnp.transpose(y, (0, 2, 1))            # back to NCW


def _reference(x, params, conv_layers, mode="default", compute_dtype=jnp.bfloat16):
    """Plain-JAX reference mirroring the PyTorch forward, with the conv (matmul)
    inputs rounded to the same compute dtype the kernel uses (f32 everywhere else)."""
    if x.ndim < 3:
        x = x[:, None, :]
    for i, ((dim, k, s), lp) in enumerate(zip(conv_layers, params)):
        xq = x.astype(compute_dtype).astype(jnp.float32)
        wq = lp["w"].astype(compute_dtype).astype(jnp.float32)
        y = jax.lax.conv_general_dilated(
            xq, wq, (s,), "VALID", dimension_numbers=("NCH", "OIH", "NCH"))
        if mode == "default" and i == 0:
            mean = y.mean(axis=2, keepdims=True)
            var = ((y - mean) ** 2).mean(axis=2, keepdims=True)
            y = (y - mean) / jnp.sqrt(var + 1e-5)
            y = y * lp["gamma"].reshape(1, dim, 1) + lp["beta"].reshape(1, dim, 1)
        y = 0.5 * y * (1.0 + jax.scipy.special.erf(y / jnp.sqrt(2.0)))
        x = y
    return x


if __name__ == "__main__":
    key = jax.random.PRNGKey(0)
    # (dim, kernel, stride) per layer -- exercises all three conv paths:
    # per-tap (Cin=1, unaligned lanes), fused single-matmul, and K == stride.
    conv_layers = [(32, 10, 5), (32, 3, 2), (32, 2, 2)]
    B, T = 2, 128

    keys = jax.random.split(key, 1 + len(conv_layers))
    x = jax.random.normal(keys[0], (B, T), jnp.float32)       # raw waveform (B, T)

    # Deterministic params: Conv1d weights ~ kaiming_normal_ (fan_in = Cin*K,
    # gain = sqrt(2)), no conv bias; GroupNorm affine: weight=1, bias=0.
    params = []
    in_d = 1
    for i, ((dim, k, s), kw) in enumerate(zip(conv_layers, keys[1:])):
        std = (2.0 / (in_d * k)) ** 0.5
        p = {"w": jax.random.normal(kw, (dim, in_d, k), jnp.float32) * std}
        if i == 0:  # mode='default' -> group norm only on the first block
            p["gamma"] = jnp.ones((1, dim), jnp.float32)
            p["beta"] = jnp.zeros((1, dim), jnp.float32)
        params.append(p)
        in_d = dim

    run = jax.jit(lambda inp: conv_feature_extraction(inp, params, conv_layers))
    out = jax.block_until_ready(run(x))

    ref = jax.block_until_ready(_reference(x, params, conv_layers))
    assert out.shape == ref.shape, (out.shape, ref.shape)
    err = float(jnp.max(jnp.abs(out - ref)))
    # bf16 matmul inputs / bf16 inter-layer storage + EUP-approx reciprocal in the
    # erf: compare against a reference that quantizes the matmul inputs the same
    # way, with loosened tolerance (ulp-level bf16 rounding differences compound
    # across three layers).
    assert jnp.allclose(out, ref, atol=3e-2, rtol=3e-2), err
    print("KERNEL_OK")
</pallas_src>

<mosaic_0001>
module attributes {stable_mosaic.version = 11 : i64} {
  func.func @_conv_fwd_kernel(%arg0: i32, %arg1: i32, %arg2: memref<1x32x256xbf16, #tpu.memory_space<vmem>>, %arg3: memref<1x1x1x256xbf16, #tpu.memory_space<vmem>>, %arg4: memref<512x128xbf16, #tpu.memory_space<vmem>>, %arg5: memref<1x32x128xbf16, #tpu.memory_space<vmem>>, %arg6: memref<33x256xbf16, #tpu.memory_space<vmem>>) attributes {dimension_semantics = [#tpu.dimension_semantics<parallel>, #tpu.dimension_semantics<parallel>], iteration_bounds = array<i64: 2, 1>, scalar_prefetch = 0 : i64, scratch_operands = 1 : i64, tpu.core_type = #tpu.core_type<tc>, window_params = [{transform_indices = @transform_0, window_bounds = array<i64: 1, 32, 256>}, {transform_indices = @transform_1, window_bounds = array<i64: 1, 1, 1, 256>}, {pipeline_mode = #tpu.pipeline_mode<synchronous>, transform_indices = @transform_2, window_bounds = array<i64: 512, 128>}, {transform_indices = @transform_3, window_bounds = array<i64: 1, 32, 128>}]} {
    %c0 = arith.constant 0 : index
    %c0_0 = arith.constant 0 : index
    %c0_1 = arith.constant 0 : index
    %0 = vector.load %arg2[%c0, %c0_0, %c0_1] : memref<1x32x256xbf16, #tpu.memory_space<vmem>>, vector<1x32x256xbf16>
    %1 = vector.shape_cast %0 : vector<1x32x256xbf16> to vector<32x256xbf16>
    %c0_2 = arith.constant 0 : index
    %c0_3 = arith.constant 0 : index
    %2 = vector.load %arg6[%c0_2, %c0_3] : memref<33x256xbf16, #tpu.memory_space<vmem>>, vector<32x256xbf16>
    tpu.vector_store %arg6[%c0_2, %c0_3], %1 {strides = array<i32>} : memref<33x256xbf16, #tpu.memory_space<vmem>>, vector<32x256xbf16>,
    %c0_4 = arith.constant 0 : index
    %c0_5 = arith.constant 0 : index
    %c0_6 = arith.constant 0 : index
    %c0_7 = arith.constant 0 : index
    %3 = vector.load %arg3[%c0_4, %c0_5, %c0_6, %c0_7] : memref<1x1x1x256xbf16, #tpu.memory_space<vmem>>, vector<1x1x1x256xbf16>
    %4 = vector.shape_cast %3 : vector<1x1x1x256xbf16> to vector<1x256xbf16>
    %c32 = arith.constant 32 : index
    %c0_8 = arith.constant 0 : index
    %5 = vector.load %arg6[%c32, %c0_8] : memref<33x256xbf16, #tpu.memory_space<vmem>>, vector<1x256xbf16>
    tpu.vector_store %arg6[%c32, %c0_8], %4 {strides = array<i32>} : memref<33x256xbf16, #tpu.memory_space<vmem>>, vector<1x256xbf16>,
    %c0_9 = arith.constant 0 : index
    %c0_10 = arith.constant 0 : index
    %6 = vector.load %arg6[%c0_9, %c0_10] : memref<33x256xbf16, #tpu.memory_space<vmem>>, vector<32x256xbf16>
    %c1 = arith.constant 1 : index
    %c0_11 = arith.constant 0 : index
    %7 = vector.load %arg6[%c1, %c0_11] : memref<33x256xbf16, #tpu.memory_space<vmem>>, vector<32x256xbf16>
    %8 = tpu.concatenate %6, %7 in 1 : vector<32x256xbf16>, vector<32x256xbf16> -> vector<32x512xbf16>
    %c0_12 = arith.constant 0 : index
    %c0_13 = arith.constant 0 : index
    %9 = vector.load %arg4[%c0_12, %c0_13] : memref<512x128xbf16, #tpu.memory_space<vmem>>, vector<512x128xbf16>
    %cst = arith.constant dense<0.000000e+00> : vector<32x128xf32>
    %10 = tpu.matmul %8, %9, %cst {dimension_numbers = #tpu.dot_dimension_numbers<[1], [0], [0], [1], [0, 0, 1, 1], [], []>} : vector<32x512xbf16>, vector<512x128xbf16>, vector<32x128xf32> -> vector<32x128xf32>
    %cst_14 = arith.constant 0.707106769 : f32
    %11 = vector.broadcast %cst_14 : f32 to vector<32x128xf32>
    %12 = arith.mulf %10, %11 : vector<32x128xf32>
    %13 = math.absf %12 : vector<32x128xf32>
    %cst_15 = arith.constant 0.327591091 : f32
    %14 = vector.broadcast %cst_15 : f32 to vector<32x128xf32>
    %15 = arith.mulf %14, %13 : vector<32x128xf32>
    %cst_16 = arith.constant 1.000000e+00 : f32
    %16 = vector.broadcast %cst_16 : f32 to vector<32x128xf32>
    %17 = arith.addf %16, %15 : vector<32x128xf32>
    %18 = tpu.reciprocal %17 {approx = true} : vector<32x128xf32> -> vector<32x128xf32>
    %cst_17 = arith.constant 1.06140542 : f32
    %19 = vector.broadcast %cst_17 : f32 to vector<32x128xf32>
    %20 = arith.mulf %19, %18 : vector<32x128xf32>
    %cst_18 = arith.constant 1.45315206 : f32
    %21 = vector.broadcast %cst_18 : f32 to vector<32x128xf32>
    %22 = arith.subf %20, %21 : vector<32x128xf32>
    %23 = arith.mulf %22, %18 : vector<32x128xf32>
    %cst_19 = arith.constant 1.42141378 : f32
    %24 = vector.broadcast %cst_19 : f32 to vector<32x128xf32>
    %25 = arith.addf %23, %24 : vector<32x128xf32>
    %26 = arith.mulf %25, %18 : vector<32x128xf32>
    %cst_20 = arith.constant 0.284496725 : f32
    %27 = vector.broadcast %cst_20 : f32 to vector<32x128xf32>
    %28 = arith.subf %26, %27 : vector<32x128xf32>
    %29 = arith.mulf %28, %18 : vector<32x128xf32>
    %cst_21 = arith.constant 0.254829586 : f32
    %30 = vector.broadcast %cst_21 : f32 to vector<32x128xf32>
    %31 = arith.addf %29, %30 : vector<32x128xf32>
    %32 = arith.mulf %31, %18 : vector<32x128xf32>
    %cst_22 = arith.constant 0.000000e+00 : f32
    %33 = vector.broadcast %cst_22 : f32 to vector<32x128xf32>
    %34 = arith.subf %33, %13 : vector<32x128xf32>
    %35 = arith.mulf %34, %13 : vector<32x128xf32>
    %36 = math.exp %35 : vector<32x128xf32>
    %37 = arith.mulf %32, %36 : vector<32x128xf32>
    %cst_23 = arith.constant 1.000000e+00 : f32
    %38 = vector.broadcast %cst_23 : f32 to vector<32x128xf32>
    %39 = arith.subf %38, %37 : vector<32x128xf32>
    %cst_24 = arith.constant 0.000000e+00 : f32
    %40 = vector.broadcast %cst_24 : f32 to vector<32x128xf32>
    %41 = arith.cmpf oge, %12, %40 : vector<32x128xf32>
    %cst_25 = arith.constant 0.000000e+00 : f32
    %42 = vector.broadcast %cst_25 : f32 to vector<32x128xf32>
    %43 = arith.subf %42, %39 : vector<32x128xf32>
    %44 = arith.select %41, %39, %43 : vector<32x128xi1>, vector<32x128xf32>
    %cst_26 = arith.constant 5.000000e-01 : f32
    %45 = vector.broadcast %cst_26 : f32 to vector<32x128xf32>
    %46 = arith.mulf %45, %10 : vector<32x128xf32>
    %cst_27 = arith.constant 1.000000e+00 : f32
    %47 = vector.broadcast %cst_27 : f32 to vector<32x128xf32>
    %48 = arith.addf %47, %44 : vector<32x128xf32>
    %49 = arith.mulf %46, %48 : vector<32x128xf32>
    %50 = vector.shape_cast %49 : vector<32x128xf32> to vector<1x32x128xf32>
    %51 = arith.truncf %50 : vector<1x32x128xf32> to vector<1x32x128xbf16>
    %c0_28 = arith.constant 0 : index
    %c0_29 = arith.constant 0 : index
    %c0_30 = arith.constant 0 : index
    %52 = vector.load %arg5[%c0_28, %c0_29, %c0_30] : memref<1x32x128xbf16, #tpu.memory_space<vmem>>, vector<1x32x128xbf16>
    tpu.vector_store %arg5[%c0_28, %c0_29, %c0_30], %51 {strides = array<i32>} : memref<1x32x128xbf16, #tpu.memory_space<vmem>>, vector<1x32x128xbf16>,
    return
  }
  func.func @transform_0(%arg0: i32, %arg1: i32) -> (i32, i32, i32) {
    %c0_i32 = arith.constant 0 : i32
    %c0_i32_0 = arith.constant 0 : i32
    return %arg0, %arg1, %c0_i32 : i32, i32, i32
  }
  func.func @transform_1(%arg0: i32, %arg1: i32) -> (i32, i32, i32, i32) {
    %c0_i32 = arith.constant 0 : i32
    %c0_i32_0 = arith.constant 0 : i32
    %c0_i32_1 = arith.constant 0 : i32
    return %arg0, %arg1, %c0_i32, %c0_i32_0 : i32, i32, i32, i32
  }
  func.func @transform_2(%arg0: i32, %arg1: i32) -> (i32, i32) {
    %c0_i32 = arith.constant 0 : i32
    %c0_i32_0 = arith.constant 0 : i32
    %c0_i32_1 = arith.constant 0 : i32
    return %c0_i32, %c0_i32_0 : i32, i32
  }
  func.func @transform_3(%arg0: i32, %arg1: i32) -> (i32, i32, i32) {
    %c0_i32 = arith.constant 0 : i32
    %c0_i32_0 = arith.constant 0 : i32
    return %arg0, %arg1, %c0_i32 : i32, i32, i32
  }
}

module attributes {stable_mosaic.version = 11 : i64} {
  func.func @_conv_stats_kernel(%arg0: i32, %arg1: i32, %arg2: memref<1x80x5xbf16, #tpu.memory_space<vmem>>, %arg3: memref<1x1x1x5xbf16, #tpu.memory_space<vmem>>, %arg4: memref<2x5x128xbf16, #tpu.memory_space<vmem>>, %arg5: memref<1x8x128xf32, #tpu.memory_space<vmem>>, %arg6: memref<1x8x128xf32, #tpu.memory_space<vmem>>, %arg7: memref<81x5xbf16, #tpu.memory_space<vmem>>) attributes {dimension_semantics = [#tpu.dimension_semantics<parallel>, #tpu.dimension_semantics<parallel>], iteration_bounds = array<i64: 2, 1>, scalar_prefetch = 0 : i64, scratch_operands = 1 : i64, tpu.core_type = #tpu.core_type<tc>, window_params = [{transform_indices = @transform_0, window_bounds = array<i64: 1, 80, 5>}, {transform_indices = @transform_1, window_bounds = array<i64: 1, 1, 1, 5>}, {pipeline_mode = #tpu.pipeline_mode<synchronous>, transform_indices = @transform_2, window_bounds = array<i64: 2, 5, 128>}, {transform_indices = @transform_3, window_bounds = array<i64: 1, 8, 128>}, {transform_indices = @transform_4, window_bounds = array<i64: 1, 8, 128>}]} {
    %c0 = arith.constant 0 : index
    %c0_0 = arith.constant 0 : index
    %c0_1 = arith.constant 0 : index
    %0 = vector.load %arg2[%c0, %c0_0, %c0_1] : memref<1x80x5xbf16, #tpu.memory_space<vmem>>, vector<1x80x5xbf16>
    %1 = vector.shape_cast %0 : vector<1x80x5xbf16> to vector<80x5xbf16>
    %c0_2 = arith.constant 0 : index
    %c0_3 = arith.constant 0 : index
    %2 = vector.load %arg7[%c0_2, %c0_3] : memref<81x5xbf16, #tpu.memory_space<vmem>>, vector<80x5xbf16>
    tpu.vector_store %arg7[%c0_2, %c0_3], %1 {strides = array<i32>} : memref<81x5xbf16, #tpu.memory_space<vmem>>, vector<80x5xbf16>,
    %c0_4 = arith.constant 0 : index
    %c0_5 = arith.constant 0 : index
    %c0_6 = arith.constant 0 : index
    %c0_7 = arith.constant 0 : index
    %3 = vector.load %arg3[%c0_4, %c0_5, %c0_6, %c0_7] : memref<1x1x1x5xbf16, #tpu.memory_space<vmem>>, vector<1x1x1x5xbf16>
    %4 = vector.shape_cast %3 : vector<1x1x1x5xbf16> to vector<1x5xbf16>
    %c80 = arith.constant 80 : index
    %c0_8 = arith.constant 0 : index
    %5 = vector.load %arg7[%c80, %c0_8] : memref<81x5xbf16, #tpu.memory_space<vmem>>, vector<1x5xbf16>
    tpu.vector_store %arg7[%c80, %c0_8], %4 {strides = array<i32>} : memref<81x5xbf16, #tpu.memory_space<vmem>>, vector<1x5xbf16>,
    %cst = arith.constant 0.000000e+00 : f32
    %6 = vector.broadcast %cst : f32 to vector<80x128xf32>
    %c0_9 = arith.constant 0 : index
    %c0_10 = arith.constant 0 : index
    %7 = vector.load %arg7[%c0_9, %c0_10] : memref<81x5xbf16, #tpu.memory_space<vmem>>, vector<80x5xbf16>
    %c0_11 = arith.constant 0 : index
    %c0_12 = arith.constant 0 : index
    %c0_13 = arith.constant 0 : index
    %8 = vector.load %arg4[%c0_11, %c0_12, %c0_13] : memref<2x5x128xbf16, #tpu.memory_space<vmem>>, vector<1x5x128xbf16>
    %9 = vector.shape_cast %8 : vector<1x5x128xbf16> to vector<5x128xbf16>
    %cst_14 = arith.constant dense<0.000000e+00> : vector<80x128xf32>
    %10 = tpu.matmul %7, %9, %cst_14 {dimension_numbers = #tpu.dot_dimension_numbers<[1], [0], [0], [1], [0, 0, 1, 1], [], []>} : vector<80x5xbf16>, vector<5x128xbf16>, vector<80x128xf32> -> vector<80x128xf32>
    %11 = arith.addf %6, %10 : vector<80x128xf32>
    %c1 = arith.constant 1 : index
    %c0_15 = arith.constant 0 : index
    %12 = vector.load %arg7[%c1, %c0_15] : memref<81x5xbf16, #tpu.memory_space<vmem>>, vector<80x5xbf16>
    %c1_16 = arith.constant 1 : index
    %c0_17 = arith.constant 0 : index
    %c0_18 = arith.constant 0 : index
    %13 = vector.load %arg4[%c1_16, %c0_17, %c0_18] : memref<2x5x128xbf16, #tpu.memory_space<vmem>>, vector<1x5x128xbf16>
    %14 = vector.shape_cast %13 : vector<1x5x128xbf16> to vector<5x128xbf16>
    %cst_19 = arith.constant dense<0.000000e+00> : vector<80x128xf32>
    %15 = tpu.matmul %12, %14, %cst_19 {dimension_numbers = #tpu.dot_dimension_numbers<[1], [0], [0], [1], [0, 0, 1, 1], [], []>} : vector<80x5xbf16>, vector<5x128xbf16>, vector<80x128xf32> -> vector<80x128xf32>
    %16 = arith.addf %11, %15 : vector<80x128xf32>
    %c80_i32 = arith.constant 80 : i32
    %17 = arith.muli %arg1, %c80_i32 : i32
    %18 = tpu.iota {dimensions = array<i32: 0>} : vector<80x1xi32>
    %19 = vector.broadcast %17 : i32 to vector<80x1xi32>
    %20 = arith.addi %19, %18 : vector<80x1xi32>
    %c24_i32 = arith.constant 24 : i32
    %21 = vector.broadcast %c24_i32 : i32 to vector<80x1xi32>
    %22 = arith.cmpi slt, %20, %21 : vector<80x1xi32>
    %cst_20 = arith.constant 0.000000e+00 : f32
    %23 = vector.shape_cast %22 : vector<80x1xi1> to vector<80x1xi1>
    %24 = vector.broadcast %23 : vector<80x1xi1> to vector<80x128xi1>
    %25 = vector.broadcast %cst_20 : f32 to vector<80x128xf32>
    %26 = arith.select %24, %16, %25 : vector<80x128xi1>, vector<80x128xf32>
    %cst_21 = arith.constant dense<0.000000e+00> : vector<128xf32>
    %27 = vector.multi_reduction <add>, %26, %cst_21 [0] : vector<80x128xf32> to vector<128xf32>
    %28 = vector.shape_cast %27 : vector<128xf32> to vector<1x128xf32>
    %29 = arith.mulf %26, %26 : vector<80x128xf32>
    %cst_22 = arith.constant dense<0.000000e+00> : vector<128xf32>
    %30 = vector.multi_reduction <add>, %29, %cst_22 [0] : vector<80x128xf32> to vector<128xf32>
    %31 = vector.shape_cast %30 : vector<128xf32> to vector<1x128xf32>
    %32 = tpu.iota {dimensions = array<i32: 0>} : vector<8x128xi32>
    %c0_i32 = arith.constant 0 : i32
    %33 = vector.broadcast %c0_i32 : i32 to vector<8x128xi32>
    %34 = arith.cmpi eq, %32, %33 : vector<8x128xi32>
    %cst_23 = arith.constant 0.000000e+00 : f32
    %35 = vector.shape_cast %28 : vector<1x128xf32> to vector<1x128xf32>
    %36 = vector.broadcast %35 : vector<1x128xf32> to vector<8x128xf32>
    %37 = vector.broadcast %cst_23 : f32 to vector<8x128xf32>
    %38 = arith.select %34, %36, %37 : vector<8x128xi1>, vector<8x128xf32>
    %39 = vector.shape_cast %38 : vector<8x128xf32> to vector<1x8x128xf32>
    %c0_24 = arith.constant 0 : index
    %c0_25 = arith.constant 0 : index
    %c0_26 = arith.constant 0 : index
    %40 = vector.load %arg5[%c0_24, %c0_25, %c0_26] : memref<1x8x128xf32, #tpu.memory_space<vmem>>, vector<1x8x128xf32>
    tpu.vector_store %arg5[%c0_24, %c0_25, %c0_26], %39 {strides = array<i32>} : memref<1x8x128xf32, #tpu.memory_space<vmem>>, vector<1x8x128xf32>,
    %c0_i32_27 = arith.constant 0 : i32
    %41 = vector.broadcast %c0_i32_27 : i32 to vector<8x128xi32>
    %42 = arith.cmpi eq, %32, %41 : vector<8x128xi32>
    %cst_28 = arith.constant 0.000000e+00 : f32
    %43 = vector.shape_cast %31 : vector<1x128xf32> to vector<1x128xf32>
    %44 = vector.broadcast %43 : vector<1x128xf32> to vector<8x128xf32>
    %45 = vector.broadcast %cst_28 : f32 to vector<8x128xf32>
    %46 = arith.select %42, %44, %45 : vector<8x128xi1>, vector<8x128xf32>
    %47 = vector.shape_cast %46 : vector<8x128xf32> to vector<1x8x128xf32>
    %c0_29 = arith.constant 0 : index
    %c0_30 = arith.constant 0 : index
    %c0_31 = arith.constant 0 : index
    %48 = vector.load %arg6[%c0_29, %c0_30, %c0_31] : memref<1x8x128xf32, #tpu.memory_space<vmem>>, vector<1x8x128xf32>
    tpu.vector_store %arg6[%c0_29, %c0_30, %c0_31], %47 {strides = array<i32>} : memref<1x8x128xf32, #tpu.memory_space<vmem>>, vector<1x8x128xf32>,
    return
  }
  func.func @transform_0(%arg0: i32, %arg1: i32) -> (i32, i32, i32) {
    %c0_i32 = arith.constant 0 : i32
    %c0_i32_0 = arith.constant 0 : i32
    return %arg0, %arg1, %c0_i32 : i32, i32, i32
  }
  func.func @transform_1(%arg0: i32, %arg1: i32) -> (i32, i32, i32, i32) {
    %c0_i32 = arith.constant 0 : i32
    %c0_i32_0 = arith.constant 0 : i32
    %c0_i32_1 = arith.constant 0 : i32
    return %arg0, %arg1, %c0_i32, %c0_i32_0 : i32, i32, i32, i32
  }
  func.func @transform_2(%arg0: i32, %arg1: i32) -> (i32, i32, i32) {
    %c0_i32 = arith.constant 0 : i32
    %c0_i32_0 = arith.constant 0 : i32
    %c0_i32_1 = arith.constant 0 : i32
    %c0_i32_2 = arith.constant 0 : i32
    return %c0_i32, %c0_i32_0, %c0_i32_1 : i32, i32, i32
  }
  func.func @transform_3(%arg0: i32, %arg1: i32) -> (i32, i32, i32) {
    %c0_i32 = arith.constant 0 : i32
    %c0_i32_0 = arith.constant 0 : i32
    return %arg0, %arg1, %c0_i32 : i32, i32, i32
  }
  func.func @transform_4(%arg0: i32, %arg1: i32) -> (i32, i32, i32) {
    %c0_i32 = arith.constant 0 : i32
    %c0_i32_0 = arith.constant 0 : i32
    return %arg0, %arg1, %c0_i32 : i32, i32, i32
  }
}

module attributes {stable_mosaic.version = 11 : i64} {
  func.func @_conv_fwd_kernel(%arg0: i32, %arg1: i32, %arg2: memref<1x80x5xbf16, #tpu.memory_space<vmem>>, %arg3: memref<1x1x1x5xbf16, #tpu.memory_space<vmem>>, %arg4: memref<2x5x128xbf16, #tpu.memory_space<vmem>>, %arg5: memref<1x1x128xf32, #tpu.memory_space<vmem>>, %arg6: memref<1x1x128xf32, #tpu.memory_space<vmem>>, %arg7: memref<1x80x128xbf16, #tpu.memory_space<vmem>>, %arg8: memref<81x5xbf16, #tpu.memory_space<vmem>>) attributes {dimension_semantics = [#tpu.dimension_semantics<parallel>, #tpu.dimension_semantics<parallel>], iteration_bounds = array<i64: 2, 1>, scalar_prefetch = 0 : i64, scratch_operands = 1 : i64, tpu.core_type = #tpu.core_type<tc>, window_params = [{transform_indices = @transform_0, window_bounds = array<i64: 1, 80, 5>}, {transform_indices = @transform_1, window_bounds = array<i64: 1, 1, 1, 5>}, {pipeline_mode = #tpu.pipeline_mode<synchronous>, transform_indices = @transform_2, window_bounds = array<i64: 2, 5, 128>}, {transform_indices = @transform_3, window_bounds = array<i64: 1, 1, 128>}, {transform_indices = @transform_4, window_bounds = array<i64: 1, 1, 128>}, {transform_indices = @transform_5, window_bounds = array<i64: 1, 80, 128>}]} {
    %c0 = arith.constant 0 : index
    %c0_0 = arith.constant 0 : index
    %c0_1 = arith.constant 0 : index
    %0 = vector.load %arg2[%c0, %c0_0, %c0_1] : memref<1x80x5xbf16, #tpu.memory_space<vmem>>, vector<1x80x5xbf16>
    %1 = vector.shape_cast %0 : vector<1x80x5xbf16> to vector<80x5xbf16>
    %c0_2 = arith.constant 0 : index
    %c0_3 = arith.constant 0 : index
    %2 = vector.load %arg8[%c0_2, %c0_3] : memref<81x5xbf16, #tpu.memory_space<vmem>>, vector<80x5xbf16>
    tpu.vector_store %arg8[%c0_2, %c0_3], %1 {strides = array<i32>} : memref<81x5xbf16, #tpu.memory_space<vmem>>, vector<80x5xbf16>,
    %c0_4 = arith.constant 0 : index
    %c0_5 = arith.constant 0 : index
    %c0_6 = arith.constant 0 : index
    %c0_7 = arith.constant 0 : index
    %3 = vector.load %arg3[%c0_4, %c0_5, %c0_6, %c0_7] : memref<1x1x1x5xbf16, #tpu.memory_space<vmem>>, vector<1x1x1x5xbf16>
    %4 = vector.shape_cast %3 : vector<1x1x1x5xbf16> to vector<1x5xbf16>
    %c80 = arith.constant 80 : index
    %c0_8 = arith.constant 0 : index
    %5 = vector.load %arg8[%c80, %c0_8] : memref<81x5xbf16, #tpu.memory_space<vmem>>, vector<1x5xbf16>
    tpu.vector_store %arg8[%c80, %c0_8], %4 {strides = array<i32>} : memref<81x5xbf16, #tpu.memory_space<vmem>>, vector<1x5xbf16>,
    %cst = arith.constant 0.000000e+00 : f32
    %6 = vector.broadcast %cst : f32 to vector<80x128xf32>
    %c0_9 = arith.constant 0 : index
    %c0_10 = arith.constant 0 : index
    %7 = vector.load %arg8[%c0_9, %c0_10] : memref<81x5xbf16, #tpu.memory_space<vmem>>, vector<80x5xbf16>
    %c0_11 = arith.constant 0 : index
    %c0_12 = arith.constant 0 : index
    %c0_13 = arith.constant 0 : index
    %8 = vector.load %arg4[%c0_11, %c0_12, %c0_13] : memref<2x5x128xbf16, #tpu.memory_space<vmem>>, vector<1x5x128xbf16>
    %9 = vector.shape_cast %8 : vector<1x5x128xbf16> to vector<5x128xbf16>
    %cst_14 = arith.constant dense<0.000000e+00> : vector<80x128xf32>
    %10 = tpu.matmul %7, %9, %cst_14 {dimension_numbers = #tpu.dot_dimension_numbers<[1], [0], [0], [1], [0, 0, 1, 1], [], []>} : vector<80x5xbf16>, vector<5x128xbf16>, vector<80x128xf32> -> vector<80x128xf32>
    %11 = arith.addf %6, %10 : vector<80x128xf32>
    %c1 = arith.constant 1 : index
    %c0_15 = arith.constant 0 : index
    %12 = vector.load %arg8[%c1, %c0_15] : memref<81x5xbf16, #tpu.memory_space<vmem>>, vector<80x5xbf16>
    %c1_16 = arith.constant 1 : index
    %c0_17 = arith.constant 0 : index
    %c0_18 = arith.constant 0 : index
    %13 = vector.load %arg4[%c1_16, %c0_17, %c0_18] : memref<2x5x128xbf16, #tpu.memory_space<vmem>>, vector<1x5x128xbf16>
    %14 = vector.shape_cast %13 : vector<1x5x128xbf16> to vector<5x128xbf16>
    %cst_19 = arith.constant dense<0.000000e+00> : vector<80x128xf32>
    %15 = tpu.matmul %12, %14, %cst_19 {dimension_numbers = #tpu.dot_dimension_numbers<[1], [0], [0], [1], [0, 0, 1, 1], [], []>} : vector<80x5xbf16>, vector<5x128xbf16>, vector<80x128xf32> -> vector<80x128xf32>
    %16 = arith.addf %11, %15 : vector<80x128xf32>
    %c0_20 = arith.constant 0 : index
    %c0_21 = arith.constant 0 : index
    %c0_22 = arith.constant 0 : index
    %17 = vector.load %arg5[%c0_20, %c0_21, %c0_22] : memref<1x1x128xf32, #tpu.memory_space<vmem>>, vector<1x1x128xf32>
    %18 = vector.shape_cast %17 : vector<1x1x128xf32> to vector<1x128xf32>
    %19 = vector.broadcast %18 : vector<1x128xf32> to vector<80x128xf32>
    %20 = arith.mulf %16, %19 : vector<80x128xf32>
    %c0_23 = arith.constant 0 : index
    %c0_24 = arith.constant 0 : index
    %c0_25 = arith.constant 0 : index
    %21 = vector.load %arg6[%c0_23, %c0_24, %c0_25] : memref<1x1x128xf32, #tpu.memory_space<vmem>>, vector<1x1x128xf32>
    %22 = vector.shape_cast %21 : vector<1x1x128xf32> to vector<1x128xf32>
    %23 = vector.broadcast %22 : vector<1x128xf32> to vector<80x128xf32>
    %24 = arith.addf %20, %23 : vector<80x128xf32>
    %cst_26 = arith.constant 0.707106769 : f32
    %25 = vector.broadcast %cst_26 : f32 to vector<80x128xf32>
    %26 = arith.mulf %24, %25 : vector<80x128xf32>
    %27 = math.absf %26 : vector<80x128xf32>
    %cst_27 = arith.constant 0.327591091 : f32
    %28 = vector.broadcast %cst_27 : f32 to vector<80x128xf32>
    %29 = arith.mulf %28, %27 : vector<80x128xf32>
    %cst_28 = arith.constant 1.000000e+00 : f32
    %30 = vector.broadcast %cst_28 : f32 to vector<80x128xf32>
    %31 = arith.addf %30, %29 : vector<80x128xf32>
    %32 = tpu.reciprocal %31 {approx = true} : vector<80x128xf32> -> vector<80x128xf32>
    %cst_29 = arith.constant 1.06140542 : f32
    %33 = vector.broadcast %cst_29 : f32 to vector<80x128xf32>
    %34 = arith.mulf %33, %32 : vector<80x128xf32>
    %cst_30 = arith.constant 1.45315206 : f32
    %35 = vector.broadcast %cst_30 : f32 to vector<80x128xf32>
    %36 = arith.subf %34, %35 : vector<80x128xf32>
    %37 = arith.mulf %36, %32 : vector<80x128xf32>
    %cst_31 = arith.constant 1.42141378 : f32
    %38 = vector.broadcast %cst_31 : f32 to vector<80x128xf32>
    %39 = arith.addf %37, %38 : vector<80x128xf32>
    %40 = arith.mulf %39, %32 : vector<80x128xf32>
    %cst_32 = arith.constant 0.284496725 : f32
    %41 = vector.broadcast %cst_32 : f32 to vector<80x128xf32>
    %42 = arith.subf %40, %41 : vector<80x128xf32>
    %43 = arith.mulf %42, %32 : vector<80x128xf32>
    %cst_33 = arith.constant 0.254829586 : f32
    %44 = vector.broadcast %cst_33 : f32 to vector<80x128xf32>
    %45 = arith.addf %43, %44 : vector<80x128xf32>
    %46 = arith.mulf %45, %32 : vector<80x128xf32>
    %cst_34 = arith.constant 0.000000e+00 : f32
    %47 = vector.broadcast %cst_34 : f32 to vector<80x128xf32>
    %48 = arith.subf %47, %27 : vector<80x128xf32>
    %49 = arith.mulf %48, %27 : vector<80x128xf32>
    %50 = math.exp %49 : vector<80x128xf32>
    %51 = arith.mulf %46, %50 : vector<80x128xf32>
    %cst_35 = arith.constant 1.000000e+00 : f32
    %52 = vector.broadcast %cst_35 : f32 to vector<80x128xf32>
    %53 = arith.subf %52, %51 : vector<80x128xf32>
    %cst_36 = arith.constant 0.000000e+00 : f32
    %54 = vector.broadcast %cst_36 : f32 to vector<80x128xf32>
    %55 = arith.cmpf oge, %26, %54 : vector<80x128xf32>
    %cst_37 = arith.constant 0.000000e+00 : f32
    %56 = vector.broadcast %cst_37 : f32 to vector<80x128xf32>
    %57 = arith.subf %56, %53 : vector<80x128xf32>
    %58 = arith.select %55, %53, %57 : vector<80x128xi1>, vector<80x128xf32>
    %cst_38 = arith.constant 5.000000e-01 : f32
    %59 = vector.broadcast %cst_38 : f32 to vector<80x128xf32>
    %60 = arith.mulf %59, %24 : vector<80x128xf32>
    %cst_39 = arith.constant 1.000000e+00 : f32
    %61 = vector.broadcast %cst_39 : f32 to vector<80x128xf32>
    %62 = arith.addf %61, %58 : vector<80x128xf32>
    %63 = arith.mulf %60, %62 : vector<80x128xf32>
    %64 = vector.shape_cast %63 : vector<80x128xf32> to vector<1x80x128xf32>
    %65 = arith.truncf %64 : vector<1x80x128xf32> to vector<1x80x128xbf16>
    %c0_40 = arith.constant 0 : index
    %c0_41 = arith.constant 0 : index
    %c0_42 = arith.constant 0 : index
    %66 = vector.load %arg7[%c0_40, %c0_41, %c0_42] : memref<1x80x128xbf16, #tpu.memory_space<vmem>>, vector<1x80x128xbf16>
    tpu.vector_store %arg7[%c0_40, %c0_41, %c0_42], %65 {strides = array<i32>} : memref<1x80x128xbf16, #tpu.memory_space<vmem>>, vector<1x80x128xbf16>,
    return
  }
  func.func @transform_0(%arg0: i32, %arg1: i32) -> (i32, i32, i32) {
    %c0_i32 = arith.constant 0 : i32
    %c0_i32_0 = arith.constant 0 : i32
    return %arg0, %arg1, %c0_i32 : i32, i32, i32
  }
  func.func @transform_1(%arg0: i32, %arg1: i32) -> (i32, i32, i32, i32) {
    %c0_i32 = arith.constant 0 : i32
    %c0_i32_0 = arith.constant 0 : i32
    %c0_i32_1 = arith.constant 0 : i32
    return %arg0, %arg1, %c0_i32, %c0_i32_0 : i32, i32, i32, i32
  }
  func.func @transform_2(%arg0: i32, %arg1: i32) -> (i32, i32, i32) {
    %c0_i32 = arith.constant 0 : i32
    %c0_i32_0 = arith.constant 0 : i32
    %c0_i32_1 = arith.constant 0 : i32
    %c0_i32_2 = arith.constant 0 : i32
    return %c0_i32, %c0_i32_0, %c0_i32_1 : i32, i32, i32
  }
  func.func @transform_3(%arg0: i32, %arg1: i32) -> (i32, i32, i32) {
    %c0_i32 = arith.constant 0 : i32
    %c0_i32_0 = arith.constant 0 : i32
    %c0_i32_1 = arith.constant 0 : i32
    return %arg0, %c0_i32, %c0_i32_0 : i32, i32, i32
  }
  func.func @transform_4(%arg0: i32, %arg1: i32) -> (i32, i32, i32) {
    %c0_i32 = arith.constant 0 : i32
    %c0_i32_0 = arith.constant 0 : i32
    %c0_i32_1 = arith.constant 0 : i32
    return %arg0, %c0_i32, %c0_i32_0 : i32, i32, i32
  }
  func.func @transform_5(%arg0: i32, %arg1: i32) -> (i32, i32, i32) {
    %c0_i32 = arith.constant 0 : i32
    %c0_i32_0 = arith.constant 0 : i32
    return %arg0, %arg1, %c0_i32 : i32, i32, i32
  }
}

module attributes {stable_mosaic.version = 11 : i64} {
  func.func @_conv_fwd_kernel(%arg0: i32, %arg1: i32, %arg2: memref<1x16x256xbf16, #tpu.memory_space<vmem>>, %arg3: memref<256x128xbf16, #tpu.memory_space<vmem>>, %arg4: memref<1x16x128xf32, #tpu.memory_space<vmem>>) attributes {dimension_semantics = [#tpu.dimension_semantics<parallel>, #tpu.dimension_semantics<parallel>], iteration_bounds = array<i64: 2, 1>, scalar_prefetch = 0 : i64, scratch_operands = 0 : i64, tpu.core_type = #tpu.core_type<tc>, window_params = [{transform_indices = @transform_0, window_bounds = array<i64: 1, 16, 256>}, {pipeline_mode = #tpu.pipeline_mode<synchronous>, transform_indices = @transform_1, window_bounds = array<i64: 256, 128>}, {transform_indices = @transform_2, window_bounds = array<i64: 1, 16, 128>}]} {
    %c0 = arith.constant 0 : index
    %c0_0 = arith.constant 0 : index
    %c0_1 = arith.constant 0 : index
    %0 = vector.load %arg2[%c0, %c0_0, %c0_1] : memref<1x16x256xbf16, #tpu.memory_space<vmem>>, vector<1x16x256xbf16>
    %1 = vector.shape_cast %0 : vector<1x16x256xbf16> to vector<16x256xbf16>
    %c0_2 = arith.constant 0 : index
    %c0_3 = arith.constant 0 : index
    %2 = vector.load %arg3[%c0_2, %c0_3] : memref<256x128xbf16, #tpu.memory_space<vmem>>, vector<256x128xbf16>
    %cst = arith.constant dense<0.000000e+00> : vector<16x128xf32>
    %3 = tpu.matmul %1, %2, %cst {dimension_numbers = #tpu.dot_dimension_numbers<[1], [0], [0], [1], [0, 0, 1, 1], [], []>} : vector<16x256xbf16>, vector<256x128xbf16>, vector<16x128xf32> -> vector<16x128xf32>
    %cst_4 = arith.constant 0.707106769 : f32
    %4 = vector.broadcast %cst_4 : f32 to vector<16x128xf32>
    %5 = arith.mulf %3, %4 : vector<16x128xf32>
    %6 = math.absf %5 : vector<16x128xf32>
    %cst_5 = arith.constant 0.327591091 : f32
    %7 = vector.broadcast %cst_5 : f32 to vector<16x128xf32>
    %8 = arith.mulf %7, %6 : vector<16x128xf32>
    %cst_6 = arith.constant 1.000000e+00 : f32
    %9 = vector.broadcast %cst_6 : f32 to vector<16x128xf32>
    %10 = arith.addf %9, %8 : vector<16x128xf32>
    %11 = tpu.reciprocal %10 {approx = true} : vector<16x128xf32> -> vector<16x128xf32>
    %cst_7 = arith.constant 1.06140542 : f32
    %12 = vector.broadcast %cst_7 : f32 to vector<16x128xf32>
    %13 = arith.mulf %12, %11 : vector<16x128xf32>
    %cst_8 = arith.constant 1.45315206 : f32
    %14 = vector.broadcast %cst_8 : f32 to vector<16x128xf32>
    %15 = arith.subf %13, %14 : vector<16x128xf32>
    %16 = arith.mulf %15, %11 : vector<16x128xf32>
    %cst_9 = arith.constant 1.42141378 : f32
    %17 = vector.broadcast %cst_9 : f32 to vector<16x128xf32>
    %18 = arith.addf %16, %17 : vector<16x128xf32>
    %19 = arith.mulf %18, %11 : vector<16x128xf32>
    %cst_10 = arith.constant 0.284496725 : f32
    %20 = vector.broadcast %cst_10 : f32 to vector<16x128xf32>
    %21 = arith.subf %19, %20 : vector<16x128xf32>
    %22 = arith.mulf %21, %11 : vector<16x128xf32>
    %cst_11 = arith.constant 0.254829586 : f32
    %23 = vector.broadcast %cst_11 : f32 to vector<16x128xf32>
    %24 = arith.addf %22, %23 : vector<16x128xf32>
    %25 = arith.mulf %24, %11 : vector<16x128xf32>
    %cst_12 = arith.constant 0.000000e+00 : f32
    %26 = vector.broadcast %cst_12 : f32 to vector<16x128xf32>
    %27 = arith.subf %26, %6 : vector<16x128xf32>
    %28 = arith.mulf %27, %6 : vector<16x128xf32>
    %29 = math.exp %28 : vector<16x128xf32>
    %30 = arith.mulf %25, %29 : vector<16x128xf32>
    %cst_13 = arith.constant 1.000000e+00 : f32
    %31 = vector.broadcast %cst_13 : f32 to vector<16x128xf32>
    %32 = arith.subf %31, %30 : vector<16x128xf32>
    %cst_14 = arith.constant 0.000000e+00 : f32
    %33 = vector.broadcast %cst_14 : f32 to vector<16x128xf32>
    %34 = arith.cmpf oge, %5, %33 : vector<16x128xf32>
    %cst_15 = arith.constant 0.000000e+00 : f32
    %35 = vector.broadcast %cst_15 : f32 to vector<16x128xf32>
    %36 = arith.subf %35, %32 : vector<16x128xf32>
    %37 = arith.select %34, %32, %36 : vector<16x128xi1>, vector<16x128xf32>
    %cst_16 = arith.constant 5.000000e-01 : f32
    %38 = vector.broadcast %cst_16 : f32 to vector<16x128xf32>
    %39 = arith.mulf %38, %3 : vector<16x128xf32>
    %cst_17 = arith.constant 1.000000e+00 : f32
    %40 = vector.broadcast %cst_17 : f32 to vector<16x128xf32>
    %41 = arith.addf %40, %37 : vector<16x128xf32>
    %42 = arith.mulf %39, %41 : vector<16x128xf32>
    %43 = vector.shape_cast %42 : vector<16x128xf32> to vector<1x16x128xf32>
    %c0_18 = arith.constant 0 : index
    %c0_19 = arith.constant 0 : index
    %c0_20 = arith.constant 0 : index
    %44 = vector.load %arg4[%c0_18, %c0_19, %c0_20] : memref<1x16x128xf32, #tpu.memory_space<vmem>>, vector<1x16x128xf32>
    tpu.vector_store %arg4[%c0_18, %c0_19, %c0_20], %43 {strides = array<i32>} : memref<1x16x128xf32, #tpu.memory_space<vmem>>, vector<1x16x128xf32>,
    return
  }
  func.func @transform_0(%arg0: i32, %arg1: i32) -> (i32, i32, i32) {
    %c0_i32 = arith.constant 0 : i32
    %c0_i32_0 = arith.constant 0 : i32
    return %arg0, %arg1, %c0_i32 : i32, i32, i32
  }
  func.func @transform_1(%arg0: i32, %arg1: i32) -> (i32, i32) {
    %c0_i32 = arith.constant 0 : i32
    %c0_i32_0 = arith.constant 0 : i32
    %c0_i32_1 = arith.constant 0 : i32
    return %c0_i32, %c0_i32_0 : i32, i32
  }
  func.func @transform_2(%arg0: i32, %arg1: i32) -> (i32, i32, i32) {
    %c0_i32 = arith.constant 0 : i32
    %c0_i32_0 = arith.constant 0 : i32
    return %arg0, %arg1, %c0_i32 : i32, i32, i32
  }
}

</mosaic_0001>

<llo_original>
// kernel: _lambda_.6
$region0: #{_lambda_.6}
  #allocation0 [shape = 'u32[]', space=smem, size = 0x4, offset = 0x4, fixed_abs, tag = 'smem constant byte address 0x4 - core index']
  #allocation1 [shape = 'u32[144,128]{1,0:T(1,128)}', space=vmem, size = 0x12000, scoped, tag = 'internal scratch']
  #allocation2 [shape = 'bf16[33,256]{1,0:T(8,128)(2,1)}', space=vmem, size = 0x5000, scoped, tag = 'scratch operand']
  %s0 = inlined_call_operand.vmem [shape: bf16[2,40,256], index: 0, kind: input, shape index: {}]
  %s1 = inlined_call_operand.vmem [shape: bf16[2,1,1,256], index: 1, kind: input, shape index: {}]
  %s2 = inlined_call_operand.vmem [shape: bf16[512,128], index: 2, kind: input, shape index: {}]
  %s3 = inlined_call_operand.vmem [shape: bf16[2,32,128], index: 3, kind: output, shape index: {}]
  %s4 = sld [smem:[#allocation0]]
  $region45: #{_lambda_.6} parent=0
    _
  %s6 = ssub.s32 1, %s4
  %s7 = scalar_select 0, %s6, %s4
  loop: start=0, step=1, limit=4
  $region2: #{_lambda_.6} parent=0 // loop_pre_header
    _
  $region3: #{_lambda_.6} parent=0 // loop_header
    %s9 = sphi 0, %s13
    %p10 = scmp.ge.s32.totalorder %s9, 4
    %s16 = sphi 0, %s28
    %s17 = sphi 0, %s24
    %s18 = sphi 0, %s16
    %s19 = sphi 0, %s17
    %s20 = sphi 0, %s18
    %s21 = sphi 0, %s19
    %s33 = sphi 0, %s35
    %s36 = sphi 0, %s33
    %s37 = sphi 0, %s36
    %s53 = sphi 0, %s37
    %s61 = sphi 0, %s63
    %s64 = sphi 0, %s61
    %s65 = sphi 0, %s64
    %s81 = sphi 0, %s65
    %s85 = sphi 0, %s85
    %s87 = sphi 0, %s85
    %s88 = sphi 0, %s87
    %s102 = sphi 0, %s88
    %s110 = sphi 0, %s112
    %s113 = sphi 0, %s110
    %s114 = sphi 0, %s113
    %s130 = sphi 0, %s114
  $region4: #{_lambda_.6} parent=0 // loop_header_branch
    %12 = sbr.rel (%p10) target = $region8
  $region5: #{_lambda_.6} parent=0 // loop_body
    %s14 = ssub.s32 %s9, 1
    %s15 = ssub.s32 %s9, 2
    %s22 = sadd.s32 1, %s17
    %p23 = scmp.ge.s32.totalorder %s22, 1
    %s24 = scalar_select %p23, 0, %s22
    %s25 = sadd.s32 1, %s16
    %s26 = scalar_select %p23, %s25, %s16
    %p27 = scmp.ge.s32.totalorder %s26, 2
    %s28 = scalar_select %p27, 0, %s26
    %s29 = ssub.s32 %s16, %s28
    %s30 = ssub.s32 %s17, %s24
    %s31 = sor.u32 %s29, %s30
    %p32 = scmp.eq.s32.totalorder %s31, 0
    %s34 = sadd.s32 %s33, 1
    %s35 = scalar_select %p32, %s33, %s34
    %p38 = pneg %p32
    %p39 = scmp.eq.s32.totalorder %s9, 1
    %p40 = por %p38, %p39
    %p41 = scmp.ne.s32.totalorder %s33, %s36
    %p42 = scmp.eq.s32.totalorder %s9, 0
    %p43 = por %p41, %p42
    %p44 = scmp.ne.s32.totalorder %s33, %s36
    %p45 = scmp.eq.s32.totalorder %s14, 1
    %p46 = por %p44, %p45
    %p47 = scmp.ne.s32.totalorder %s36, %s37
    %p48 = scmp.eq.s32.totalorder %s14, 0
    %p49 = por %p47, %p48
    %p50 = scmp.ne.s32.totalorder %s36, %s37
    %p51 = scmp.eq.s32.totalorder %s15, 1
    %p52 = por %p50, %p51
    %p54 = scmp.ne.s32.totalorder %s37, %s53
    %p55 = scmp.eq.s32.totalorder %s15, 0
    %p56 = por %p54, %p55
    %s57 = ssub.s32 %s16, %s28
    %s58 = ssub.s32 %s17, %s24
    %s59 = sor.u32 %s57, %s58
    %p60 = scmp.eq.s32.totalorder %s59, 0
    %s62 = sadd.s32 %s61, 1
    %s63 = scalar_select %p60, %s61, %s62
    %p66 = pneg %p60
    %p67 = scmp.eq.s32.totalorder %s9, 1
    %p68 = por %p66, %p67
    %p69 = scmp.ne.s32.totalorder %s61, %s64
    %p70 = scmp.eq.s32.totalorder %s9, 0
    %p71 = por %p69, %p70
    %p72 = scmp.ne.s32.totalorder %s61, %s64
    %p73 = scmp.eq.s32.totalorder %s14, 1
    %p74 = por %p72, %p73
    %p75 = scmp.ne.s32.totalorder %s64, %s65
    %p76 = scmp.eq.s32.totalorder %s14, 0
    %p77 = por %p75, %p76
    %p78 = scmp.ne.s32.totalorder %s64, %s65
    %p79 = scmp.eq.s32.totalorder %s15, 1
    %p80 = por %p78, %p79
    %p82 = scmp.ne.s32.totalorder %s65, %s81
    %p83 = scmp.eq.s32.totalorder %s15, 0
    %p84 = por %p82, %p83
    %s86 = sadd.s32 %s85, 1
    %p89 = scmp.eq.s32.totalorder %s9, 1
    %p90 = scmp.ne.s32.totalorder %s85, %s87
    %p91 = scmp.eq.s32.totalorder %s9, 0
    %p92 = por %p90, %p91
    %p93 = scmp.ne.s32.totalorder %s85, %s87
    %p94 = scmp.eq.s32.totalorder %s14, 1
    %p95 = por %p93, %p94
    %p96 = scmp.ne.s32.totalorder %s87, %s88
    %p97 = scmp.eq.s32.totalorder %s14, 0
    %p98 = por %p96, %p97
    %p99 = scmp.ne.s32.totalorder %s87, %s88
    %p100 = scmp.eq.s32.totalorder %s15, 1
    %p101 = por %p99, %p100
    %p103 = scmp.ne.s32.totalorder %s88, %s102
    %p104 = scmp.eq.s32.totalorder %s15, 0
    %p105 = por %p103, %p104
    %s106 = ssub.s32 %s16, %s28
    %s107 = ssub.s32 %s17, %s24
    %s108 = sor.u32 %s106, %s107
    %p109 = scmp.eq.s32.totalorder %s108, 0
    %s111 = sadd.s32 %s110, 1
    %s112 = scalar_select %p109, %s110, %s111
    %p115 = pneg %p109
    %p116 = scmp.eq.s32.totalorder %s9, 1
    %p117 = por %p115, %p116
    %p118 = scmp.ne.s32.totalorder %s110, %s113
    %p119 = scmp.eq.s32.totalorder %s9, 0
    %p120 = por %p118, %p119
    %p121 = scmp.ne.s32.totalorder %s110, %s113
    %p122 = scmp.eq.s32.totalorder %s14, 1
    %p123 = por %p121, %p122
    %p124 = scmp.ne.s32.totalorder %s113, %s114
    %p125 = scmp.eq.s32.totalorder %s14, 0
    %p126 = por %p124, %p125
    %p127 = scmp.ne.s32.totalorder %s113, %s114
    %p128 = scmp.eq.s32.totalorder %s15, 1
    %p129 = por %p127, %p128
    %p131 = scmp.ne.s32.totalorder %s114, %s130
    %p132 = scmp.eq.s32.totalorder %s15, 0
    %p133 = por %p131, %p132
    %p134 = scmp.le.s32.totalorder 1, %s9
    %p135 = scmp.lt.s32.totalorder %s9, 3
    %p136 = pnand %p134, %p135
    %p137 = pneg %p136
    // Predicated region
    $region9: #{_lambda_.6} parent=5 // pred_check
      _
    $region10: #{_lambda_.6} parent=5 // pred_check_branch
      %139 = sbr.rel (%p136) target = $region12
    $region11: #{_lambda_.6} parent=5 // pred_region
      %s140 = ssub.s32 %s9, 1
      // Predicated region
      $region13: #{_lambda_.6} parent=11 // pred_check
        %p141 = pneg %p98
      $region14: #{_lambda_.6} parent=11 // pred_check_branch
        %143 = sbr.rel (%p141) target = $region16
      $region15: #{_lambda_.6} parent=11 // pred_region
        _
      $region16: #{_lambda_.6} parent=11 // pred_fallthru
        _
    $region12: #{_lambda_.6} parent=5 // pred_fallthru
      _
    %p144 = scmp.lt.s32.totalorder %s9, 2
    // Predicated region
    $region17: #{_lambda_.6} parent=5 // pred_check
      %p145 = pneg %p144
    $region18: #{_lambda_.6} parent=5 // pred_check_branch
      %147 = sbr.rel (%p145) target = $region20
    $region19: #{_lambda_.6} parent=5 // pred_region
      // Predicated region
      $region21: #{_lambda_.6} parent=19 // pred_check
        %p148 = pneg %p43
      $region22: #{_lambda_.6} parent=19 // pred_check_branch
        %150 = sbr.rel (%p148) target = $region24
      $region23: #{_lambda_.6} parent=19 // pred_region
        %s151 = smul.u32 4, %s17
        %s152 = ssub.s32 5, %s151
        %p153 = scmp.lt.s32.totalorder %s152, 4
        %s154 = scalar_select %p153, %s152, 4
        %s155 = smul.u32 64, %s154
        %s156 = smul.u32 %s155, 2
        %p157 = scmp.lt.s32.totalorder %s16, 1
        %s158 = scalar_select %p157, %s16, 1
        %p159 = scmp.lt.s32.totalorder %s151, 4
        %s160 = scalar_select %p159, %s151, 4
        %s161 = smul.addr %s160, 2
        %s162 = smul.addr %s158, 10
        %s163 = sadd.s32 %s161, %s162
        %s164 = smul.addr %s163, 4
        %s165 = scalar_lea.vmem %s0, %s164
        %s166 = smul.u32 4, %s17
        %s167 = ssub.s32 5, %s166
        %p168 = scmp.lt.s32.totalorder %s167, 4
        %s169 = scalar_select %p168, %s167, 4
        %s170 = smul.u32 64, %s169
        %s171 = smul.u32 %s170, 2
      $region24: #{_lambda_.6} parent=19 // pred_fallthru
        _
      // Predicated region
      $region25: #{_lambda_.6} parent=19 // pred_check
        %p172 = pneg %p71
      $region26: #{_lambda_.6} parent=19 // pred_check_branch
        %174 = sbr.rel (%p172) target = $region28
      $region27: #{_lambda_.6} parent=19 // pred_region
        %p175 = scmp.lt.s32.totalorder %s16, 1
        %s176 = scalar_select %p175, %s16, 1
        %p177 = scmp.lt.s32.totalorder %s17, 0
        %s178 = scalar_select %p177, %s17, 0
        %s179 = smul.addr %s178, 2
        %s180 = smul.addr %s176, 2
        %s181 = sadd.s32 %s179, %s180
        %s182 = scalar_lea.vmem %s1, %s181
      $region28: #{_lambda_.6} parent=19 // pred_fallthru
        _
    $region20: #{_lambda_.6} parent=5 // pred_fallthru
      _
    %p183 = scmp.le.s32.totalorder 1, %s9
    %p184 = scmp.lt.s32.totalorder %s9, 3
    %p185 = pnand %p183, %p184
    %p186 = pneg %p185
    // Predicated region
    $region29: #{_lambda_.6} parent=5 // pred_check
      _
    $region30: #{_lambda_.6} parent=5 // pred_check_branch
      %188 = sbr.rel (%p185) target = $region32
    $region31: #{_lambda_.6} parent=5 // pred_region
      %s189 = ssub.s32 %s9, 1
      %s190 = smul.u32 4, %s19
      %s191 = ssub.s32 5, %s190
      %p192 = scmp.lt.s32.totalorder %s191, 4
      %s193 = scalar_select %p192, %s191, 4
      %s194 = smul.u32 64, %s193
      %s195 = smul.u32 %s194, 2
      %p196 = scmp.lt.s32.totalorder %s18, 1
      %s197 = scalar_select %p196, %s18, 1
      %p198 = scmp.lt.s32.totalorder %s190, 4
      %s199 = scalar_select %p198, %s190, 4
      %s200 = smul.addr %s199, 2
      %s201 = smul.addr %s197, 10
      %s202 = sadd.s32 %s200, %s201
      %s203 = smul.addr %s202, 4
      %s204 = scalar_lea.vmem %s0, %s203
      %p205 = pneg %p49
      %p206 = pneg %p46
      %p207 = scmp.lt.s32.totalorder %s18, 1
      %s208 = scalar_select %p207, %s18, 1
      %p209 = scmp.lt.s32.totalorder %s19, 0
      %s210 = scalar_select %p209, %s19, 0
      %s211 = smul.addr %s210, 2
      %s212 = smul.addr %s208, 2
      %s213 = sadd.s32 %s211, %s212
      %s214 = scalar_lea.vmem %s1, %s213
      %p215 = pneg %p77
      %p216 = pneg %p74
      %p217 = pneg %p98
      %p218 = pneg %p95
      %p219 = pneg %p126
      %p220 = pneg %p123
      %s221 = smul.u32 4, %s19
      %p222 = scmp.lt.s32.totalorder %s18, 1
      %s223 = scalar_select %p222, %s18, 1
      %p224 = scmp.lt.s32.totalorder %s221, 3
      %s225 = scalar_select %p224, %s221, 3
      %s226 = smul.addr %s223, 4
      %s227 = sadd.s32 %s225, %s226
      %s228 = smul.addr %s227, 4
      %s229 = scalar_lea.vmem %s3, %s228
      %s230 = smul.u32 4, %s19
      %s231 = ssub.s32 5, %s230
      %p232 = scmp.lt.s32.totalorder %s231, 4
      %s233 = scalar_select %p232, %s231, 4
      %s234 = smul.u32 64, %s233
      %s235 = smul.u32 %s234, 2
      %p236 = scmp.lt.s32.totalorder %s18, 1
      %s237 = scalar_select %p236, %s18, 1
      %p238 = scmp.lt.s32.totalorder %s230, 4
      %s239 = scalar_select %p238, %s230, 4
      %s240 = smul.addr %s239, 2
      %s241 = smul.addr %s237, 10
      %s242 = sadd.s32 %s240, %s241
      %s243 = smul.addr %s242, 4
      %s244 = scalar_lea.vmem %s0, %s243
      %s245 = smul.u32 4, %s19
      %s246 = ssub.s32 5, %s245
      %p247 = scmp.lt.s32.totalorder %s246, 4
      %s248 = scalar_select %p247, %s246, 4
      %s249 = smul.u32 64, %s248
      %s250 = smul.u32 %s249, 2
      %p251 = scmp.lt.s32.totalorder %s18, 1
      %s252 = scalar_select %p251, %s18, 1
      %p253 = scmp.lt.s32.totalorder %s19, 0
      %s254 = scalar_select %p253, %s19, 0
      %s255 = smul.addr %s254, 2
      %s256 = smul.addr %s252, 2
      %s257 = sadd.s32 %s255, %s256
      %s258 = scalar_lea.vmem %s1, %s257
      %s259 = smul.u32 4, %s19
      %p260 = scmp.lt.s32.totalorder %s18, 1
      %s261 = scalar_select %p260, %s18, 1
      %p262 = scmp.lt.s32.totalorder %s259, 3
      %s263 = scalar_select %p262, %s259, 3
      %s264 = smul.addr %s261, 4
      %s265 = sadd.s32 %s263, %s264
      %s266 = smul.addr %s265, 4
      %s267 = scalar_lea.vmem %s3, %s266
      %s268 = smul.u32 4, %s19
      %v270 = vld [vmem:[%s244] sm:$0xff]
      %v271 = vld [vmem:[%s244 + $0x8] sm:$0xff]
      %v272 = vld [vmem:[%s244 + $0x10] sm:$0xff]
      %v273 = vld [vmem:[%s244 + $0x18] sm:$0xff]
      %274 = vst [vmem:[#allocation2] sm:$0xff] %v270
      %275 = vst [vmem:[#allocation2 + $0x8] sm:$0xff] %v271
      %276 = vst [vmem:[#allocation2 + $0x10] sm:$0xff] %v272
      %277 = vst [vmem:[#allocation2 + $0x18] sm:$0xff] %v273
      %v278 = vld [vmem:[%s258] sm:$0x3]
      %v281 = vunpack.c.l.s4 1935823168
      %v282 = vunpack.c.0.s8 %v281
      %v283 = vlaneseq
      %v284 = vshrl.u32 %v283, 7
      %v285 = vsub.s32 %v282, %v284
      %v286 = vrot.slane %v278, %v285
      %v288 = vunpack.c.l.s4 1935823168
      %v289 = vunpack.c.0.s8 %v288
      %v290 = vlaneseq
      %v291 = vshrl.u32 %v290, 7
      %v292 = vsub.s32 %v289, %v291
      %v293 = vrot.slane %v286, %v292
      %vm295 = vcmask 1040384
      %vm296 = vsmask.f32 256
      %vm297 = vmand %vm295, %vm296
      %vm298 = vcmask 1044484
      %vm299 = vsmask.f32 4352
      %vm300 = vmand %vm298, %vm299
      %vm301 = vmor %vm300, %vm297
      %v302 = vld [vmem:[#allocation2 + $0x20] sm:$0x11]
      %v303 = vsel %vm301, %v293, %v302
      %304 = vst [vmem:[#allocation2 + $0x20] sm:$0x11] %v303
      %v305 = vld [vmem:[#allocation2] sm:$0xff]
      %v306 = vld [vmem:[#allocation2 + $0x8] sm:$0xff]
      %v307 = vld [vmem:[#allocation2 + $0x10] sm:$0xff]
      %v308 = vld [vmem:[#allocation2 + $0x18] sm:$0xff]
      %v309 = vld [vmem:[#allocation2 + $0x20] sm:$0x11]
      %v314 = vunpack.c.l.b16 %v305
      %v315 = vunpack.c.h.b16 %v305
      %v316 = vunpack.c.l.b16 %v306
      %v317 = vunpack.c.h.b16 %v306
      %v318 = vunpack.c.l.b16 %v307
      %v319 = vunpack.c.h.b16 %v307
      %v320 = vunpack.c.l.b16 %v308
      %v321 = vunpack.c.h.b16 %v308
      %v322 = vpack.c.b16 %v316, %v314
      %v323 = vpack.c.b16 %v317, %v315
      %v324 = vpack.c.b16 %v320, %v318
      %v325 = vpack.c.b16 %v321, %v319
      %v331 = vunpack.c.l.b16 %v309
      %v332 = vunpack.c.h.b16 %v309
      %v333 = vpack.c.b16 %v331, %v331
      %v334 = vpack.c.b16 %v332, %v332
      %vm335 = vsmask.f32 7424
      %v337 = vshrl.u32 %v322, 16
      %v339 = vshll.u32 %v322, 16
      %v341 = vrot.slane %v339, 1
      %v342 = vor.u32 %v337, %v341
      %v344 = vshll.u32 %v324, 16
      %v346 = vrot.slane %v344, 1
      %v347 = vsel %vm335, %v342, %v346
      %v349 = vshrl.u32 %v323, 16
      %v351 = vshll.u32 %v323, 16
      %v353 = vrot.slane %v351, 1
      %v354 = vor.u32 %v349, %v353
      %v356 = vshll.u32 %v325, 16
      %v358 = vrot.slane %v356, 1
      %v359 = vsel %vm335, %v354, %v358
      %v360 = vshrl.u32 %v324, 16
      %v362 = vor.u32 %v360, %v346
      %v364 = vshll.u32 %v333, 16
      %v366 = vrot.slane %v364, 1
      %v367 = vsel %vm335, %v362, %v366
      %v368 = vshrl.u32 %v325, 16
      %v370 = vor.u32 %v368, %v358
      %v372 = vshll.u32 %v334, 16
      %v374 = vrot.slane %v372, 1
      %v375 = vsel %vm335, %v370, %v374
      %v380 = vld [vmem:[%s2] sm:$0xf]
      %v381 = vld [vmem:[%s2 + $0x4] sm:$0xf]
      %v382 = vld [vmem:[%s2 + $0x8] sm:$0xf]
      %v383 = vld [vmem:[%s2 + $0xc] sm:$0xf]
      %v384 = vld [vmem:[%s2 + $0x10] sm:$0xf]
      %v385 = vld [vmem:[%s2 + $0x14] sm:$0xf]
      %v386 = vld [vmem:[%s2 + $0x18] sm:$0xf]
      %v387 = vld [vmem:[%s2 + $0x1c] sm:$0xf]
      %v388 = vld [vmem:[%s2 + $0x20] sm:$0xf]
      %v389 = vld [vmem:[%s2 + $0x24] sm:$0xf]
      %v390 = vld [vmem:[%s2 + $0x28] sm:$0xf]
      %v391 = vld [vmem:[%s2 + $0x2c] sm:$0xf]
      %v392 = vld [vmem:[%s2 + $0x30] sm:$0xf]
      %v393 = vld [vmem:[%s2 + $0x34] sm:$0xf]
      %v394 = vld [vmem:[%s2 + $0x38] sm:$0xf]
      %v395 = vld [vmem:[%s2 + $0x3c] sm:$0xf]
      %v396 = vld [vmem:[%s2 + $0x40] sm:$0xf]
      %v397 = vld [vmem:[%s2 + $0x44] sm:$0xf]
      %v398 = vld [vmem:[%s2 + $0x48] sm:$0xf]
      %v399 = vld [vmem:[%s2 + $0x4c] sm:$0xf]
      %v400 = vld [vmem:[%s2 + $0x50] sm:$0xf]
      %v401 = vld [vmem:[%s2 + $0x54] sm:$0xf]
      %v402 = vld [vmem:[%s2 + $0x58] sm:$0xf]
      %v403 = vld [vmem:[%s2 + $0x5c] sm:$0xf]
      %v404 = vld [vmem:[%s2 + $0x60] sm:$0xf]
      %v405 = vld [vmem:[%s2 + $0x64] sm:$0xf]
      %v406 = vld [vmem:[%s2 + $0x68] sm:$0xf]
      %v407 = vld [vmem:[%s2 + $0x6c] sm:$0xf]
      %v408 = vld [vmem:[%s2 + $0x70] sm:$0xf]
      %v409 = vld [vmem:[%s2 + $0x74] sm:$0xf]
      %v410 = vld [vmem:[%s2 + $0x78] sm:$0xf]
      %v411 = vld [vmem:[%s2 + $0x7c] sm:$0xf]
      %v412 = vld [vmem:[%s2 + $0x80] sm:$0xf]
      %v413 = vld [vmem:[%s2 + $0x84] sm:$0xf]
      %v414 = vld [vmem:[%s2 + $0x88] sm:$0xf]
      %v415 = vld [vmem:[%s2 + $0x8c] sm:$0xf]
      %v416 = vld [vmem:[%s2 + $0x90] sm:$0xf]
      %v417 = vld [vmem:[%s2 + $0x94] sm:$0xf]
      %v418 = vld [vmem:[%s2 + $0x98] sm:$0xf]
      %v419 = vld [vmem:[%s2 + $0x9c] sm:$0xf]
      %v420 = vld [vmem:[%s2 + $0xa0] sm:$0xf]
      %v421 = vld [vmem:[%s2 + $0xa4] sm:$0xf]
      %v422 = vld [vmem:[%s2 + $0xa8] sm:$0xf]
      %v423 = vld [vmem:[%s2 + $0xac] sm:$0xf]
      %v424 = vld [vmem:[%s2 + $0xb0] sm:$0xf]
      %v425 = vld [vmem:[%s2 + $0xb4] sm:$0xf]
      %v426 = vld [vmem:[%s2 + $0xb8] sm:$0xf]
      %v427 = vld [vmem:[%s2 + $0xbc] sm:$0xf]
      %v428 = vld [vmem:[%s2 + $0xc0] sm:$0xf]
      %v429 = vld [vmem:[%s2 + $0xc4] sm:$0xf]
      %v430 = vld [vmem:[%s2 + $0xc8] sm:$0xf]
      %v431 = vld [vmem:[%s2 + $0xcc] sm:$0xf]
      %v432 = vld [vmem:[%s2 + $0xd0] sm:$0xf]
      %v433 = vld [vmem:[%s2 + $0xd4] sm:$0xf]
      %v434 = vld [vmem:[%s2 + $0xd8] sm:$0xf]
      %v435 = vld [vmem:[%s2 + $0xdc] sm:$0xf]
      %v436 = vld [vmem:[%s2 + $0xe0] sm:$0xf]
      %v437 = vld [vmem:[%s2 + $0xe4] sm:$0xf]
      %v438 = vld [vmem:[%s2 + $0xe8] sm:$0xf]
      %v439 = vld [vmem:[%s2 + $0xec] sm:$0xf]
      %v440 = vld [vmem:[%s2 + $0xf0] sm:$0xf]
      %v441 = vld [vmem:[%s2 + $0xf4] sm:$0xf]
      %v442 = vld [vmem:[%s2 + $0xf8] sm:$0xf]
      %v443 = vld [vmem:[%s2 + $0xfc] sm:$0xf]
      %v508 = vunpack.c.l.b16 %v380
      %v509 = vunpack.c.l.b16 %v381
      %v510 = vunpack.c.l.b16 %v382
      %v511 = vunpack.c.l.b16 %v383
      %v512 = vunpack.c.l.b16 %v384
      %v513 = vunpack.c.l.b16 %v385
      %v514 = vunpack.c.l.b16 %v386
      %v515 = vunpack.c.l.b16 %v387
      %v516 = vunpack.c.l.b16 %v388
      %v517 = vunpack.c.l.b16 %v389
      %v518 = vunpack.c.l.b16 %v390
      %v519 = vunpack.c.l.b16 %v391
      %v520 = vunpack.c.l.b16 %v392
      %v521 = vunpack.c.l.b16 %v393
      %v522 = vunpack.c.l.b16 %v394
      %v523 = vunpack.c.l.b16 %v395
      %v524 = vunpack.c.l.b16 %v396
      %v525 = vunpack.c.l.b16 %v397
      %v526 = vunpack.c.l.b16 %v398
      %v527 = vunpack.c.l.b16 %v399
      %v528 = vunpack.c.l.b16 %v400
      %v529 = vunpack.c.l.b16 %v401
      %v530 = vunpack.c.l.b16 %v402
      %v531 = vunpack.c.l.b16 %v403
      %v532 = vunpack.c.l.b16 %v404
      %v533 = vunpack.c.l.b16 %v405
      %v534 = vunpack.c.l.b16 %v406
      %v535 = vunpack.c.l.b16 %v407
      %v536 = vunpack.c.l.b16 %v408
      %v537 = vunpack.c.l.b16 %v409
      %v538 = vunpack.c.l.b16 %v410
      %v539 = vunpack.c.l.b16 %v411
      %v540 = vunpack.c.l.b16 %v412
      %v541 = vunpack.c.l.b16 %v413
      %v542 = vunpack.c.l.b16 %v414
      %v543 = vunpack.c.l.b16 %v415
      %v544 = vunpack.c.l.b16 %v416
      %v545 = vunpack.c.l.b16 %v417
      %v546 = vunpack.c.l.b16 %v418
      %v547 = vunpack.c.l.b16 %v419
      %v548 = vunpack.c.l.b16 %v420
      %v549 = vunpack.c.l.b16 %v421
      %v550 = vunpack.c.l.b16 %v422
      %v551 = vunpack.c.l.b16 %v423
      %v552 = vunpack.c.l.b16 %v424
      %v553 = vunpack.c.l.b16 %v425
      %v554 = vunpack.c.l.b16 %v426
      %v555 = vunpack.c.l.b16 %v427
      %v556 = vunpack.c.l.b16 %v428
      %v557 = vunpack.c.l.b16 %v429
      %v558 = vunpack.c.l.b16 %v430
      %v559 = vunpack.c.l.b16 %v431
      %v560 = vunpack.c.l.b16 %v432
      %v561 = vunpack.c.l.b16 %v433
      %v562 = vunpack.c.l.b16 %v434
      %v563 = vunpack.c.l.b16 %v435
      %v564 = vunpack.c.l.b16 %v436
      %v565 = vunpack.c.l.b16 %v437
      %v566 = vunpack.c.l.b16 %v438
      %v567 = vunpack.c.l.b16 %v439
      %v568 = vunpack.c.l.b16 %v440
      %v569 = vunpack.c.l.b16 %v441
      %v570 = vunpack.c.l.b16 %v442
      %v571 = vunpack.c.l.b16 %v443
      %v572 = vpack.c.b16 %v509, %v508
      %v573 = vpack.c.b16 %v511, %v510
      %v574 = vpack.c.b16 %v513, %v512
      %v575 = vpack.c.b16 %v515, %v514
      %v576 = vpack.c.b16 %v517, %v516
      %v577 = vpack.c.b16 %v519, %v518
      %v578 = vpack.c.b16 %v521, %v520
      %v579 = vpack.c.b16 %v523, %v522
      %v580 = vpack.c.b16 %v525, %v524
      %v581 = vpack.c.b16 %v527, %v526
      %v582 = vpack.c.b16 %v529, %v528
      %v583 = vpack.c.b16 %v531, %v530
      %v584 = vpack.c.b16 %v533, %v532
      %v585 = vpack.c.b16 %v535, %v534
      %v586 = vpack.c.b16 %v537, %v536
      %v587 = vpack.c.b16 %v539, %v538
      %v588 = vpack.c.b16 %v541, %v540
      %v589 = vpack.c.b16 %v543, %v542
      %v590 = vpack.c.b16 %v545, %v544
      %v591 = vpack.c.b16 %v547, %v546
      %v592 = vpack.c.b16 %v549, %v548
      %v593 = vpack.c.b16 %v551, %v550
      %v594 = vpack.c.b16 %v553, %v552
      %v595 = vpack.c.b16 %v555, %v554
      %v596 = vpack.c.b16 %v557, %v556
      %v597 = vpack.c.b16 %v559, %v558
      %v598 = vpack.c.b16 %v561, %v560
      %v599 = vpack.c.b16 %v563, %v562
      %v600 = vpack.c.b16 %v565, %v564
      %v601 = vpack.c.b16 %v567, %v566
      %v602 = vpack.c.b16 %v569, %v568
      %v603 = vpack.c.b16 %v571, %v570
      %636 = vmatprep.subr.bf16.mxu0 0
      %637 = vmatpush1.bf16.msra.mxu0 %v572
      %638 = vmatprep.subr.bf16.mxu0 0
      %639 = vmatpush1.bf16.msra.mxu0 %v573
      %640 = vmatprep.subr.bf16.mxu0 0
      %641 = vmatpush1.bf16.msra.mxu0 %v574
      %642 = vmatprep.subr.bf16.mxu0 0
      %643 = vmatpush1.bf16.msra.mxu0 %v575
      %644 = vmatprep.subr.bf16.mxu0 0
      %645 = vmatpush1.bf16.msra.mxu0 %v576
      %646 = vmatprep.subr.bf16.mxu0 0
      %647 = vmatpush1.bf16.msra.mxu0 %v577
      %648 = vmatprep.subr.bf16.mxu0 0
      %649 = vmatpush1.bf16.msra.mxu0 %v578
      %650 = vmatprep.subr.bf16.mxu0 0
      %651 = vmatpush1.bf16.msra.mxu0 %v579
      %652 = vmatprep.subr.bf16.mxu0 0
      %653 = vmatpush1.bf16.msra.mxu0 %v580
      %654 = vmatprep.subr.bf16.mxu0 0
      %655 = vmatpush1.bf16.msra.mxu0 %v581
      %656 = vmatprep.subr.bf16.mxu0 0
      %657 = vmatpush1.bf16.msra.mxu0 %v582
      %658 = vmatprep.subr.bf16.mxu0 0
      %659 = vmatpush1.bf16.msra.mxu0 %v583
      %660 = vmatprep.subr.bf16.mxu0 0
      %661 = vmatpush1.bf16.msra.mxu0 %v584
      %662 = vmatprep.subr.bf16.mxu0 0
      %663 = vmatpush1.bf16.msra.mxu0 %v585
      %664 = vmatprep.subr.bf16.mxu0 0
      %665 = vmatpush1.bf16.msra.mxu0 %v586
      %666 = vmatprep.subr.bf16.mxu0 0
      %667 = vmatpush1.bf16.msra.mxu0 %v587
      %668 = vmatprep.mubr.bf16.mxu0 %v323
      %669 = vmatmul.mubr.bf16.gmra.mrb[0].mxu0 %v322
      %v670 = vpop.f32.mrb[0].mxu0
      %v671 = vadd.f32 0.0, %v670
      %v672 = vpop.f32.mrb[0].mxu0
      %v673 = vpop.f32.mrb[0].mxu0
      %v674 = vadd.f32 0.0, %v673
      %v675 = vpop.f32.mrb[0].mxu0
      %676 = vmatprep.mubr.bf16.mxu0 %v325
      %677 = vmatmul.mubr.bf16.gmra.mrb[0].mxu0 %v324
      %v678 = vpop.f32.mrb[0].mxu0
      %v679 = vadd.f32 0.0, %v678
      %v680 = vpop.f32.mrb[0].mxu0
      %v681 = vpop.f32.mrb[0].mxu0
      %v682 = vadd.f32 0.0, %v681
      %v683 = vpop.f32.mrb[0].mxu0
      %684 = vdwg.mxu0
      %685 = vmatprep.subr.bf16.mxu0 0
      %686 = vmatpush1.bf16.msra.mxu0 %v588
      %687 = vmatprep.subr.bf16.mxu0 0
      %688 = vmatpush1.bf16.msra.mxu0 %v589
      %689 = vmatprep.subr.bf16.mxu0 0
      %690 = vmatpush1.bf16.msra.mxu0 %v590
      %691 = vmatprep.subr.bf16.mxu0 0
      %692 = vmatpush1.bf16.msra.mxu0 %v591
      %693 = vmatprep.subr.bf16.mxu0 0
      %694 = vmatpush1.bf16.msra.mxu0 %v592
      %695 = vmatprep.subr.bf16.mxu0 0
      %696 = vmatpush1.bf16.msra.mxu0 %v593
      %697 = vmatprep.subr.bf16.mxu0 0
      %698 = vmatpush1.bf16.msra.mxu0 %v594
      %699 = vmatprep.subr.bf16.mxu0 0
      %700 = vmatpush1.bf16.msra.mxu0 %v595
      %701 = vmatprep.subr.bf16.mxu0 0
      %702 = vmatpush1.bf16.msra.mxu0 %v596
      %703 = vmatprep.subr.bf16.mxu0 0
      %704 = vmatpush1.bf16.msra.mxu0 %v597
      %705 = vmatprep.subr.bf16.mxu0 0
      %706 = vmatpush1.bf16.msra.mxu0 %v598
      %707 = vmatprep.subr.bf16.mxu0 0
      %708 = vmatpush1.bf16.msra.mxu0 %v599
      %709 = vmatprep.subr.bf16.mxu0 0
      %710 = vmatpush1.bf16.msra.mxu0 %v600
      %711 = vmatprep.subr.bf16.mxu0 0
      %712 = vmatpush1.bf16.msra.mxu0 %v601
      %713 = vmatprep.subr.bf16.mxu0 0
      %714 = vmatpush1.bf16.msra.mxu0 %v602
      %715 = vmatprep.subr.bf16.mxu0 0
      %716 = vmatpush1.bf16.msra.mxu0 %v603
      %717 = vmatprep.mubr.bf16.mxu0 %v359
      %718 = vmatmul.mubr.bf16.gmra.mrb[0].mxu0 %v347
      %v719 = vpop.f32.mrb[0].mxu0
      %v720 = vadd.f32 %v671, %v719
      %v721 = vpop.f32.mrb[0].mxu0
      %v722 = vpop.f32.mrb[0].mxu0
      %v723 = vadd.f32 %v674, %v722
      %v724 = vpop.f32.mrb[0].mxu0
      %725 = vmatprep.mubr.bf16.mxu0 %v375
      %726 = vmatmul.mubr.bf16.gmra.mrb[0].mxu0 %v367
      %v727 = vpop.f32.mrb[0].mxu0
      %v728 = vadd.f32 %v679, %v727
      %v729 = vpop.f32.mrb[0].mxu0
      %v730 = vpop.f32.mrb[0].mxu0
      %v731 = vadd.f32 %v682, %v730
      %v732 = vpop.f32.mrb[0].mxu0
      %733 = vdwg.mxu0
      %v734 = vmul.f32 %v720, 0.70710677
      %v735 = vmul.f32 %v723, 0.70710677
      %v736 = vmul.f32 %v728, 0.70710677
      %v737 = vmul.f32 %v731, 0.70710677
      %v738 = vand.u32 2147483647, %v734
      %v739 = vand.u32 2147483647, %v735
      %v740 = vand.u32 2147483647, %v736
      %v741 = vand.u32 2147483647, %v737
      %v742 = vmul.f32 %v738, 0.3275911
      %v743 = vmul.f32 %v739, 0.3275911
      %v744 = vmul.f32 %v740, 0.3275911
      %v745 = vmul.f32 %v741, 0.3275911
      %v746 = vadd.f32 %v742, 1.0
      %v747 = vadd.f32 %v743, 1.0
      %v748 = vadd.f32 %v744, 1.0
      %v749 = vadd.f32 %v745, 1.0
      %v750 = vrcp.pop %v746
      %v751 = vrcp.pop %v747
      %v752 = vrcp.pop %v748
      %v753 = vrcp.pop %v749
      %v754 = vmul.f32 %v750, 1.0614054
      %v755 = vmul.f32 %v751, 1.0614054
      %v756 = vmul.f32 %v752, 1.0614054
      %v757 = vmul.f32 %v753, 1.0614054
      %v758 = vsub.f32 %v754, 1.4531521
      %v759 = vsub.f32 %v755, 1.4531521
      %v760 = vsub.f32 %v756, 1.4531521
      %v761 = vsub.f32 %v757, 1.4531521
      %v762 = vmul.f32 %v758, %v750
      %v763 = vmul.f32 %v759, %v751
      %v764 = vmul.f32 %v760, %v752
      %v765 = vmul.f32 %v761, %v753
      %v766 = vadd.f32 %v762, 1.4214138
      %v767 = vadd.f32 %v763, 1.4214138
      %v768 = vadd.f32 %v764, 1.4214138
      %v769 = vadd.f32 %v765, 1.4214138
      %v770 = vmul.f32 %v766, %v750
      %v771 = vmul.f32 %v767, %v751
      %v772 = vmul.f32 %v768, %v752
      %v773 = vmul.f32 %v769, %v753
      %v774 = vsub.f32 %v770, 0.28449672
      %v775 = vsub.f32 %v771, 0.28449672
      %v776 = vsub.f32 %v772, 0.28449672
      %v777 = vsub.f32 %v773, 0.28449672
      %v778 = vmul.f32 %v774, %v750
      %v779 = vmul.f32 %v775, %v751
      %v780 = vmul.f32 %v776, %v752
      %v781 = vmul.f32 %v777, %v753
      %v782 = vadd.f32 %v778, 0.2548296
      %v783 = vadd.f32 %v779, 0.2548296
      %v784 = vadd.f32 %v780, 0.2548296
      %v785 = vadd.f32 %v781, 0.2548296
      %v786 = vmul.f32 %v782, %v750
      %v787 = vmul.f32 %v783, %v751
      %v788 = vmul.f32 %v784, %v752
      %v789 = vmul.f32 %v785, %v753
      %v790 = vsub.f32 0.0, %v738
      %v791 = vsub.f32 0.0, %v739
      %v792 = vsub.f32 0.0, %v740
      %v793 = vsub.f32 0.0, %v741
      %v794 = vmul.f32 %v790, %v738
      %v795 = vmul.f32 %v791, %v739
      %v796 = vmul.f32 %v792, %v740
      %v797 = vmul.f32 %v793, %v741
      %v798 = vmul.f32 %v794, 1.442695
      %v799 = vpow.pop %v798
      %v800 = vmul.f32 %v795, 1.442695
      %v801 = vpow.pop %v800
      %v802 = vmul.f32 %v796, 1.442695
      %v803 = vpow.pop %v802
      %v804 = vmul.f32 %v797, 1.442695
      %v805 = vpow.pop %v804
      %v806 = vmul.f32 %v786, %v799
      %v807 = vmul.f32 %v787, %v801
      %v808 = vmul.f32 %v788, %v803
      %v809 = vmul.f32 %v789, %v805
      %v810 = vsub.f32 1.0, %v806
      %v811 = vsub.f32 1.0, %v807
      %v812 = vsub.f32 1.0, %v808
      %v813 = vsub.f32 1.0, %v809
      %vm814 = vcmp.ge.f32.partialorder %v734, 0.0
      %vm815 = vcmp.ge.f32.partialorder %v735, 0.0
      %vm816 = vcmp.ge.f32.partialorder %v736, 0.0
      %vm817 = vcmp.ge.f32.partialorder %v737, 0.0
      %v818 = vsub.f32 0.0, %v810
      %v819 = vsub.f32 0.0, %v811
      %v820 = vsub.f32 0.0, %v812
      %v821 = vsub.f32 0.0, %v813
      %v822 = vsel %vm814, %v810, %v818
      %v823 = vsel %vm815, %v811, %v819
      %v824 = vsel %vm816, %v812, %v820
      %v825 = vsel %vm817, %v813, %v821
      %v826 = vmul.f32 %v720, 0.5
      %v827 = vmul.f32 %v723, 0.5
      %v828 = vmul.f32 %v728, 0.5
      %v829 = vmul.f32 %v731, 0.5
      %v830 = vadd.f32 %v822, 1.0
      %v831 = vadd.f32 %v823, 1.0
      %v832 = vadd.f32 %v824, 1.0
      %v833 = vadd.f32 %v825, 1.0
      %v834 = vmul.f32 %v826, %v830
      %v835 = vmul.f32 %v827, %v831
      %v836 = vmul.f32 %v828, %v832
      %v837 = vmul.f32 %v829, %v833
      %v838 = vpack.c.bf16 %v835, %v834
      %v839 = vpack.c.bf16 %v837, %v836
      %v842 = vunpack.c.l.b16 %v838
      %v843 = vunpack.c.h.b16 %v838
      %v844 = vunpack.c.l.b16 %v839
      %v845 = vunpack.c.h.b16 %v839
      %v846 = vpack.c.b16 %v842, %v842
      %v847 = vpack.c.b16 %v843, %v843
      %v848 = vpack.c.b16 %v844, %v844
      %v849 = vpack.c.b16 %v845, %v845
      %854 = vst [vmem:[%s267] sm:$0xf] %v846
      %855 = vst [vmem:[%s267 + $0x4] sm:$0xf] %v847
      %856 = vst [vmem:[%s267 + $0x8] sm:$0xf] %v848
      %857 = vst [vmem:[%s267 + $0xc] sm:$0xf] %v849
      %s858 = smul.u32 4, %s19
      %p859 = scmp.lt.s32.totalorder %s18, 1
      %s860 = scalar_select %p859, %s18, 1
      %p861 = scmp.lt.s32.totalorder %s858, 3
      %s862 = scalar_select %p861, %s858, 3
      %s863 = smul.addr %s860, 4
      %s864 = sadd.s32 %s862, %s863
      %s865 = smul.addr %s864, 4
      %s866 = scalar_lea.vmem %s3, %s865
      // Predicated region
      $region33: #{_lambda_.6} parent=31 // pred_check
        %p867 = pneg %p123
      $region34: #{_lambda_.6} parent=31 // pred_check_branch
        %869 = sbr.rel (%p867) target = $region36
      $region35: #{_lambda_.6} parent=31 // pred_region
        %s870 = smul.u32 4, %s19
      $region36: #{_lambda_.6} parent=31 // pred_fallthru
        _
    $region32: #{_lambda_.6} parent=5 // pred_fallthru
      _
    %p871 = scmp.le.s32.totalorder 2, %s9
    // Predicated region
    $region37: #{_lambda_.6} parent=5 // pred_check
      %p872 = pneg %p871
    $region38: #{_lambda_.6} parent=5 // pred_check_branch
      %874 = sbr.rel (%p872) target = $region40
    $region39: #{_lambda_.6} parent=5 // pred_region
      %s875 = ssub.s32 %s9, 2
      // Predicated region
      $region41: #{_lambda_.6} parent=39 // pred_check
        %p876 = pneg %p129
      $region42: #{_lambda_.6} parent=39 // pred_check_branch
        %878 = sbr.rel (%p876) target = $region44
      $region43: #{_lambda_.6} parent=39 // pred_region
        %s879 = smul.u32 4, %s21
        %p880 = scmp.lt.s32.totalorder %s20, 1
        %s881 = scalar_select %p880, %s20, 1
        %p882 = scmp.lt.s32.totalorder %s879, 3
        %s883 = scalar_select %p882, %s879, 3
        %s884 = smul.addr %s881, 4
        %s885 = sadd.s32 %s883, %s884
        %s886 = smul.addr %s885, 4
        %s887 = scalar_lea.vmem %s3, %s886
      $region44: #{_lambda_.6} parent=39 // pred_fallthru
        _
    $region40: #{_lambda_.6} parent=5 // pred_fallthru
      _
  $region6: #{_lambda_.6} parent=0 // loop_footer
    %s13 = sadd.s32 1, %s9
  $region7: #{_lambda_.6} parent=0 // loop_footer_branch
    %8 = sbr.rel target = $region3
  $region8: #{_lambda_.6} parent=0 // loop_exit
    _

// kernel: _lambda_.4
$region0: #{_lambda_.4}
  #allocation0 [shape = 'u32[]', space=smem, size = 0x4, offset = 0x4, fixed_abs, tag = 'smem constant byte address 0x4 - core index']
  #allocation1 [shape = 'u32[144,128]{1,0:T(1,128)}', space=vmem, size = 0x12000, scoped, tag = 'internal scratch']
  #allocation2 [shape = 'bf16[81,5]{1,0:T(8,128)(2,1)}', space=vmem, size = 0x5800, scoped, tag = 'scratch operand']
  %s0 = inlined_call_operand.vmem [shape: bf16[2,81,5], index: 0, kind: input, shape index: {}]
  %s1 = inlined_call_operand.vmem [shape: bf16[2,1,1,5], index: 1, kind: input, shape index: {}]
  %s2 = inlined_call_operand.vmem [shape: bf16[2,5,128], index: 2, kind: input, shape index: {}]
  %s3 = inlined_call_operand.vmem [shape: f32[2,8,128], index: 3, kind: output, shape index: {0}]
  %s4 = inlined_call_operand.vmem [shape: f32[2,8,128], index: 4, kind: output, shape index: {1}]
  %5 = xla_tuple %s3, %s4
  %s6 = sld [smem:[#allocation0]]
  $region53: #{_lambda_.4} parent=0
    _
  %s8 = ssub.s32 1, %s6
  %s9 = scalar_select 0, %s8, %s6
  loop: start=0, step=1, limit=4
  $region2: #{_lambda_.4} parent=0 // loop_pre_header
    _
  $region3: #{_lambda_.4} parent=0 // loop_header
    %s11 = sphi 0, %s15
    %p12 = scmp.ge.s32.totalorder %s11, 4
    %s18 = sphi 0, %s30
    %s19 = sphi 0, %s26
    %s20 = sphi 0, %s18
    %s21 = sphi 0, %s19
    %s22 = sphi 0, %s20
    %s23 = sphi 0, %s21
    %s35 = sphi 0, %s37
    %s38 = sphi 0, %s35
    %s39 = sphi 0, %s38
    %s55 = sphi 0, %s39
    %s63 = sphi 0, %s65
    %s66 = sphi 0, %s63
    %s67 = sphi 0, %s66
    %s83 = sphi 0, %s67
    %s87 = sphi 0, %s87
    %s89 = sphi 0, %s87
    %s90 = sphi 0, %s89
    %s104 = sphi 0, %s90
    %s112 = sphi 0, %s114
    %s115 = sphi 0, %s112
    %s116 = sphi 0, %s115
    %s132 = sphi 0, %s116
    %s140 = sphi 0, %s142
    %s143 = sphi 0, %s140
    %s144 = sphi 0, %s143
    %s160 = sphi 0, %s144
  $region4: #{_lambda_.4} parent=0 // loop_header_branch
    %14 = sbr.rel (%p12) target = $region8
  $region5: #{_lambda_.4} parent=0 // loop_body
    %s16 = ssub.s32 %s11, 1
    %s17 = ssub.s32 %s11, 2
    %s24 = sadd.s32 1, %s19
    %p25 = scmp.ge.s32.totalorder %s24, 1
    %s26 = scalar_select %p25, 0, %s24
    %s27 = sadd.s32 1, %s18
    %s28 = scalar_select %p25, %s27, %s18
    %p29 = scmp.ge.s32.totalorder %s28, 2
    %s30 = scalar_select %p29, 0, %s28
    %s31 = ssub.s32 %s18, %s30
    %s32 = ssub.s32 %s19, %s26
    %s33 = sor.u32 %s31, %s32
    %p34 = scmp.eq.s32.totalorder %s33, 0
    %s36 = sadd.s32 %s35, 1
    %s37 = scalar_select %p34, %s35, %s36
    %p40 = pneg %p34
    %p41 = scmp.eq.s32.totalorder %s11, 1
    %p42 = por %p40, %p41
    %p43 = scmp.ne.s32.totalorder %s35, %s38
    %p44 = scmp.eq.s32.totalorder %s11, 0
    %p45 = por %p43, %p44
    %p46 = scmp.ne.s32.totalorder %s35, %s38
    %p47 = scmp.eq.s32.totalorder %s16, 1
    %p48 = por %p46, %p47
    %p49 = scmp.ne.s32.totalorder %s38, %s39
    %p50 = scmp.eq.s32.totalorder %s16, 0
    %p51 = por %p49, %p50
    %p52 = scmp.ne.s32.totalorder %s38, %s39
    %p53 = scmp.eq.s32.totalorder %s17, 1
    %p54 = por %p52, %p53
    %p56 = scmp.ne.s32.totalorder %s39, %s55
    %p57 = scmp.eq.s32.totalorder %s17, 0
    %p58 = por %p56, %p57
    %s59 = ssub.s32 %s18, %s30
    %s60 = ssub.s32 %s19, %s26
    %s61 = sor.u32 %s59, %s60
    %p62 = scmp.eq.s32.totalorder %s61, 0
    %s64 = sadd.s32 %s63, 1
    %s65 = scalar_select %p62, %s63, %s64
    %p68 = pneg %p62
    %p69 = scmp.eq.s32.totalorder %s11, 1
    %p70 = por %p68, %p69
    %p71 = scmp.ne.s32.totalorder %s63, %s66
    %p72 = scmp.eq.s32.totalorder %s11, 0
    %p73 = por %p71, %p72
    %p74 = scmp.ne.s32.totalorder %s63, %s66
    %p75 = scmp.eq.s32.totalorder %s16, 1
    %p76 = por %p74, %p75
    %p77 = scmp.ne.s32.totalorder %s66, %s67
    %p78 = scmp.eq.s32.totalorder %s16, 0
    %p79 = por %p77, %p78
    %p80 = scmp.ne.s32.totalorder %s66, %s67
    %p81 = scmp.eq.s32.totalorder %s17, 1
    %p82 = por %p80, %p81
    %p84 = scmp.ne.s32.totalorder %s67, %s83
    %p85 = scmp.eq.s32.totalorder %s17, 0
    %p86 = por %p84, %p85
    %s88 = sadd.s32 %s87, 1
    %p91 = scmp.eq.s32.totalorder %s11, 1
    %p92 = scmp.ne.s32.totalorder %s87, %s89
    %p93 = scmp.eq.s32.totalorder %s11, 0
    %p94 = por %p92, %p93
    %p95 = scmp.ne.s32.totalorder %s87, %s89
    %p96 = scmp.eq.s32.totalorder %s16, 1
    %p97 = por %p95, %p96
    %p98 = scmp.ne.s32.totalorder %s89, %s90
    %p99 = scmp.eq.s32.totalorder %s16, 0
    %p100 = por %p98, %p99
    %p101 = scmp.ne.s32.totalorder %s89, %s90
    %p102 = scmp.eq.s32.totalorder %s17, 1
    %p103 = por %p101, %p102
    %p105 = scmp.ne.s32.totalorder %s90, %s104
    %p106 = scmp.eq.s32.totalorder %s17, 0
    %p107 = por %p105, %p106
    %s108 = ssub.s32 %s18, %s30
    %s109 = ssub.s32 %s19, %s26
    %s110 = sor.u32 %s108, %s109
    %p111 = scmp.eq.s32.totalorder %s110, 0
    %s113 = sadd.s32 %s112, 1
    %s114 = scalar_select %p111, %s112, %s113
    %p117 = pneg %p111
    %p118 = scmp.eq.s32.totalorder %s11, 1
    %p119 = por %p117, %p118
    %p120 = scmp.ne.s32.totalorder %s112, %s115
    %p121 = scmp.eq.s32.totalorder %s11, 0
    %p122 = por %p120, %p121
    %p123 = scmp.ne.s32.totalorder %s112, %s115
    %p124 = scmp.eq.s32.totalorder %s16, 1
    %p125 = por %p123, %p124
    %p126 = scmp.ne.s32.totalorder %s115, %s116
    %p127 = scmp.eq.s32.totalorder %s16, 0
    %p128 = por %p126, %p127
    %p129 = scmp.ne.s32.totalorder %s115, %s116
    %p130 = scmp.eq.s32.totalorder %s17, 1
    %p131 = por %p129, %p130
    %p133 = scmp.ne.s32.totalorder %s116, %s132
    %p134 = scmp.eq.s32.totalorder %s17, 0
    %p135 = por %p133, %p134
    %s136 = ssub.s32 %s18, %s30
    %s137 = ssub.s32 %s19, %s26
    %s138 = sor.u32 %s136, %s137
    %p139 = scmp.eq.s32.totalorder %s138, 0
    %s141 = sadd.s32 %s140, 1
    %s142 = scalar_select %p139, %s140, %s141
    %p145 = pneg %p139
    %p146 = scmp.eq.s32.totalorder %s11, 1
    %p147 = por %p145, %p146
    %p148 = scmp.ne.s32.totalorder %s140, %s143
    %p149 = scmp.eq.s32.totalorder %s11, 0
    %p150 = por %p148, %p149
    %p151 = scmp.ne.s32.totalorder %s140, %s143
    %p152 = scmp.eq.s32.totalorder %s16, 1
    %p153 = por %p151, %p152
    %p154 = scmp.ne.s32.totalorder %s143, %s144
    %p155 = scmp.eq.s32.totalorder %s16, 0
    %p156 = por %p154, %p155
    %p157 = scmp.ne.s32.totalorder %s143, %s144
    %p158 = scmp.eq.s32.totalorder %s17, 1
    %p159 = por %p157, %p158
    %p161 = scmp.ne.s32.totalorder %s144, %s160
    %p162 = scmp.eq.s32.totalorder %s17, 0
    %p163 = por %p161, %p162
    %p164 = scmp.le.s32.totalorder 1, %s11
    %p165 = scmp.lt.s32.totalorder %s11, 3
    %p166 = pnand %p164, %p165
    %p167 = pneg %p166
    // Predicated region
    $region9: #{_lambda_.4} parent=5 // pred_check
      _
    $region10: #{_lambda_.4} parent=5 // pred_check_branch
      %169 = sbr.rel (%p166) target = $region12
    $region11: #{_lambda_.4} parent=5 // pred_region
      %s170 = ssub.s32 %s11, 1
      // Predicated region
      $region13: #{_lambda_.4} parent=11 // pred_check
        %p171 = pneg %p100
      $region14: #{_lambda_.4} parent=11 // pred_check_branch
        %173 = sbr.rel (%p171) target = $region16
      $region15: #{_lambda_.4} parent=11 // pred_region
        _
      $region16: #{_lambda_.4} parent=11 // pred_fallthru
        _
    $region12: #{_lambda_.4} parent=5 // pred_fallthru
      _
    %p174 = scmp.lt.s32.totalorder %s11, 2
    // Predicated region
    $region17: #{_lambda_.4} parent=5 // pred_check
      %p175 = pneg %p174
    $region18: #{_lambda_.4} parent=5 // pred_check_branch
      %177 = sbr.rel (%p175) target = $region20
    $region19: #{_lambda_.4} parent=5 // pred_region
      // Predicated region
      $region21: #{_lambda_.4} parent=19 // pred_check
        %p178 = pneg %p45
      $region22: #{_lambda_.4} parent=19 // pred_check_branch
        %180 = sbr.rel (%p178) target = $region24
      $region23: #{_lambda_.4} parent=19 // pred_region
        %s181 = smul.u32 10, %s19
        %s182 = ssub.s32 11, %s181
        %p183 = scmp.lt.s32.totalorder %s182, 10
        %s184 = scalar_select %p183, %s182, 10
        %s185 = smul.u32 64, %s184
        %p186 = scmp.lt.s32.totalorder %s18, 1
        %s187 = scalar_select %p186, %s18, 1
        %p188 = scmp.lt.s32.totalorder %s181, 10
        %s189 = scalar_select %p188, %s181, 10
        %s190 = smul.addr %s187, 11
        %s191 = sadd.s32 %s189, %s190
        %s192 = smul.addr %s191, 4
        %s193 = scalar_lea.vmem %s0, %s192
        %s194 = smul.u32 10, %s19
        %s195 = ssub.s32 11, %s194
        %p196 = scmp.lt.s32.totalorder %s195, 10
        %s197 = scalar_select %p196, %s195, 10
        %s198 = smul.u32 64, %s197
      $region24: #{_lambda_.4} parent=19 // pred_fallthru
        _
      // Predicated region
      $region25: #{_lambda_.4} parent=19 // pred_check
        %p199 = pneg %p73
      $region26: #{_lambda_.4} parent=19 // pred_check_branch
        %201 = sbr.rel (%p199) target = $region28
      $region27: #{_lambda_.4} parent=19 // pred_region
        %p202 = scmp.lt.s32.totalorder %s18, 1
        %s203 = scalar_select %p202, %s18, 1
        %p204 = scmp.lt.s32.totalorder %s19, 0
        %s205 = scalar_select %p204, %s19, 0
        %s206 = sadd.s32 %s205, %s203
        %s207 = scalar_lea.vmem %s1, %s206
      $region28: #{_lambda_.4} parent=19 // pred_fallthru
        _
    $region20: #{_lambda_.4} parent=5 // pred_fallthru
      _
    %p208 = scmp.le.s32.totalorder 1, %s11
    %p209 = scmp.lt.s32.totalorder %s11, 3
    %p210 = pnand %p208, %p209
    %p211 = pneg %p210
    // Predicated region
    $region29: #{_lambda_.4} parent=5 // pred_check
      _
    $region30: #{_lambda_.4} parent=5 // pred_check_branch
      %213 = sbr.rel (%p210) target = $region32
    $region31: #{_lambda_.4} parent=5 // pred_region
      %s214 = ssub.s32 %s11, 1
      %s215 = smul.u32 10, %s21
      %s216 = ssub.s32 11, %s215
      %p217 = scmp.lt.s32.totalorder %s216, 10
      %s218 = scalar_select %p217, %s216, 10
      %s219 = smul.u32 64, %s218
      %p220 = scmp.lt.s32.totalorder %s20, 1
      %s221 = scalar_select %p220, %s20, 1
      %p222 = scmp.lt.s32.totalorder %s215, 10
      %s223 = scalar_select %p222, %s215, 10
      %s224 = smul.addr %s221, 11
      %s225 = sadd.s32 %s223, %s224
      %s226 = smul.addr %s225, 4
      %s227 = scalar_lea.vmem %s0, %s226
      %p228 = pneg %p51
      %p229 = pneg %p48
      %p230 = scmp.lt.s32.totalorder %s20, 1
      %s231 = scalar_select %p230, %s20, 1
      %p232 = scmp.lt.s32.totalorder %s21, 0
      %s233 = scalar_select %p232, %s21, 0
      %s234 = sadd.s32 %s233, %s231
      %s235 = scalar_lea.vmem %s1, %s234
      %p236 = pneg %p79
      %p237 = pneg %p76
      %p238 = pneg %p100
      %p239 = pneg %p97
      %p240 = pneg %p128
      %p241 = pneg %p125
      %p242 = scmp.lt.s32.totalorder %s20, 1
      %s243 = scalar_select %p242, %s20, 1
      %p244 = scmp.lt.s32.totalorder %s21, 0
      %s245 = scalar_select %p244, %s21, 0
      %s246 = sadd.s32 %s245, %s243
      %s247 = smul.addr %s246, 8
      %s248 = scalar_lea.vmem %s3, %s247
      %p249 = pneg %p156
      %p250 = pneg %p153
      %p251 = scmp.lt.s32.totalorder %s20, 1
      %s252 = scalar_select %p251, %s20, 1
      %p253 = scmp.lt.s32.totalorder %s21, 0
      %s254 = scalar_select %p253, %s21, 0
      %s255 = sadd.s32 %s254, %s252
      %s256 = smul.addr %s255, 8
      %s257 = scalar_lea.vmem %s4, %s256
      %s258 = smul.u32 10, %s21
      %s259 = ssub.s32 11, %s258
      %p260 = scmp.lt.s32.totalorder %s259, 10
      %s261 = scalar_select %p260, %s259, 10
      %s262 = smul.u32 64, %s261
      %p263 = scmp.lt.s32.totalorder %s20, 1
      %s264 = scalar_select %p263, %s20, 1
      %p265 = scmp.lt.s32.totalorder %s258, 10
      %s266 = scalar_select %p265, %s258, 10
      %s267 = smul.addr %s264, 11
      %s268 = sadd.s32 %s266, %s267
      %s269 = smul.addr %s268, 4
      %s270 = scalar_lea.vmem %s0, %s269
      %s271 = smul.u32 10, %s21
      %s272 = ssub.s32 11, %s271
      %p273 = scmp.lt.s32.totalorder %s272, 10
      %s274 = scalar_select %p273, %s272, 10
      %s275 = smul.u32 64, %s274
      %p276 = scmp.lt.s32.totalorder %s20, 1
      %s277 = scalar_select %p276, %s20, 1
      %p278 = scmp.lt.s32.totalorder %s21, 0
      %s279 = scalar_select %p278, %s21, 0
      %s280 = sadd.s32 %s279, %s277
      %s281 = scalar_lea.vmem %s1, %s280
      %p282 = scmp.lt.s32.totalorder %s20, 1
      %s283 = scalar_select %p282, %s20, 1
      %p284 = scmp.lt.s32.totalorder %s21, 0
      %s285 = scalar_select %p284, %s21, 0
      %s286 = sadd.s32 %s285, %s283
      %s287 = smul.addr %s286, 8
      %s288 = scalar_lea.vmem %s3, %s287
      %p289 = scmp.lt.s32.totalorder %s20, 1
      %s290 = scalar_select %p289, %s20, 1
      %p291 = scmp.lt.s32.totalorder %s21, 0
      %s292 = scalar_select %p291, %s21, 0
      %s293 = sadd.s32 %s292, %s290
      %s294 = smul.addr %s293, 8
      %s295 = scalar_lea.vmem %s4, %s294
      %v297 = vld [vmem:[%s270] sm:$0xf]
      %v298 = vld [vmem:[%s270 + $0x4] sm:$0xf]
      %v299 = vld [vmem:[%s270 + $0x8] sm:$0xf]
      %v300 = vld [vmem:[%s270 + $0xc] sm:$0xf]
      %v301 = vld [vmem:[%s270 + $0x10] sm:$0xf]
      %v302 = vld [vmem:[%s270 + $0x14] sm:$0xf]
      %v303 = vld [vmem:[%s270 + $0x18] sm:$0xf]
      %v304 = vld [vmem:[%s270 + $0x1c] sm:$0xf]
      %v305 = vld [vmem:[%s270 + $0x20] sm:$0xf]
      %v306 = vld [vmem:[%s270 + $0x24] sm:$0xf]
      %vm307 = vcmask 35840
      %308 = vst.msk [vmem:[#allocation2] sm:$0xf] %vm307, %v297
      %309 = vst.msk [vmem:[#allocation2 + $0x4] sm:$0xf] %vm307, %v298
      %310 = vst.msk [vmem:[#allocation2 + $0x8] sm:$0xf] %vm307, %v299
      %311 = vst.msk [vmem:[#allocation2 + $0xc] sm:$0xf] %vm307, %v300
      %312 = vst.msk [vmem:[#allocation2 + $0x10] sm:$0xf] %vm307, %v301
      %313 = vst.msk [vmem:[#allocation2 + $0x14] sm:$0xf] %vm307, %v302
      %314 = vst.msk [vmem:[#allocation2 + $0x18] sm:$0xf] %vm307, %v303
      %315 = vst.msk [vmem:[#allocation2 + $0x1c] sm:$0xf] %vm307, %v304
      %316 = vst.msk [vmem:[#allocation2 + $0x20] sm:$0xf] %vm307, %v305
      %317 = vst.msk [vmem:[#allocation2 + $0x24] sm:$0xf] %vm307, %v306
      %v318 = vld [vmem:[%s281] sm:$0x1]
      %vm319 = vcmask 32768
      %vm320 = vsmask.f32 256
      %vm321 = vmand %vm319, %vm320
      %v322 = vld [vmem:[#allocation2 + $0x28] sm:$0x1]
      %v323 = vsel %vm321, %v318, %v322
      %324 = vst [vmem:[#allocation2 + $0x28] sm:$0x1] %v323
      %v325 = vld [vmem:[#allocation2] sm:$0xf]
      %v326 = vld [vmem:[#allocation2 + $0x4] sm:$0xf]
      %v327 = vld [vmem:[#allocation2 + $0x8] sm:$0xf]
      %v328 = vld [vmem:[#allocation2 + $0xc] sm:$0xf]
      %v329 = vld [vmem:[#allocation2 + $0x10] sm:$0xf]
      %v330 = vld [vmem:[#allocation2 + $0x14] sm:$0xf]
      %v331 = vld [vmem:[#allocation2 + $0x18] sm:$0xf]
      %v332 = vld [vmem:[#allocation2 + $0x1c] sm:$0xf]
      %v333 = vld [vmem:[#allocation2 + $0x20] sm:$0xf]
      %v334 = vld [vmem:[#allocation2 + $0x24] sm:$0xf]
      %v335 = vld [vmem:[%s2] sm:$0x7]
      %v336 = vld [vmem:[#allocation2 + $0x28] sm:$0x1]
      %s337 = scalar_lea.vmem %s2, 4
      %v338 = vld [vmem:[%s337] sm:$0x7]
      %v350 = vunpack.c.l.b16 %v325
      %v351 = vunpack.c.l.b16 %v326
      %v352 = vunpack.c.l.b16 %v327
      %v353 = vunpack.c.l.b16 %v328
      %v354 = vunpack.c.l.b16 %v329
      %v355 = vunpack.c.l.b16 %v330
      %v356 = vunpack.c.l.b16 %v331
      %v357 = vunpack.c.l.b16 %v332
      %v358 = vunpack.c.l.b16 %v333
      %v359 = vunpack.c.l.b16 %v334
      %v360 = vunpack.c.l.b16 %v336
      %v361 = vpack.c.b16 %v351, %v350
      %v362 = vpack.c.b16 %v353, %v352
      %v363 = vpack.c.b16 %v355, %v354
      %v364 = vpack.c.b16 %v357, %v356
      %v365 = vpack.c.b16 %v359, %v358
      %v366 = vpack.c.b16 %v360, %v360
      %vm367 = vsmask.f32 7424
      %v369 = vshrl.u32 %v361, 16
      %v371 = vshll.u32 %v361, 16
      %v373 = vrot.slane %v371, 1
      %v374 = vor.u32 %v369, %v373
      %v376 = vshll.u32 %v362, 16
      %v378 = vrot.slane %v376, 1
      %v379 = vsel %vm367, %v374, %v378
      %v380 = vshrl.u32 %v362, 16
      %v382 = vor.u32 %v380, %v378
      %v384 = vshll.u32 %v363, 16
      %v386 = vrot.slane %v384, 1
      %v387 = vsel %vm367, %v382, %v386
      %v388 = vshrl.u32 %v363, 16
      %v390 = vor.u32 %v388, %v386
      %v392 = vshll.u32 %v364, 16
      %v394 = vrot.slane %v392, 1
      %v395 = vsel %vm367, %v390, %v394
      %v396 = vshrl.u32 %v364, 16
      %v398 = vor.u32 %v396, %v394
      %v400 = vshll.u32 %v365, 16
      %v402 = vrot.slane %v400, 1
      %v403 = vsel %vm367, %v398, %v402
      %v404 = vshrl.u32 %v365, 16
      %v406 = vor.u32 %v404, %v402
      %v408 = vshll.u32 %v366, 16
      %v410 = vrot.slane %v408, 1
      %v411 = vsel %vm367, %v406, %v410
      %vm412 = vcmask 39936
      %v414 = vsel %vm412, %v379, 0
      %v417 = vsel %vm412, %v387, 0
      %v420 = vsel %vm412, %v395, 0
      %v423 = vsel %vm412, %v403, 0
      %v426 = vsel %vm412, %v411, 0
      %vm428 = vcmask 1041408
      %vm429 = vcmask 1042432
      %v430 = vsel %vm428, 4294967295, 65535
      %v431 = vsel %vm429, %v430, 0
      %v433 = vand.u32 %v338, %v431
      %435 = vmatprep.subr.bf16.mxu0 0
      %436 = vmatpush1.bf16.msra.mxu0 %v433
      %437 = vmatprep.subr.bf16.mxu0 0
      %438 = vmatpush1.bf16.msra.mxu0 0
      %439 = vmatprep.subr.bf16.mxu0 0
      %440 = vmatpush1.bf16.msra.mxu0 0
      %441 = vmatprep.subr.bf16.mxu0 0
      %442 = vmatpush1.bf16.msra.mxu0 0
      %443 = vmatprep.subr.bf16.mxu0 0
      %444 = vmatpush1.bf16.msra.mxu0 0
      %445 = vmatprep.subr.bf16.mxu0 0
      %446 = vmatpush1.bf16.msra.mxu0 0
      %447 = vmatprep.subr.bf16.mxu0 0
      %448 = vmatpush1.bf16.msra.mxu0 0
      %449 = vmatprep.subr.bf16.mxu0 0
      %450 = vmatpush1.bf16.msra.mxu0 0
      %451 = vmatprep.subr.bf16.mxu0 0
      %452 = vmatpush1.bf16.msra.mxu0 0
      %453 = vmatprep.subr.bf16.mxu0 0
      %454 = vmatpush1.bf16.msra.mxu0 0
      %455 = vmatprep.subr.bf16.mxu0 0
      %456 = vmatpush1.bf16.msra.mxu0 0
      %457 = vmatprep.subr.bf16.mxu0 0
      %458 = vmatpush1.bf16.msra.mxu0 0
      %459 = vmatprep.subr.bf16.mxu0 0
      %460 = vmatpush1.bf16.msra.mxu0 0
      %461 = vmatprep.subr.bf16.mxu0 0
      %462 = vmatpush1.bf16.msra.mxu0 0
      %463 = vmatprep.subr.bf16.mxu0 0
      %464 = vmatpush1.bf16.msra.mxu0 0
      %465 = vmatprep.subr.bf16.mxu0 0
      %466 = vmatpush1.bf16.msra.mxu0 0
      %467 = vmatprep.mubr.bf16.mxu0 0
      %468 = vmatmul.mubr.bf16.gmra.mrb[0].mxu0 %v414
      %v469 = vpop.f32.mrb[0].mxu0
      %v470 = vadd.f32 0.0, %v469
      %v471 = vpop.f32.mrb[0].mxu0
      %v472 = vpop.f32.mrb[0].mxu0
      %v473 = vadd.f32 0.0, %v472
      %v474 = vpop.f32.mrb[0].mxu0
      %475 = vmatprep.mubr.bf16.mxu0 0
      %476 = vmatmul.mubr.bf16.gmra.mrb[0].mxu0 %v417
      %v477 = vpop.f32.mrb[0].mxu0
      %v478 = vadd.f32 0.0, %v477
      %v479 = vpop.f32.mrb[0].mxu0
      %v480 = vpop.f32.mrb[0].mxu0
      %v481 = vadd.f32 0.0, %v480
      %v482 = vpop.f32.mrb[0].mxu0
      %483 = vmatprep.mubr.bf16.mxu0 0
      %484 = vmatmul.mubr.bf16.gmra.mrb[0].mxu0 %v420
      %v485 = vpop.f32.mrb[0].mxu0
      %v486 = vadd.f32 0.0, %v485
      %v487 = vpop.f32.mrb[0].mxu0
      %v488 = vpop.f32.mrb[0].mxu0
      %v489 = vadd.f32 0.0, %v488
      %v490 = vpop.f32.mrb[0].mxu0
      %491 = vmatprep.mubr.bf16.mxu0 0
      %492 = vmatmul.mubr.bf16.gmra.mrb[0].mxu0 %v423
      %v493 = vpop.f32.mrb[0].mxu0
      %v494 = vadd.f32 0.0, %v493
      %v495 = vpop.f32.mrb[0].mxu0
      %v496 = vpop.f32.mrb[0].mxu0
      %v497 = vadd.f32 0.0, %v496
      %v498 = vpop.f32.mrb[0].mxu0
      %499 = vmatprep.mubr.bf16.mxu0 0
      %500 = vmatmul.mubr.bf16.gmra.mrb[0].mxu0 %v426
      %v501 = vpop.f32.mrb[0].mxu0
      %v502 = vadd.f32 0.0, %v501
      %v503 = vpop.f32.mrb[0].mxu0
      %v504 = vpop.f32.mrb[0].mxu0
      %v505 = vadd.f32 0.0, %v504
      %v506 = vpop.f32.mrb[0].mxu0
      %507 = vdwg.mxu0
      %v508 = vsel %vm412, %v361, 0
      %v510 = vsel %vm412, %v362, 0
      %v512 = vsel %vm412, %v363, 0
      %v514 = vsel %vm412, %v364, 0
      %v516 = vsel %vm412, %v365, 0
      %v519 = vand.u32 %v335, %v431
      %521 = vmatprep.subr.bf16.mxu0 0
      %522 = vmatpush1.bf16.msra.mxu0 %v519
      %523 = vmatprep.subr.bf16.mxu0 0
      %524 = vmatpush1.bf16.msra.mxu0 0
      %525 = vmatprep.subr.bf16.mxu0 0
      %526 = vmatpush1.bf16.msra.mxu0 0
      %527 = vmatprep.subr.bf16.mxu0 0
      %528 = vmatpush1.bf16.msra.mxu0 0
      %529 = vmatprep.subr.bf16.mxu0 0
      %530 = vmatpush1.bf16.msra.mxu0 0
      %531 = vmatprep.subr.bf16.mxu0 0
      %532 = vmatpush1.bf16.msra.mxu0 0
      %533 = vmatprep.subr.bf16.mxu0 0
      %534 = vmatpush1.bf16.msra.mxu0 0
      %535 = vmatprep.subr.bf16.mxu0 0
      %536 = vmatpush1.bf16.msra.mxu0 0
      %537 = vmatprep.subr.bf16.mxu0 0
      %538 = vmatpush1.bf16.msra.mxu0 0
      %539 = vmatprep.subr.bf16.mxu0 0
      %540 = vmatpush1.bf16.msra.mxu0 0
      %541 = vmatprep.subr.bf16.mxu0 0
      %542 = vmatpush1.bf16.msra.mxu0 0
      %543 = vmatprep.subr.bf16.mxu0 0
      %544 = vmatpush1.bf16.msra.mxu0 0
      %545 = vmatprep.subr.bf16.mxu0 0
      %546 = vmatpush1.bf16.msra.mxu0 0
      %547 = vmatprep.subr.bf16.mxu0 0
      %548 = vmatpush1.bf16.msra.mxu0 0
      %549 = vmatprep.subr.bf16.mxu0 0
      %550 = vmatpush1.bf16.msra.mxu0 0
      %551 = vmatprep.subr.bf16.mxu0 0
      %552 = vmatpush1.bf16.msra.mxu0 0
      %553 = vmatprep.mubr.bf16.mxu0 0
      %554 = vmatmul.mubr.bf16.gmra.mrb[0].mxu0 %v508
      %v555 = vpop.f32.mrb[0].mxu0
      %v556 = vadd.f32 %v470, %v555
      %v557 = vpop.f32.mrb[0].mxu0
      %v558 = vpop.f32.mrb[0].mxu0
      %v559 = vadd.f32 %v473, %v558
      %v560 = vpop.f32.mrb[0].mxu0
      %561 = vmatprep.mubr.bf16.mxu0 0
      %562 = vmatmul.mubr.bf16.gmra.mrb[0].mxu0 %v510
      %v563 = vpop.f32.mrb[0].mxu0
      %v564 = vadd.f32 %v478, %v563
      %v565 = vpop.f32.mrb[0].mxu0
      %v566 = vpop.f32.mrb[0].mxu0
      %v567 = vadd.f32 %v481, %v566
      %v568 = vpop.f32.mrb[0].mxu0
      %569 = vmatprep.mubr.bf16.mxu0 0
      %570 = vmatmul.mubr.bf16.gmra.mrb[0].mxu0 %v512
      %v571 = vpop.f32.mrb[0].mxu0
      %v572 = vadd.f32 %v486, %v571
      %v573 = vpop.f32.mrb[0].mxu0
      %v574 = vpop.f32.mrb[0].mxu0
      %v575 = vadd.f32 %v489, %v574
      %v576 = vpop.f32.mrb[0].mxu0
      %577 = vmatprep.mubr.bf16.mxu0 0
      %578 = vmatmul.mubr.bf16.gmra.mrb[0].mxu0 %v514
      %v579 = vpop.f32.mrb[0].mxu0
      %v580 = vadd.f32 %v494, %v579
      %v581 = vpop.f32.mrb[0].mxu0
      %v582 = vpop.f32.mrb[0].mxu0
      %v583 = vadd.f32 %v497, %v582
      %v584 = vpop.f32.mrb[0].mxu0
      %585 = vmatprep.mubr.bf16.mxu0 0
      %586 = vmatmul.mubr.bf16.gmra.mrb[0].mxu0 %v516
      %v587 = vpop.f32.mrb[0].mxu0
      %v588 = vadd.f32 %v502, %v587
      %v589 = vpop.f32.mrb[0].mxu0
      %v590 = vpop.f32.mrb[0].mxu0
      %v591 = vadd.f32 %v505, %v590
      %v592 = vpop.f32.mrb[0].mxu0
      %593 = vdwg.mxu0
      %s594 = smul.u32 %s21, 80
      %v595 = vlaneseq
      %v596 = vshrl.u32 %v595, 7
      %v597 = vadd.s32 %v596, 8
      %v598 = vadd.s32 %v596, 16
      %v599 = vadd.s32 %v596, 24
      %v600 = vadd.s32 %v596, 32
      %v601 = vadd.s32 %v596, 40
      %v602 = vadd.s32 %v596, 48
      %v603 = vadd.s32 %v596, 56
      %v604 = vadd.s32 %v596, 64
      %v605 = vadd.s32 %v596, 72
      %v606 = vstv %s594
      %v607 = vadd.s32 %v606, %v596
      %v608 = vadd.s32 %v606, %v597
      %v609 = vadd.s32 %v606, %v598
      %v610 = vadd.s32 %v606, %v599
      %v611 = vadd.s32 %v606, %v600
      %v612 = vadd.s32 %v606, %v601
      %v613 = vadd.s32 %v606, %v602
      %v614 = vadd.s32 %v606, %v603
      %v615 = vadd.s32 %v606, %v604
      %v616 = vadd.s32 %v606, %v605
      %vm617 = vcmp.lt.s32.totalorder %v607, 24
      %vm618 = vcmp.lt.s32.totalorder %v608, 24
      %vm619 = vcmp.lt.s32.totalorder %v609, 24
      %vm620 = vcmp.lt.s32.totalorder %v610, 24
      %vm621 = vcmp.lt.s32.totalorder %v611, 24
      %vm622 = vcmp.lt.s32.totalorder %v612, 24
      %vm623 = vcmp.lt.s32.totalorder %v613, 24
      %vm624 = vcmp.lt.s32.totalorder %v614, 24
      %vm625 = vcmp.lt.s32.totalorder %v615, 24
      %vm626 = vcmp.lt.s32.totalorder %v616, 24
      %v627 = vsel %vm617, 1, 0
      %v628 = vsel %vm618, 1, 0
      %v629 = vsel %vm619, 1, 0
      %v630 = vsel %vm620, 1, 0
      %v631 = vsel %vm621, 1, 0
      %v632 = vsel %vm622, 1, 0
      %v633 = vsel %vm623, 1, 0
      %v634 = vsel %vm624, 1, 0
      %v635 = vsel %vm625, 1, 0
      %v636 = vsel %vm626, 1, 0
      %vm637 = vcmp.eq.s32.totalorder %v627, 1
      %vm638 = vcmp.eq.s32.totalorder %v628, 1
      %vm639 = vcmp.eq.s32.totalorder %v629, 1
      %vm640 = vcmp.eq.s32.totalorder %v630, 1
      %vm641 = vcmp.eq.s32.totalorder %v631, 1
      %vm642 = vcmp.eq.s32.totalorder %v632, 1
      %vm643 = vcmp.eq.s32.totalorder %v633, 1
      %vm644 = vcmp.eq.s32.totalorder %v634, 1
      %vm645 = vcmp.eq.s32.totalorder %v635, 1
      %vm646 = vcmp.eq.s32.totalorder %v636, 1
      %v647 = vsel %vm637, %v556, 0.0
      %v648 = vsel %vm638, %v559, 0.0
      %v649 = vsel %vm639, %v564, 0.0
      %v650 = vsel %vm640, %v567, 0.0
      %v651 = vsel %vm641, %v572, 0.0
      %v652 = vsel %vm642, %v575, 0.0
      %v653 = vsel %vm643, %v580, 0.0
      %v654 = vsel %vm644, %v583, 0.0
      %v655 = vsel %vm645, %v588, 0.0
      %v656 = vsel %vm646, %v591, 0.0
      %v657 = vadd.f32 %v647, %v648
      %v658 = vadd.f32 %v657, %v649
      %v659 = vadd.f32 %v658, %v650
      %v660 = vadd.f32 %v659, %v651
      %v661 = vadd.f32 %v660, %v652
      %v662 = vadd.f32 %v661, %v653
      %v663 = vadd.f32 %v662, %v654
      %v664 = vadd.f32 %v663, %v655
      %v665 = vadd.f32 %v664, %v656
      %v666 = vrot.slane %v665, 4
      %v667 = vadd.f32 %v665, %v666
      %v668 = vrot.slane %v667, 2
      %v669 = vadd.f32 %v667, %v668
      %v670 = vrot.slane %v669, 1
      %v671 = vadd.f32 %v669, %v670
      %v672 = vmul.f32 %v647, %v647
      %v673 = vmul.f32 %v648, %v648
      %v674 = vmul.f32 %v649, %v649
      %v675 = vmul.f32 %v650, %v650
      %v676 = vmul.f32 %v651, %v651
      %v677 = vmul.f32 %v652, %v652
      %v678 = vmul.f32 %v653, %v653
      %v679 = vmul.f32 %v654, %v654
      %v680 = vmul.f32 %v655, %v655
      %v681 = vmul.f32 %v656, %v656
      %v682 = vadd.f32 %v672, %v673
      %v683 = vadd.f32 %v682, %v674
      %v684 = vadd.f32 %v683, %v675
      %v685 = vadd.f32 %v684, %v676
      %v686 = vadd.f32 %v685, %v677
      %v687 = vadd.f32 %v686, %v678
      %v688 = vadd.f32 %v687, %v679
      %v689 = vadd.f32 %v688, %v680
      %v690 = vadd.f32 %v689, %v681
      %v691 = vrot.slane %v690, 4
      %v692 = vadd.f32 %v690, %v691
      %v693 = vrot.slane %v692, 2
      %v694 = vadd.f32 %v692, %v693
      %v695 = vrot.slane %v694, 1
      %v696 = vadd.f32 %v694, %v695
      %vm697 = vcmp.eq.s32.totalorder %v596, 0
      %v698 = vsel %vm697, %v671, 0.0
      %699 = vst [vmem:[%s288] sm:$0xff] %v698
      %v700 = vsel %vm697, %v696, 0.0
      %701 = vst [vmem:[%s295] sm:$0xff] %v700
      %p702 = scmp.lt.s32.totalorder %s20, 1
      %s703 = scalar_select %p702, %s20, 1
      %p704 = scmp.lt.s32.totalorder %s21, 0
      %s705 = scalar_select %p704, %s21, 0
      %s706 = sadd.s32 %s705, %s703
      %s707 = smul.addr %s706, 8
      %s708 = scalar_lea.vmem %s3, %s707
      %p709 = scmp.lt.s32.totalorder %s20, 1
      %s710 = scalar_select %p709, %s20, 1
      %p711 = scmp.lt.s32.totalorder %s21, 0
      %s712 = scalar_select %p711, %s21, 0
      %s713 = sadd.s32 %s712, %s710
      %s714 = smul.addr %s713, 8
      %s715 = scalar_lea.vmem %s4, %s714
      // Predicated region
      $region33: #{_lambda_.4} parent=31 // pred_check
        %p716 = pneg %p125
      $region34: #{_lambda_.4} parent=31 // pred_check_branch
        %718 = sbr.rel (%p716) target = $region36
      $region35: #{_lambda_.4} parent=31 // pred_region
        _
      $region36: #{_lambda_.4} parent=31 // pred_fallthru
        _
      // Predicated region
      $region37: #{_lambda_.4} parent=31 // pred_check
        %p719 = pneg %p153
      $region38: #{_lambda_.4} parent=31 // pred_check_branch
        %721 = sbr.rel (%p719) target = $region40
      $region39: #{_lambda_.4} parent=31 // pred_region
        _
      $region40: #{_lambda_.4} parent=31 // pred_fallthru
        _
    $region32: #{_lambda_.4} parent=5 // pred_fallthru
      _
    %p722 = scmp.le.s32.totalorder 2, %s11
    // Predicated region
    $region41: #{_lambda_.4} parent=5 // pred_check
      %p723 = pneg %p722
    $region42: #{_lambda_.4} parent=5 // pred_check_branch
      %725 = sbr.rel (%p723) target = $region44
    $region43: #{_lambda_.4} parent=5 // pred_region
      %s726 = ssub.s32 %s11, 2
      // Predicated region
      $region45: #{_lambda_.4} parent=43 // pred_check
        %p727 = pneg %p131
      $region46: #{_lambda_.4} parent=43 // pred_check_branch
        %729 = sbr.rel (%p727) target = $region48
      $region47: #{_lambda_.4} parent=43 // pred_region
        %p730 = scmp.lt.s32.totalorder %s22, 1
        %s731 = scalar_select %p730, %s22, 1
        %p732 = scmp.lt.s32.totalorder %s23, 0
        %s733 = scalar_select %p732, %s23, 0
        %s734 = sadd.s32 %s733, %s731
        %s735 = smul.addr %s734, 8
        %s736 = scalar_lea.vmem %s3, %s735
      $region48: #{_lambda_.4} parent=43 // pred_fallthru
        _
      // Predicated region
      $region49: #{_lambda_.4} parent=43 // pred_check
        %p737 = pneg %p159
      $region50: #{_lambda_.4} parent=43 // pred_check_branch
        %739 = sbr.rel (%p737) target = $region52
      $region51: #{_lambda_.4} parent=43 // pred_region
        %p740 = scmp.lt.s32.totalorder %s22, 1
        %s741 = scalar_select %p740, %s22, 1
        %p742 = scmp.lt.s32.totalorder %s23, 0
        %s743 = scalar_select %p742, %s23, 0
        %s744 = sadd.s32 %s743, %s741
        %s745 = smul.addr %s744, 8
        %s746 = scalar_lea.vmem %s4, %s745
      $region52: #{_lambda_.4} parent=43 // pred_fallthru
        _
    $region44: #{_lambda_.4} parent=5 // pred_fallthru
      _
  $region6: #{_lambda_.4} parent=0 // loop_footer
    %s15 = sadd.s32 1, %s11
  $region7: #{_lambda_.4} parent=0 // loop_footer_branch
    %10 = sbr.rel target = $region3
  $region8: #{_lambda_.4} parent=0 // loop_exit
    _

// kernel: _lambda_.5
$region0: #{_lambda_.5}
  #allocation0 [shape = 'u32[]', space=smem, size = 0x4, offset = 0x4, fixed_abs, tag = 'smem constant byte address 0x4 - core index']
  #allocation1 [shape = 'u32[144,128]{1,0:T(1,128)}', space=vmem, size = 0x12000, scoped, tag = 'internal scratch']
  #allocation2 [shape = 'bf16[81,5]{1,0:T(8,128)(2,1)}', space=vmem, size = 0x5800, scoped, tag = 'scratch operand']
  %s0 = inlined_call_operand.vmem [shape: bf16[2,81,5], index: 0, kind: input, shape index: {}]
  %s1 = inlined_call_operand.vmem [shape: bf16[2,1,1,5], index: 1, kind: input, shape index: {}]
  %s2 = inlined_call_operand.vmem [shape: bf16[2,5,128], index: 2, kind: input, shape index: {}]
  %s3 = inlined_call_operand.vmem [shape: f32[2,1,128], index: 3, kind: input, shape index: {}]
  %s4 = inlined_call_operand.vmem [shape: f32[2,1,128], index: 4, kind: input, shape index: {}]
  %s5 = inlined_call_operand.vmem [shape: bf16[2,80,128], index: 5, kind: output, shape index: {}]
  %s6 = sld [smem:[#allocation0]]
  $region53: #{_lambda_.5} parent=0
    _
  %s8 = ssub.s32 1, %s6
  %s9 = scalar_select 0, %s8, %s6
  loop: start=0, step=1, limit=4
  $region2: #{_lambda_.5} parent=0 // loop_pre_header
    _
  $region3: #{_lambda_.5} parent=0 // loop_header
    %s11 = sphi 0, %s15
    %p12 = scmp.ge.s32.totalorder %s11, 4
    %s18 = sphi 0, %s30
    %s19 = sphi 0, %s26
    %s20 = sphi 0, %s18
    %s21 = sphi 0, %s19
    %s22 = sphi 0, %s20
    %s23 = sphi 0, %s21
    %s35 = sphi 0, %s37
    %s38 = sphi 0, %s35
    %s39 = sphi 0, %s38
    %s55 = sphi 0, %s39
    %s63 = sphi 0, %s65
    %s66 = sphi 0, %s63
    %s67 = sphi 0, %s66
    %s83 = sphi 0, %s67
    %s87 = sphi 0, %s87
    %s89 = sphi 0, %s87
    %s90 = sphi 0, %s89
    %s104 = sphi 0, %s90
    %s110 = sphi 0, %s112
    %s113 = sphi 0, %s110
    %s114 = sphi 0, %s113
    %s130 = sphi 0, %s114
    %s136 = sphi 0, %s138
    %s139 = sphi 0, %s136
    %s140 = sphi 0, %s139
    %s156 = sphi 0, %s140
    %s164 = sphi 0, %s166
    %s167 = sphi 0, %s164
    %s168 = sphi 0, %s167
    %s184 = sphi 0, %s168
  $region4: #{_lambda_.5} parent=0 // loop_header_branch
    %14 = sbr.rel (%p12) target = $region8
  $region5: #{_lambda_.5} parent=0 // loop_body
    %s16 = ssub.s32 %s11, 1
    %s17 = ssub.s32 %s11, 2
    %s24 = sadd.s32 1, %s19
    %p25 = scmp.ge.s32.totalorder %s24, 1
    %s26 = scalar_select %p25, 0, %s24
    %s27 = sadd.s32 1, %s18
    %s28 = scalar_select %p25, %s27, %s18
    %p29 = scmp.ge.s32.totalorder %s28, 2
    %s30 = scalar_select %p29, 0, %s28
    %s31 = ssub.s32 %s18, %s30
    %s32 = ssub.s32 %s19, %s26
    %s33 = sor.u32 %s31, %s32
    %p34 = scmp.eq.s32.totalorder %s33, 0
    %s36 = sadd.s32 %s35, 1
    %s37 = scalar_select %p34, %s35, %s36
    %p40 = pneg %p34
    %p41 = scmp.eq.s32.totalorder %s11, 1
    %p42 = por %p40, %p41
    %p43 = scmp.ne.s32.totalorder %s35, %s38
    %p44 = scmp.eq.s32.totalorder %s11, 0
    %p45 = por %p43, %p44
    %p46 = scmp.ne.s32.totalorder %s35, %s38
    %p47 = scmp.eq.s32.totalorder %s16, 1
    %p48 = por %p46, %p47
    %p49 = scmp.ne.s32.totalorder %s38, %s39
    %p50 = scmp.eq.s32.totalorder %s16, 0
    %p51 = por %p49, %p50
    %p52 = scmp.ne.s32.totalorder %s38, %s39
    %p53 = scmp.eq.s32.totalorder %s17, 1
    %p54 = por %p52, %p53
    %p56 = scmp.ne.s32.totalorder %s39, %s55
    %p57 = scmp.eq.s32.totalorder %s17, 0
    %p58 = por %p56, %p57
    %s59 = ssub.s32 %s18, %s30
    %s60 = ssub.s32 %s19, %s26
    %s61 = sor.u32 %s59, %s60
    %p62 = scmp.eq.s32.totalorder %s61, 0
    %s64 = sadd.s32 %s63, 1
    %s65 = scalar_select %p62, %s63, %s64
    %p68 = pneg %p62
    %p69 = scmp.eq.s32.totalorder %s11, 1
    %p70 = por %p68, %p69
    %p71 = scmp.ne.s32.totalorder %s63, %s66
    %p72 = scmp.eq.s32.totalorder %s11, 0
    %p73 = por %p71, %p72
    %p74 = scmp.ne.s32.totalorder %s63, %s66
    %p75 = scmp.eq.s32.totalorder %s16, 1
    %p76 = por %p74, %p75
    %p77 = scmp.ne.s32.totalorder %s66, %s67
    %p78 = scmp.eq.s32.totalorder %s16, 0
    %p79 = por %p77, %p78
    %p80 = scmp.ne.s32.totalorder %s66, %s67
    %p81 = scmp.eq.s32.totalorder %s17, 1
    %p82 = por %p80, %p81
    %p84 = scmp.ne.s32.totalorder %s67, %s83
    %p85 = scmp.eq.s32.totalorder %s17, 0
    %p86 = por %p84, %p85
    %s88 = sadd.s32 %s87, 1
    %p91 = scmp.eq.s32.totalorder %s11, 1
    %p92 = scmp.ne.s32.totalorder %s87, %s89
    %p93 = scmp.eq.s32.totalorder %s11, 0
    %p94 = por %p92, %p93
    %p95 = scmp.ne.s32.totalorder %s87, %s89
    %p96 = scmp.eq.s32.totalorder %s16, 1
    %p97 = por %p95, %p96
    %p98 = scmp.ne.s32.totalorder %s89, %s90
    %p99 = scmp.eq.s32.totalorder %s16, 0
    %p100 = por %p98, %p99
    %p101 = scmp.ne.s32.totalorder %s89, %s90
    %p102 = scmp.eq.s32.totalorder %s17, 1
    %p103 = por %p101, %p102
    %p105 = scmp.ne.s32.totalorder %s90, %s104
    %p106 = scmp.eq.s32.totalorder %s17, 0
    %p107 = por %p105, %p106
    %s108 = ssub.s32 %s18, %s30
    %p109 = scmp.eq.s32.totalorder %s108, 0
    %s111 = sadd.s32 %s110, 1
    %s112 = scalar_select %p109, %s110, %s111
    %p115 = pneg %p109
    %p116 = scmp.eq.s32.totalorder %s11, 1
    %p117 = por %p115, %p116
    %p118 = scmp.ne.s32.totalorder %s110, %s113
    %p119 = scmp.eq.s32.totalorder %s11, 0
    %p120 = por %p118, %p119
    %p121 = scmp.ne.s32.totalorder %s110, %s113
    %p122 = scmp.eq.s32.totalorder %s16, 1
    %p123 = por %p121, %p122
    %p124 = scmp.ne.s32.totalorder %s113, %s114
    %p125 = scmp.eq.s32.totalorder %s16, 0
    %p126 = por %p124, %p125
    %p127 = scmp.ne.s32.totalorder %s113, %s114
    %p128 = scmp.eq.s32.totalorder %s17, 1
    %p129 = por %p127, %p128
    %p131 = scmp.ne.s32.totalorder %s114, %s130
    %p132 = scmp.eq.s32.totalorder %s17, 0
    %p133 = por %p131, %p132
    %s134 = ssub.s32 %s18, %s30
    %p135 = scmp.eq.s32.totalorder %s134, 0
    %s137 = sadd.s32 %s136, 1
    %s138 = scalar_select %p135, %s136, %s137
    %p141 = pneg %p135
    %p142 = scmp.eq.s32.totalorder %s11, 1
    %p143 = por %p141, %p142
    %p144 = scmp.ne.s32.totalorder %s136, %s139
    %p145 = scmp.eq.s32.totalorder %s11, 0
    %p146 = por %p144, %p145
    %p147 = scmp.ne.s32.totalorder %s136, %s139
    %p148 = scmp.eq.s32.totalorder %s16, 1
    %p149 = por %p147, %p148
    %p150 = scmp.ne.s32.totalorder %s139, %s140
    %p151 = scmp.eq.s32.totalorder %s16, 0
    %p152 = por %p150, %p151
    %p153 = scmp.ne.s32.totalorder %s139, %s140
    %p154 = scmp.eq.s32.totalorder %s17, 1
    %p155 = por %p153, %p154
    %p157 = scmp.ne.s32.totalorder %s140, %s156
    %p158 = scmp.eq.s32.totalorder %s17, 0
    %p159 = por %p157, %p158
    %s160 = ssub.s32 %s18, %s30
    %s161 = ssub.s32 %s19, %s26
    %s162 = sor.u32 %s160, %s161
    %p163 = scmp.eq.s32.totalorder %s162, 0
    %s165 = sadd.s32 %s164, 1
    %s166 = scalar_select %p163, %s164, %s165
    %p169 = pneg %p163
    %p170 = scmp.eq.s32.totalorder %s11, 1
    %p171 = por %p169, %p170
    %p172 = scmp.ne.s32.totalorder %s164, %s167
    %p173 = scmp.eq.s32.totalorder %s11, 0
    %p174 = por %p172, %p173
    %p175 = scmp.ne.s32.totalorder %s164, %s167
    %p176 = scmp.eq.s32.totalorder %s16, 1
    %p177 = por %p175, %p176
    %p178 = scmp.ne.s32.totalorder %s167, %s168
    %p179 = scmp.eq.s32.totalorder %s16, 0
    %p180 = por %p178, %p179
    %p181 = scmp.ne.s32.totalorder %s167, %s168
    %p182 = scmp.eq.s32.totalorder %s17, 1
    %p183 = por %p181, %p182
    %p185 = scmp.ne.s32.totalorder %s168, %s184
    %p186 = scmp.eq.s32.totalorder %s17, 0
    %p187 = por %p185, %p186
    %p188 = scmp.le.s32.totalorder 1, %s11
    %p189 = scmp.lt.s32.totalorder %s11, 3
    %p190 = pnand %p188, %p189
    %p191 = pneg %p190
    // Predicated region
    $region9: #{_lambda_.5} parent=5 // pred_check
      _
    $region10: #{_lambda_.5} parent=5 // pred_check_branch
      %193 = sbr.rel (%p190) target = $region12
    $region11: #{_lambda_.5} parent=5 // pred_region
      %s194 = ssub.s32 %s11, 1
      // Predicated region
      $region13: #{_lambda_.5} parent=11 // pred_check
        %p195 = pneg %p100
      $region14: #{_lambda_.5} parent=11 // pred_check_branch
        %197 = sbr.rel (%p195) target = $region16
      $region15: #{_lambda_.5} parent=11 // pred_region
        _
      $region16: #{_lambda_.5} parent=11 // pred_fallthru
        _
    $region12: #{_lambda_.5} parent=5 // pred_fallthru
      _
    %p198 = scmp.lt.s32.totalorder %s11, 2
    // Predicated region
    $region17: #{_lambda_.5} parent=5 // pred_check
      %p199 = pneg %p198
    $region18: #{_lambda_.5} parent=5 // pred_check_branch
      %201 = sbr.rel (%p199) target = $region20
    $region19: #{_lambda_.5} parent=5 // pred_region
      // Predicated region
      $region21: #{_lambda_.5} parent=19 // pred_check
        %p202 = pneg %p45
      $region22: #{_lambda_.5} parent=19 // pred_check_branch
        %204 = sbr.rel (%p202) target = $region24
      $region23: #{_lambda_.5} parent=19 // pred_region
        %s205 = smul.u32 10, %s19
        %s206 = ssub.s32 11, %s205
        %p207 = scmp.lt.s32.totalorder %s206, 10
        %s208 = scalar_select %p207, %s206, 10
        %s209 = smul.u32 64, %s208
        %p210 = scmp.lt.s32.totalorder %s18, 1
        %s211 = scalar_select %p210, %s18, 1
        %p212 = scmp.lt.s32.totalorder %s205, 10
        %s213 = scalar_select %p212, %s205, 10
        %s214 = smul.addr %s211, 11
        %s215 = sadd.s32 %s213, %s214
        %s216 = smul.addr %s215, 4
        %s217 = scalar_lea.vmem %s0, %s216
        %s218 = smul.u32 10, %s19
        %s219 = ssub.s32 11, %s218
        %p220 = scmp.lt.s32.totalorder %s219, 10
        %s221 = scalar_select %p220, %s219, 10
        %s222 = smul.u32 64, %s221
      $region24: #{_lambda_.5} parent=19 // pred_fallthru
        _
      // Predicated region
      $region25: #{_lambda_.5} parent=19 // pred_check
        %p223 = pneg %p73
      $region26: #{_lambda_.5} parent=19 // pred_check_branch
        %225 = sbr.rel (%p223) target = $region28
      $region27: #{_lambda_.5} parent=19 // pred_region
        %p226 = scmp.lt.s32.totalorder %s18, 1
        %s227 = scalar_select %p226, %s18, 1
        %p228 = scmp.lt.s32.totalorder %s19, 0
        %s229 = scalar_select %p228, %s19, 0
        %s230 = sadd.s32 %s229, %s227
        %s231 = scalar_lea.vmem %s1, %s230
      $region28: #{_lambda_.5} parent=19 // pred_fallthru
        _
      // Predicated region
      $region29: #{_lambda_.5} parent=19 // pred_check
        %p232 = pneg %p120
      $region30: #{_lambda_.5} parent=19 // pred_check_branch
        %234 = sbr.rel (%p232) target = $region32
      $region31: #{_lambda_.5} parent=19 // pred_region
        %p235 = scmp.lt.s32.totalorder %s18, 1
        %s236 = scalar_select %p235, %s18, 1
        %s237 = scalar_lea.vmem %s3, %s236
      $region32: #{_lambda_.5} parent=19 // pred_fallthru
        _
      // Predicated region
      $region33: #{_lambda_.5} parent=19 // pred_check
        %p238 = pneg %p146
      $region34: #{_lambda_.5} parent=19 // pred_check_branch
        %240 = sbr.rel (%p238) target = $region36
      $region35: #{_lambda_.5} parent=19 // pred_region
        %p241 = scmp.lt.s32.totalorder %s18, 1
        %s242 = scalar_select %p241, %s18, 1
        %s243 = scalar_lea.vmem %s4, %s242
      $region36: #{_lambda_.5} parent=19 // pred_fallthru
        _
    $region20: #{_lambda_.5} parent=5 // pred_fallthru
      _
    %p244 = scmp.le.s32.totalorder 1, %s11
    %p245 = scmp.lt.s32.totalorder %s11, 3
    %p246 = pnand %p244, %p245
    %p247 = pneg %p246
    // Predicated region
    $region37: #{_lambda_.5} parent=5 // pred_check
      _
    $region38: #{_lambda_.5} parent=5 // pred_check_branch
      %249 = sbr.rel (%p246) target = $region40
    $region39: #{_lambda_.5} parent=5 // pred_region
      %s250 = ssub.s32 %s11, 1
      %s251 = smul.u32 10, %s21
      %s252 = ssub.s32 11, %s251
      %p253 = scmp.lt.s32.totalorder %s252, 10
      %s254 = scalar_select %p253, %s252, 10
      %s255 = smul.u32 64, %s254
      %p256 = scmp.lt.s32.totalorder %s20, 1
      %s257 = scalar_select %p256, %s20, 1
      %p258 = scmp.lt.s32.totalorder %s251, 10
      %s259 = scalar_select %p258, %s251, 10
      %s260 = smul.addr %s257, 11
      %s261 = sadd.s32 %s259, %s260
      %s262 = smul.addr %s261, 4
      %s263 = scalar_lea.vmem %s0, %s262
      %p264 = pneg %p51
      %p265 = pneg %p48
      %p266 = scmp.lt.s32.totalorder %s20, 1
      %s267 = scalar_select %p266, %s20, 1
      %p268 = scmp.lt.s32.totalorder %s21, 0
      %s269 = scalar_select %p268, %s21, 0
      %s270 = sadd.s32 %s269, %s267
      %s271 = scalar_lea.vmem %s1, %s270
      %p272 = pneg %p79
      %p273 = pneg %p76
      %p274 = pneg %p100
      %p275 = pneg %p97
      %p276 = scmp.lt.s32.totalorder %s20, 1
      %s277 = scalar_select %p276, %s20, 1
      %s278 = scalar_lea.vmem %s3, %s277
      %p279 = pneg %p126
      %p280 = pneg %p123
      %p281 = scmp.lt.s32.totalorder %s20, 1
      %s282 = scalar_select %p281, %s20, 1
      %s283 = scalar_lea.vmem %s4, %s282
      %p284 = pneg %p152
      %p285 = pneg %p149
      %p286 = pneg %p180
      %p287 = pneg %p177
      %s288 = smul.u32 10, %s21
      %p289 = scmp.lt.s32.totalorder %s20, 1
      %s290 = scalar_select %p289, %s20, 1
      %p291 = scmp.lt.s32.totalorder %s288, 9
      %s292 = scalar_select %p291, %s288, 9
      %s293 = smul.addr %s290, 10
      %s294 = sadd.s32 %s292, %s293
      %s295 = smul.addr %s294, 4
      %s296 = scalar_lea.vmem %s5, %s295
      %s297 = smul.u32 10, %s21
      %s298 = ssub.s32 11, %s297
      %p299 = scmp.lt.s32.totalorder %s298, 10
      %s300 = scalar_select %p299, %s298, 10
      %s301 = smul.u32 64, %s300
      %p302 = scmp.lt.s32.totalorder %s20, 1
      %s303 = scalar_select %p302, %s20, 1
      %p304 = scmp.lt.s32.totalorder %s297, 10
      %s305 = scalar_select %p304, %s297, 10
      %s306 = smul.addr %s303, 11
      %s307 = sadd.s32 %s305, %s306
      %s308 = smul.addr %s307, 4
      %s309 = scalar_lea.vmem %s0, %s308
      %s310 = smul.u32 10, %s21
      %s311 = ssub.s32 11, %s310
      %p312 = scmp.lt.s32.totalorder %s311, 10
      %s313 = scalar_select %p312, %s311, 10
      %s314 = smul.u32 64, %s313
      %p315 = scmp.lt.s32.totalorder %s20, 1
      %s316 = scalar_select %p315, %s20, 1
      %p317 = scmp.lt.s32.totalorder %s21, 0
      %s318 = scalar_select %p317, %s21, 0
      %s319 = sadd.s32 %s318, %s316
      %s320 = scalar_lea.vmem %s1, %s319
      %p321 = scmp.lt.s32.totalorder %s20, 1
      %s322 = scalar_select %p321, %s20, 1
      %s323 = scalar_lea.vmem %s3, %s322
      %p324 = scmp.lt.s32.totalorder %s20, 1
      %s325 = scalar_select %p324, %s20, 1
      %s326 = scalar_lea.vmem %s4, %s325
      %s327 = smul.u32 10, %s21
      %p328 = scmp.lt.s32.totalorder %s20, 1
      %s329 = scalar_select %p328, %s20, 1
      %p330 = scmp.lt.s32.totalorder %s327, 9
      %s331 = scalar_select %p330, %s327, 9
      %s332 = smul.addr %s329, 10
      %s333 = sadd.s32 %s331, %s332
      %s334 = smul.addr %s333, 4
      %s335 = scalar_lea.vmem %s5, %s334
      %s336 = smul.u32 10, %s21
      %v338 = vld [vmem:[%s309] sm:$0xf]
      %v339 = vld [vmem:[%s309 + $0x4] sm:$0xf]
      %v340 = vld [vmem:[%s309 + $0x8] sm:$0xf]
      %v341 = vld [vmem:[%s309 + $0xc] sm:$0xf]
      %v342 = vld [vmem:[%s309 + $0x10] sm:$0xf]
      %v343 = vld [vmem:[%s309 + $0x14] sm:$0xf]
      %v344 = vld [vmem:[%s309 + $0x18] sm:$0xf]
      %v345 = vld [vmem:[%s309 + $0x1c] sm:$0xf]
      %v346 = vld [vmem:[%s309 + $0x20] sm:$0xf]
      %v347 = vld [vmem:[%s309 + $0x24] sm:$0xf]
      %vm348 = vcmask 35840
      %349 = vst.msk [vmem:[#allocation2] sm:$0xf] %vm348, %v338
      %350 = vst.msk [vmem:[#allocation2 + $0x4] sm:$0xf] %vm348, %v339
      %351 = vst.msk [vmem:[#allocation2 + $0x8] sm:$0xf] %vm348, %v340
      %352 = vst.msk [vmem:[#allocation2 + $0xc] sm:$0xf] %vm348, %v341
      %353 = vst.msk [vmem:[#allocation2 + $0x10] sm:$0xf] %vm348, %v342
      %354 = vst.msk [vmem:[#allocation2 + $0x14] sm:$0xf] %vm348, %v343
      %355 = vst.msk [vmem:[#allocation2 + $0x18] sm:$0xf] %vm348, %v344
      %356 = vst.msk [vmem:[#allocation2 + $0x1c] sm:$0xf] %vm348, %v345
      %357 = vst.msk [vmem:[#allocation2 + $0x20] sm:$0xf] %vm348, %v346
      %358 = vst.msk [vmem:[#allocation2 + $0x24] sm:$0xf] %vm348, %v347
      %v359 = vld [vmem:[%s320] sm:$0x1]
      %vm360 = vcmask 32768
      %vm361 = vsmask.f32 256
      %vm362 = vmand %vm360, %vm361
      %v363 = vld [vmem:[#allocation2 + $0x28] sm:$0x1]
      %v364 = vsel %vm362, %v359, %v363
      %365 = vst [vmem:[#allocation2 + $0x28] sm:$0x1] %v364
      %v366 = vld [vmem:[#allocation2] sm:$0xf]
      %v367 = vld [vmem:[#allocation2 + $0x4] sm:$0xf]
      %v368 = vld [vmem:[#allocation2 + $0x8] sm:$0xf]
      %v369 = vld [vmem:[#allocation2 + $0xc] sm:$0xf]
      %v370 = vld [vmem:[#allocation2 + $0x10] sm:$0xf]
      %v371 = vld [vmem:[#allocation2 + $0x14] sm:$0xf]
      %v372 = vld [vmem:[#allocation2 + $0x18] sm:$0xf]
      %v373 = vld [vmem:[#allocation2 + $0x1c] sm:$0xf]
      %v374 = vld [vmem:[#allocation2 + $0x20] sm:$0xf]
      %v375 = vld [vmem:[#allocation2 + $0x24] sm:$0xf]
      %v376 = vld [vmem:[%s2] sm:$0x7]
      %v377 = vld [vmem:[#allocation2 + $0x28] sm:$0x1]
      %s378 = scalar_lea.vmem %s2, 4
      %v379 = vld [vmem:[%s378] sm:$0x7]
      %v391 = vunpack.c.l.b16 %v366
      %v392 = vunpack.c.l.b16 %v367
      %v393 = vunpack.c.l.b16 %v368
      %v394 = vunpack.c.l.b16 %v369
      %v395 = vunpack.c.l.b16 %v370
      %v396 = vunpack.c.l.b16 %v371
      %v397 = vunpack.c.l.b16 %v372
      %v398 = vunpack.c.l.b16 %v373
      %v399 = vunpack.c.l.b16 %v374
      %v400 = vunpack.c.l.b16 %v375
      %v401 = vunpack.c.l.b16 %v377
      %v402 = vpack.c.b16 %v392, %v391
      %v403 = vpack.c.b16 %v394, %v393
      %v404 = vpack.c.b16 %v396, %v395
      %v405 = vpack.c.b16 %v398, %v397
      %v406 = vpack.c.b16 %v400, %v399
      %v407 = vpack.c.b16 %v401, %v401
      %vm408 = vsmask.f32 7424
      %v410 = vshrl.u32 %v402, 16
      %v412 = vshll.u32 %v402, 16
      %v414 = vrot.slane %v412, 1
      %v415 = vor.u32 %v410, %v414
      %v417 = vshll.u32 %v403, 16
      %v419 = vrot.slane %v417, 1
      %v420 = vsel %vm408, %v415, %v419
      %v421 = vshrl.u32 %v403, 16
      %v423 = vor.u32 %v421, %v419
      %v425 = vshll.u32 %v404, 16
      %v427 = vrot.slane %v425, 1
      %v428 = vsel %vm408, %v423, %v427
      %v429 = vshrl.u32 %v404, 16
      %v431 = vor.u32 %v429, %v427
      %v433 = vshll.u32 %v405, 16
      %v435 = vrot.slane %v433, 1
      %v436 = vsel %vm408, %v431, %v435
      %v437 = vshrl.u32 %v405, 16
      %v439 = vor.u32 %v437, %v435
      %v441 = vshll.u32 %v406, 16
      %v443 = vrot.slane %v441, 1
      %v444 = vsel %vm408, %v439, %v443
      %v445 = vshrl.u32 %v406, 16
      %v447 = vor.u32 %v445, %v443
      %v449 = vshll.u32 %v407, 16
      %v451 = vrot.slane %v449, 1
      %v452 = vsel %vm408, %v447, %v451
      %vm453 = vcmask 39936
      %v455 = vsel %vm453, %v420, 0
      %v458 = vsel %vm453, %v428, 0
      %v461 = vsel %vm453, %v436, 0
      %v464 = vsel %vm453, %v444, 0
      %v467 = vsel %vm453, %v452, 0
      %vm469 = vcmask 1041408
      %vm470 = vcmask 1042432
      %v471 = vsel %vm469, 4294967295, 65535
      %v472 = vsel %vm470, %v471, 0
      %v474 = vand.u32 %v379, %v472
      %476 = vmatprep.subr.bf16.mxu0 0
      %477 = vmatpush1.bf16.msra.mxu0 %v474
      %478 = vmatprep.subr.bf16.mxu0 0
      %479 = vmatpush1.bf16.msra.mxu0 0
      %480 = vmatprep.subr.bf16.mxu0 0
      %481 = vmatpush1.bf16.msra.mxu0 0
      %482 = vmatprep.subr.bf16.mxu0 0
      %483 = vmatpush1.bf16.msra.mxu0 0
      %484 = vmatprep.subr.bf16.mxu0 0
      %485 = vmatpush1.bf16.msra.mxu0 0
      %486 = vmatprep.subr.bf16.mxu0 0
      %487 = vmatpush1.bf16.msra.mxu0 0
      %488 = vmatprep.subr.bf16.mxu0 0
      %489 = vmatpush1.bf16.msra.mxu0 0
      %490 = vmatprep.subr.bf16.mxu0 0
      %491 = vmatpush1.bf16.msra.mxu0 0
      %492 = vmatprep.subr.bf16.mxu0 0
      %493 = vmatpush1.bf16.msra.mxu0 0
      %494 = vmatprep.subr.bf16.mxu0 0
      %495 = vmatpush1.bf16.msra.mxu0 0
      %496 = vmatprep.subr.bf16.mxu0 0
      %497 = vmatpush1.bf16.msra.mxu0 0
      %498 = vmatprep.subr.bf16.mxu0 0
      %499 = vmatpush1.bf16.msra.mxu0 0
      %500 = vmatprep.subr.bf16.mxu0 0
      %501 = vmatpush1.bf16.msra.mxu0 0
      %502 = vmatprep.subr.bf16.mxu0 0
      %503 = vmatpush1.bf16.msra.mxu0 0
      %504 = vmatprep.subr.bf16.mxu0 0
      %505 = vmatpush1.bf16.msra.mxu0 0
      %506 = vmatprep.subr.bf16.mxu0 0
      %507 = vmatpush1.bf16.msra.mxu0 0
      %508 = vmatprep.mubr.bf16.mxu0 0
      %509 = vmatmul.mubr.bf16.gmra.mrb[0].mxu0 %v455
      %v510 = vpop.f32.mrb[0].mxu0
      %v511 = vadd.f32 0.0, %v510
      %v512 = vpop.f32.mrb[0].mxu0
      %v513 = vpop.f32.mrb[0].mxu0
      %v514 = vadd.f32 0.0, %v513
      %v515 = vpop.f32.mrb[0].mxu0
      %516 = vmatprep.mubr.bf16.mxu0 0
      %517 = vmatmul.mubr.bf16.gmra.mrb[0].mxu0 %v458
      %v518 = vpop.f32.mrb[0].mxu0
      %v519 = vadd.f32 0.0, %v518
      %v520 = vpop.f32.mrb[0].mxu0
      %v521 = vpop.f32.mrb[0].mxu0
      %v522 = vadd.f32 0.0, %v521
      %v523 = vpop.f32.mrb[0].mxu0
      %524 = vmatprep.mubr.bf16.mxu0 0
      %525 = vmatmul.mubr.bf16.gmra.mrb[0].mxu0 %v461
      %v526 = vpop.f32.mrb[0].mxu0
      %v527 = vadd.f32 0.0, %v526
      %v528 = vpop.f32.mrb[0].mxu0
      %v529 = vpop.f32.mrb[0].mxu0
      %v530 = vadd.f32 0.0, %v529
      %v531 = vpop.f32.mrb[0].mxu0
      %532 = vmatprep.mubr.bf16.mxu0 0
      %533 = vmatmul.mubr.bf16.gmra.mrb[0].mxu0 %v464
      %v534 = vpop.f32.mrb[0].mxu0
      %v535 = vadd.f32 0.0, %v534
      %v536 = vpop.f32.mrb[0].mxu0
      %v537 = vpop.f32.mrb[0].mxu0
      %v538 = vadd.f32 0.0, %v537
      %v539 = vpop.f32.mrb[0].mxu0
      %540 = vmatprep.mubr.bf16.mxu0 0
      %541 = vmatmul.mubr.bf16.gmra.mrb[0].mxu0 %v467
      %v542 = vpop.f32.mrb[0].mxu0
      %v543 = vadd.f32 0.0, %v542
      %v544 = vpop.f32.mrb[0].mxu0
      %v545 = vpop.f32.mrb[0].mxu0
      %v546 = vadd.f32 0.0, %v545
      %v547 = vpop.f32.mrb[0].mxu0
      %548 = vdwg.mxu0
      %v549 = vsel %vm453, %v402, 0
      %v551 = vsel %vm453, %v403, 0
      %v553 = vsel %vm453, %v404, 0
      %v555 = vsel %vm453, %v405, 0
      %v557 = vsel %vm453, %v406, 0
      %v560 = vand.u32 %v376, %v472
      %562 = vmatprep.subr.bf16.mxu0 0
      %563 = vmatpush1.bf16.msra.mxu0 %v560
      %564 = vmatprep.subr.bf16.mxu0 0
      %565 = vmatpush1.bf16.msra.mxu0 0
      %566 = vmatprep.subr.bf16.mxu0 0
      %567 = vmatpush1.bf16.msra.mxu0 0
      %568 = vmatprep.subr.bf16.mxu0 0
      %569 = vmatpush1.bf16.msra.mxu0 0
      %570 = vmatprep.subr.bf16.mxu0 0
      %571 = vmatpush1.bf16.msra.mxu0 0
      %572 = vmatprep.subr.bf16.mxu0 0
      %573 = vmatpush1.bf16.msra.mxu0 0
      %574 = vmatprep.subr.bf16.mxu0 0
      %575 = vmatpush1.bf16.msra.mxu0 0
      %576 = vmatprep.subr.bf16.mxu0 0
      %577 = vmatpush1.bf16.msra.mxu0 0
      %578 = vmatprep.subr.bf16.mxu0 0
      %579 = vmatpush1.bf16.msra.mxu0 0
      %580 = vmatprep.subr.bf16.mxu0 0
      %581 = vmatpush1.bf16.msra.mxu0 0
      %582 = vmatprep.subr.bf16.mxu0 0
      %583 = vmatpush1.bf16.msra.mxu0 0
      %584 = vmatprep.subr.bf16.mxu0 0
      %585 = vmatpush1.bf16.msra.mxu0 0
      %586 = vmatprep.subr.bf16.mxu0 0
      %587 = vmatpush1.bf16.msra.mxu0 0
      %588 = vmatprep.subr.bf16.mxu0 0
      %589 = vmatpush1.bf16.msra.mxu0 0
      %590 = vmatprep.subr.bf16.mxu0 0
      %591 = vmatpush1.bf16.msra.mxu0 0
      %592 = vmatprep.subr.bf16.mxu0 0
      %593 = vmatpush1.bf16.msra.mxu0 0
      %594 = vmatprep.mubr.bf16.mxu0 0
      %595 = vmatmul.mubr.bf16.gmra.mrb[0].mxu0 %v549
      %v596 = vpop.f32.mrb[0].mxu0
      %v597 = vadd.f32 %v511, %v596
      %v598 = vpop.f32.mrb[0].mxu0
      %v599 = vpop.f32.mrb[0].mxu0
      %v600 = vadd.f32 %v514, %v599
      %v601 = vpop.f32.mrb[0].mxu0
      %602 = vmatprep.mubr.bf16.mxu0 0
      %603 = vmatmul.mubr.bf16.gmra.mrb[0].mxu0 %v551
      %v604 = vpop.f32.mrb[0].mxu0
      %v605 = vadd.f32 %v519, %v604
      %v606 = vpop.f32.mrb[0].mxu0
      %v607 = vpop.f32.mrb[0].mxu0
      %v608 = vadd.f32 %v522, %v607
      %v609 = vpop.f32.mrb[0].mxu0
      %610 = vmatprep.mubr.bf16.mxu0 0
      %611 = vmatmul.mubr.bf16.gmra.mrb[0].mxu0 %v553
      %v612 = vpop.f32.mrb[0].mxu0
      %v613 = vadd.f32 %v527, %v612
      %v614 = vpop.f32.mrb[0].mxu0
      %v615 = vpop.f32.mrb[0].mxu0
      %v616 = vadd.f32 %v530, %v615
      %v617 = vpop.f32.mrb[0].mxu0
      %618 = vmatprep.mubr.bf16.mxu0 0
      %619 = vmatmul.mubr.bf16.gmra.mrb[0].mxu0 %v555
      %v620 = vpop.f32.mrb[0].mxu0
      %v621 = vadd.f32 %v535, %v620
      %v622 = vpop.f32.mrb[0].mxu0
      %v623 = vpop.f32.mrb[0].mxu0
      %v624 = vadd.f32 %v538, %v623
      %v625 = vpop.f32.mrb[0].mxu0
      %626 = vmatprep.mubr.bf16.mxu0 0
      %627 = vmatmul.mubr.bf16.gmra.mrb[0].mxu0 %v557
      %v628 = vpop.f32.mrb[0].mxu0
      %v629 = vadd.f32 %v543, %v628
      %v630 = vpop.f32.mrb[0].mxu0
      %v631 = vpop.f32.mrb[0].mxu0
      %v632 = vadd.f32 %v546, %v631
      %v633 = vpop.f32.mrb[0].mxu0
      %634 = vdwg.mxu0
      %v635 = vld [vmem:[%s323] sm:$0x1]
      %v637 = vlaneseq
      %v638 = vshrl.u32 %v637, 7
      %v639 = vsub.s32 0, %v638
      %v640 = vrot.slane %v635, %v639
      %v642 = vmul.f32 %v597, %v640
      %v643 = vmul.f32 %v600, %v640
      %v644 = vmul.f32 %v605, %v640
      %v645 = vmul.f32 %v608, %v640
      %v646 = vmul.f32 %v613, %v640
      %v647 = vmul.f32 %v616, %v640
      %v648 = vmul.f32 %v621, %v640
      %v649 = vmul.f32 %v624, %v640
      %v650 = vmul.f32 %v629, %v640
      %v651 = vmul.f32 %v632, %v640
      %v652 = vld [vmem:[%s326] sm:$0x1]
      %v654 = vlaneseq
      %v655 = vshrl.u32 %v654, 7
      %v656 = vsub.s32 0, %v655
      %v657 = vrot.slane %v652, %v656
      %v659 = vadd.f32 %v642, %v657
      %v660 = vadd.f32 %v643, %v657
      %v661 = vadd.f32 %v644, %v657
      %v662 = vadd.f32 %v645, %v657
      %v663 = vadd.f32 %v646, %v657
      %v664 = vadd.f32 %v647, %v657
      %v665 = vadd.f32 %v648, %v657
      %v666 = vadd.f32 %v649, %v657
      %v667 = vadd.f32 %v650, %v657
      %v668 = vadd.f32 %v651, %v657
      %v669 = vmul.f32 %v659, 0.70710677
      %v670 = vmul.f32 %v660, 0.70710677
      %v671 = vmul.f32 %v661, 0.70710677
      %v672 = vmul.f32 %v662, 0.70710677
      %v673 = vmul.f32 %v663, 0.70710677
      %v674 = vmul.f32 %v664, 0.70710677
      %v675 = vmul.f32 %v665, 0.70710677
      %v676 = vmul.f32 %v666, 0.70710677
      %v677 = vmul.f32 %v667, 0.70710677
      %v678 = vmul.f32 %v668, 0.70710677
      %v679 = vand.u32 2147483647, %v669
      %v680 = vand.u32 2147483647, %v670
      %v681 = vand.u32 2147483647, %v671
      %v682 = vand.u32 2147483647, %v672
      %v683 = vand.u32 2147483647, %v673
      %v684 = vand.u32 2147483647, %v674
      %v685 = vand.u32 2147483647, %v675
      %v686 = vand.u32 2147483647, %v676
      %v687 = vand.u32 2147483647, %v677
      %v688 = vand.u32 2147483647, %v678
      %v689 = vmul.f32 %v679, 0.3275911
      %v690 = vmul.f32 %v680, 0.3275911
      %v691 = vmul.f32 %v681, 0.3275911
      %v692 = vmul.f32 %v682, 0.3275911
      %v693 = vmul.f32 %v683, 0.3275911
      %v694 = vmul.f32 %v684, 0.3275911
      %v695 = vmul.f32 %v685, 0.3275911
      %v696 = vmul.f32 %v686, 0.3275911
      %v697 = vmul.f32 %v687, 0.3275911
      %v698 = vmul.f32 %v688, 0.3275911
      %v699 = vadd.f32 %v689, 1.0
      %v700 = vadd.f32 %v690, 1.0
      %v701 = vadd.f32 %v691, 1.0
      %v702 = vadd.f32 %v692, 1.0
      %v703 = vadd.f32 %v693, 1.0
      %v704 = vadd.f32 %v694, 1.0
      %v705 = vadd.f32 %v695, 1.0
      %v706 = vadd.f32 %v696, 1.0
      %v707 = vadd.f32 %v697, 1.0
      %v708 = vadd.f32 %v698, 1.0
      %v709 = vrcp.pop %v699
      %v710 = vrcp.pop %v700
      %v711 = vrcp.pop %v701
      %v712 = vrcp.pop %v702
      %v713 = vrcp.pop %v703
      %v714 = vrcp.pop %v704
      %v715 = vrcp.pop %v705
      %v716 = vrcp.pop %v706
      %v717 = vrcp.pop %v707
      %v718 = vrcp.pop %v708
      %v719 = vmul.f32 %v709, 1.0614054
      %v720 = vmul.f32 %v710, 1.0614054
      %v721 = vmul.f32 %v711, 1.0614054
      %v722 = vmul.f32 %v712, 1.0614054
      %v723 = vmul.f32 %v713, 1.0614054
      %v724 = vmul.f32 %v714, 1.0614054
      %v725 = vmul.f32 %v715, 1.0614054
      %v726 = vmul.f32 %v716, 1.0614054
      %v727 = vmul.f32 %v717, 1.0614054
      %v728 = vmul.f32 %v718, 1.0614054
      %v729 = vsub.f32 %v719, 1.4531521
      %v730 = vsub.f32 %v720, 1.4531521
      %v731 = vsub.f32 %v721, 1.4531521
      %v732 = vsub.f32 %v722, 1.4531521
      %v733 = vsub.f32 %v723, 1.4531521
      %v734 = vsub.f32 %v724, 1.4531521
      %v735 = vsub.f32 %v725, 1.4531521
      %v736 = vsub.f32 %v726, 1.4531521
      %v737 = vsub.f32 %v727, 1.4531521
      %v738 = vsub.f32 %v728, 1.4531521
      %v739 = vmul.f32 %v729, %v709
      %v740 = vmul.f32 %v730, %v710
      %v741 = vmul.f32 %v731, %v711
      %v742 = vmul.f32 %v732, %v712
      %v743 = vmul.f32 %v733, %v713
      %v744 = vmul.f32 %v734, %v714
      %v745 = vmul.f32 %v735, %v715
      %v746 = vmul.f32 %v736, %v716
      %v747 = vmul.f32 %v737, %v717
      %v748 = vmul.f32 %v738, %v718
      %v749 = vadd.f32 %v739, 1.4214138
      %v750 = vadd.f32 %v740, 1.4214138
      %v751 = vadd.f32 %v741, 1.4214138
      %v752 = vadd.f32 %v742, 1.4214138
      %v753 = vadd.f32 %v743, 1.4214138
      %v754 = vadd.f32 %v744, 1.4214138
      %v755 = vadd.f32 %v745, 1.4214138
      %v756 = vadd.f32 %v746, 1.4214138
      %v757 = vadd.f32 %v747, 1.4214138
      %v758 = vadd.f32 %v748, 1.4214138
      %v759 = vmul.f32 %v749, %v709
      %v760 = vmul.f32 %v750, %v710
      %v761 = vmul.f32 %v751, %v711
      %v762 = vmul.f32 %v752, %v712
      %v763 = vmul.f32 %v753, %v713
      %v764 = vmul.f32 %v754, %v714
      %v765 = vmul.f32 %v755, %v715
      %v766 = vmul.f32 %v756, %v716
      %v767 = vmul.f32 %v757, %v717
      %v768 = vmul.f32 %v758, %v718
      %v769 = vsub.f32 %v759, 0.28449672
      %v770 = vsub.f32 %v760, 0.28449672
      %v771 = vsub.f32 %v761, 0.28449672
      %v772 = vsub.f32 %v762, 0.28449672
      %v773 = vsub.f32 %v763, 0.28449672
      %v774 = vsub.f32 %v764, 0.28449672
      %v775 = vsub.f32 %v765, 0.28449672
      %v776 = vsub.f32 %v766, 0.28449672
      %v777 = vsub.f32 %v767, 0.28449672
      %v778 = vsub.f32 %v768, 0.28449672
      %v779 = vmul.f32 %v769, %v709
      %v780 = vmul.f32 %v770, %v710
      %v781 = vmul.f32 %v771, %v711
      %v782 = vmul.f32 %v772, %v712
      %v783 = vmul.f32 %v773, %v713
      %v784 = vmul.f32 %v774, %v714
      %v785 = vmul.f32 %v775, %v715
      %v786 = vmul.f32 %v776, %v716
      %v787 = vmul.f32 %v777, %v717
      %v788 = vmul.f32 %v778, %v718
      %v789 = vadd.f32 %v779, 0.2548296
      %v790 = vadd.f32 %v780, 0.2548296
      %v791 = vadd.f32 %v781, 0.2548296
      %v792 = vadd.f32 %v782, 0.2548296
      %v793 = vadd.f32 %v783, 0.2548296
      %v794 = vadd.f32 %v784, 0.2548296
      %v795 = vadd.f32 %v785, 0.2548296
      %v796 = vadd.f32 %v786, 0.2548296
      %v797 = vadd.f32 %v787, 0.2548296
      %v798 = vadd.f32 %v788, 0.2548296
      %v799 = vmul.f32 %v789, %v709
      %v800 = vmul.f32 %v790, %v710
      %v801 = vmul.f32 %v791, %v711
      %v802 = vmul.f32 %v792, %v712
      %v803 = vmul.f32 %v793, %v713
      %v804 = vmul.f32 %v794, %v714
      %v805 = vmul.f32 %v795, %v715
      %v806 = vmul.f32 %v796, %v716
      %v807 = vmul.f32 %v797, %v717
      %v808 = vmul.f32 %v798, %v718
      %v809 = vsub.f32 0.0, %v679
      %v810 = vsub.f32 0.0, %v680
      %v811 = vsub.f32 0.0, %v681
      %v812 = vsub.f32 0.0, %v682
      %v813 = vsub.f32 0.0, %v683
      %v814 = vsub.f32 0.0, %v684
      %v815 = vsub.f32 0.0, %v685
      %v816 = vsub.f32 0.0, %v686
      %v817 = vsub.f32 0.0, %v687
      %v818 = vsub.f32 0.0, %v688
      %v819 = vmul.f32 %v809, %v679
      %v820 = vmul.f32 %v810, %v680
      %v821 = vmul.f32 %v811, %v681
      %v822 = vmul.f32 %v812, %v682
      %v823 = vmul.f32 %v813, %v683
      %v824 = vmul.f32 %v814, %v684
      %v825 = vmul.f32 %v815, %v685
      %v826 = vmul.f32 %v816, %v686
      %v827 = vmul.f32 %v817, %v687
      %v828 = vmul.f32 %v818, %v688
      %v829 = vmul.f32 %v819, 1.442695
      %v830 = vpow.pop %v829
      %v831 = vmul.f32 %v820, 1.442695
      %v832 = vpow.pop %v831
      %v833 = vmul.f32 %v821, 1.442695
      %v834 = vpow.pop %v833
      %v835 = vmul.f32 %v822, 1.442695
      %v836 = vpow.pop %v835
      %v837 = vmul.f32 %v823, 1.442695
      %v838 = vpow.pop %v837
      %v839 = vmul.f32 %v824, 1.442695
      %v840 = vpow.pop %v839
      %v841 = vmul.f32 %v825, 1.442695
      %v842 = vpow.pop %v841
      %v843 = vmul.f32 %v826, 1.442695
      %v844 = vpow.pop %v843
      %v845 = vmul.f32 %v827, 1.442695
      %v846 = vpow.pop %v845
      %v847 = vmul.f32 %v828, 1.442695
      %v848 = vpow.pop %v847
      %v849 = vmul.f32 %v799, %v830
      %v850 = vmul.f32 %v800, %v832
      %v851 = vmul.f32 %v801, %v834
      %v852 = vmul.f32 %v802, %v836
      %v853 = vmul.f32 %v803, %v838
      %v854 = vmul.f32 %v804, %v840
      %v855 = vmul.f32 %v805, %v842
      %v856 = vmul.f32 %v806, %v844
      %v857 = vmul.f32 %v807, %v846
      %v858 = vmul.f32 %v808, %v848
      %v859 = vsub.f32 1.0, %v849
      %v860 = vsub.f32 1.0, %v850
      %v861 = vsub.f32 1.0, %v851
      %v862 = vsub.f32 1.0, %v852
      %v863 = vsub.f32 1.0, %v853
      %v864 = vsub.f32 1.0, %v854
      %v865 = vsub.f32 1.0, %v855
      %v866 = vsub.f32 1.0, %v856
      %v867 = vsub.f32 1.0, %v857
      %v868 = vsub.f32 1.0, %v858
      %vm869 = vcmp.ge.f32.partialorder %v669, 0.0
      %vm870 = vcmp.ge.f32.partialorder %v670, 0.0
      %vm871 = vcmp.ge.f32.partialorder %v671, 0.0
      %vm872 = vcmp.ge.f32.partialorder %v672, 0.0
      %vm873 = vcmp.ge.f32.partialorder %v673, 0.0
      %vm874 = vcmp.ge.f32.partialorder %v674, 0.0
      %vm875 = vcmp.ge.f32.partialorder %v675, 0.0
      %vm876 = vcmp.ge.f32.partialorder %v676, 0.0
      %vm877 = vcmp.ge.f32.partialorder %v677, 0.0
      %vm878 = vcmp.ge.f32.partialorder %v678, 0.0
      %v879 = vsub.f32 0.0, %v859
      %v880 = vsub.f32 0.0, %v860
      %v881 = vsub.f32 0.0, %v861
      %v882 = vsub.f32 0.0, %v862
      %v883 = vsub.f32 0.0, %v863
      %v884 = vsub.f32 0.0, %v864
      %v885 = vsub.f32 0.0, %v865
      %v886 = vsub.f32 0.0, %v866
      %v887 = vsub.f32 0.0, %v867
      %v888 = vsub.f32 0.0, %v868
      %v889 = vsel %vm869, %v859, %v879
      %v890 = vsel %vm870, %v860, %v880
      %v891 = vsel %vm871, %v861, %v881
      %v892 = vsel %vm872, %v862, %v882
      %v893 = vsel %vm873, %v863, %v883
      %v894 = vsel %vm874, %v864, %v884
      %v895 = vsel %vm875, %v865, %v885
      %v896 = vsel %vm876, %v866, %v886
      %v897 = vsel %vm877, %v867, %v887
      %v898 = vsel %vm878, %v868, %v888
      %v899 = vmul.f32 %v659, 0.5
      %v900 = vmul.f32 %v660, 0.5
      %v901 = vmul.f32 %v661, 0.5
      %v902 = vmul.f32 %v662, 0.5
      %v903 = vmul.f32 %v663, 0.5
      %v904 = vmul.f32 %v664, 0.5
      %v905 = vmul.f32 %v665, 0.5
      %v906 = vmul.f32 %v666, 0.5
      %v907 = vmul.f32 %v667, 0.5
      %v908 = vmul.f32 %v668, 0.5
      %v909 = vadd.f32 %v889, 1.0
      %v910 = vadd.f32 %v890, 1.0
      %v911 = vadd.f32 %v891, 1.0
      %v912 = vadd.f32 %v892, 1.0
      %v913 = vadd.f32 %v893, 1.0
      %v914 = vadd.f32 %v894, 1.0
      %v915 = vadd.f32 %v895, 1.0
      %v916 = vadd.f32 %v896, 1.0
      %v917 = vadd.f32 %v897, 1.0
      %v918 = vadd.f32 %v898, 1.0
      %v919 = vmul.f32 %v899, %v909
      %v920 = vmul.f32 %v900, %v910
      %v921 = vmul.f32 %v901, %v911
      %v922 = vmul.f32 %v902, %v912
      %v923 = vmul.f32 %v903, %v913
      %v924 = vmul.f32 %v904, %v914
      %v925 = vmul.f32 %v905, %v915
      %v926 = vmul.f32 %v906, %v916
      %v927 = vmul.f32 %v907, %v917
      %v928 = vmul.f32 %v908, %v918
      %v929 = vpack.c.bf16 %v920, %v919
      %v930 = vpack.c.bf16 %v922, %v921
      %v931 = vpack.c.bf16 %v924, %v923
      %v932 = vpack.c.bf16 %v926, %v925
      %v933 = vpack.c.bf16 %v928, %v927
      %v939 = vunpack.c.l.b16 %v929
      %v940 = vunpack.c.h.b16 %v929
      %v941 = vunpack.c.l.b16 %v930
      %v942 = vunpack.c.h.b16 %v930
      %v943 = vunpack.c.l.b16 %v931
      %v944 = vunpack.c.h.b16 %v931
      %v945 = vunpack.c.l.b16 %v932
      %v946 = vunpack.c.h.b16 %v932
      %v947 = vunpack.c.l.b16 %v933
      %v948 = vunpack.c.h.b16 %v933
      %v949 = vpack.c.b16 %v939, %v939
      %v950 = vpack.c.b16 %v940, %v940
      %v951 = vpack.c.b16 %v941, %v941
      %v952 = vpack.c.b16 %v942, %v942
      %v953 = vpack.c.b16 %v943, %v943
      %v954 = vpack.c.b16 %v944, %v944
      %v955 = vpack.c.b16 %v945, %v945
      %v956 = vpack.c.b16 %v946, %v946
      %v957 = vpack.c.b16 %v947, %v947
      %v958 = vpack.c.b16 %v948, %v948
      %969 = vst [vmem:[%s335] sm:$0xf] %v949
      %970 = vst [vmem:[%s335 + $0x4] sm:$0xf] %v950
      %971 = vst [vmem:[%s335 + $0x8] sm:$0xf] %v951
      %972 = vst [vmem:[%s335 + $0xc] sm:$0xf] %v952
      %973 = vst [vmem:[%s335 + $0x10] sm:$0xf] %v953
      %974 = vst [vmem:[%s335 + $0x14] sm:$0xf] %v954
      %975 = vst [vmem:[%s335 + $0x18] sm:$0xf] %v955
      %976 = vst [vmem:[%s335 + $0x1c] sm:$0xf] %v956
      %977 = vst [vmem:[%s335 + $0x20] sm:$0xf] %v957
      %978 = vst [vmem:[%s335 + $0x24] sm:$0xf] %v958
      %s979 = smul.u32 10, %s21
      %p980 = scmp.lt.s32.totalorder %s20, 1
      %s981 = scalar_select %p980, %s20, 1
      %p982 = scmp.lt.s32.totalorder %s979, 9
      %s983 = scalar_select %p982, %s979, 9
      %s984 = smul.addr %s981, 10
      %s985 = sadd.s32 %s983, %s984
      %s986 = smul.addr %s985, 4
      %s987 = scalar_lea.vmem %s5, %s986
      // Predicated region
      $region41: #{_lambda_.5} parent=39 // pred_check
        %p988 = pneg %p177
      $region42: #{_lambda_.5} parent=39 // pred_check_branch
        %990 = sbr.rel (%p988) target = $region44
      $region43: #{_lambda_.5} parent=39 // pred_region
        %s991 = smul.u32 10, %s21
      $region44: #{_lambda_.5} parent=39 // pred_fallthru
        _
    $region40: #{_lambda_.5} parent=5 // pred_fallthru
      _
    %p992 = scmp.le.s32.totalorder 2, %s11
    // Predicated region
    $region45: #{_lambda_.5} parent=5 // pred_check
      %p993 = pneg %p992
    $region46: #{_lambda_.5} parent=5 // pred_check_branch
      %995 = sbr.rel (%p993) target = $region48
    $region47: #{_lambda_.5} parent=5 // pred_region
      %s996 = ssub.s32 %s11, 2
      // Predicated region
      $region49: #{_lambda_.5} parent=47 // pred_check
        %p997 = pneg %p183
      $region50: #{_lambda_.5} parent=47 // pred_check_branch
        %999 = sbr.rel (%p997) target = $region52
      $region51: #{_lambda_.5} parent=47 // pred_region
        %s1000 = smul.u32 10, %s23
        %p1001 = scmp.lt.s32.totalorder %s22, 1
        %s1002 = scalar_select %p1001, %s22, 1
        %p1003 = scmp.lt.s32.totalorder %s1000, 9
        %s1004 = scalar_select %p1003, %s1000, 9
        %s1005 = smul.addr %s1002, 10
        %s1006 = sadd.s32 %s1004, %s1005
        %s1007 = smul.addr %s1006, 4
        %s1008 = scalar_lea.vmem %s5, %s1007
      $region52: #{_lambda_.5} parent=47 // pred_fallthru
        _
    $region48: #{_lambda_.5} parent=5 // pred_fallthru
      _
  $region6: #{_lambda_.5} parent=0 // loop_footer
    %s15 = sadd.s32 1, %s11
  $region7: #{_lambda_.5} parent=0 // loop_footer_branch
    %10 = sbr.rel target = $region3
  $region8: #{_lambda_.5} parent=0 // loop_exit
    _

// kernel: _lambda_.7
$region0: #{_lambda_.7}
  #allocation0 [shape = 'u32[]', space=smem, size = 0x4, offset = 0x4, fixed_abs, tag = 'smem constant byte address 0x4 - core index']
  #allocation1 [shape = 'u32[144,128]{1,0:T(1,128)}', space=vmem, size = 0x12000, scoped, tag = 'internal scratch']
  %s0 = inlined_call_operand.vmem [shape: bf16[2,16,256], index: 0, kind: input, shape index: {}]
  %s1 = inlined_call_operand.vmem [shape: bf16[256,128], index: 1, kind: input, shape index: {}]
  %s2 = inlined_call_operand.vmem [shape: f32[2,16,128], index: 2, kind: output, shape index: {}]
  %s3 = sld [smem:[#allocation0]]
  $region41: #{_lambda_.7} parent=0
    _
  %s5 = ssub.s32 1, %s3
  %s6 = scalar_select 0, %s5, %s3
  loop: start=0, step=1, limit=4
  $region2: #{_lambda_.7} parent=0 // loop_pre_header
    _
  $region3: #{_lambda_.7} parent=0 // loop_header
    %s8 = sphi 0, %s12
    %p9 = scmp.ge.s32.totalorder %s8, 4
    %s15 = sphi 0, %s27
    %s16 = sphi 0, %s23
    %s17 = sphi 0, %s15
    %s18 = sphi 0, %s16
    %s19 = sphi 0, %s17
    %s20 = sphi 0, %s18
    %s32 = sphi 0, %s34
    %s35 = sphi 0, %s32
    %s36 = sphi 0, %s35
    %s52 = sphi 0, %s36
    %s56 = sphi 0, %s56
    %s58 = sphi 0, %s56
    %s59 = sphi 0, %s58
    %s73 = sphi 0, %s59
    %s81 = sphi 0, %s83
    %s84 = sphi 0, %s81
    %s85 = sphi 0, %s84
    %s101 = sphi 0, %s85
  $region4: #{_lambda_.7} parent=0 // loop_header_branch
    %11 = sbr.rel (%p9) target = $region8
  $region5: #{_lambda_.7} parent=0 // loop_body
    %s13 = ssub.s32 %s8, 1
    %s14 = ssub.s32 %s8, 2
    %s21 = sadd.s32 1, %s16
    %p22 = scmp.ge.s32.totalorder %s21, 1
    %s23 = scalar_select %p22, 0, %s21
    %s24 = sadd.s32 1, %s15
    %s25 = scalar_select %p22, %s24, %s15
    %p26 = scmp.ge.s32.totalorder %s25, 2
    %s27 = scalar_select %p26, 0, %s25
    %s28 = ssub.s32 %s15, %s27
    %s29 = ssub.s32 %s16, %s23
    %s30 = sor.u32 %s28, %s29
    %p31 = scmp.eq.s32.totalorder %s30, 0
    %s33 = sadd.s32 %s32, 1
    %s34 = scalar_select %p31, %s32, %s33
    %p37 = pneg %p31
    %p38 = scmp.eq.s32.totalorder %s8, 1
    %p39 = por %p37, %p38
    %p40 = scmp.ne.s32.totalorder %s32, %s35
    %p41 = scmp.eq.s32.totalorder %s8, 0
    %p42 = por %p40, %p41
    %p43 = scmp.ne.s32.totalorder %s32, %s35
    %p44 = scmp.eq.s32.totalorder %s13, 1
    %p45 = por %p43, %p44
    %p46 = scmp.ne.s32.totalorder %s35, %s36
    %p47 = scmp.eq.s32.totalorder %s13, 0
    %p48 = por %p46, %p47
    %p49 = scmp.ne.s32.totalorder %s35, %s36
    %p50 = scmp.eq.s32.totalorder %s14, 1
    %p51 = por %p49, %p50
    %p53 = scmp.ne.s32.totalorder %s36, %s52
    %p54 = scmp.eq.s32.totalorder %s14, 0
    %p55 = por %p53, %p54
    %s57 = sadd.s32 %s56, 1
    %p60 = scmp.eq.s32.totalorder %s8, 1
    %p61 = scmp.ne.s32.totalorder %s56, %s58
    %p62 = scmp.eq.s32.totalorder %s8, 0
    %p63 = por %p61, %p62
    %p64 = scmp.ne.s32.totalorder %s56, %s58
    %p65 = scmp.eq.s32.totalorder %s13, 1
    %p66 = por %p64, %p65
    %p67 = scmp.ne.s32.totalorder %s58, %s59
    %p68 = scmp.eq.s32.totalorder %s13, 0
    %p69 = por %p67, %p68
    %p70 = scmp.ne.s32.totalorder %s58, %s59
    %p71 = scmp.eq.s32.totalorder %s14, 1
    %p72 = por %p70, %p71
    %p74 = scmp.ne.s32.totalorder %s59, %s73
    %p75 = scmp.eq.s32.totalorder %s14, 0
    %p76 = por %p74, %p75
    %s77 = ssub.s32 %s15, %s27
    %s78 = ssub.s32 %s16, %s23
    %s79 = sor.u32 %s77, %s78
    %p80 = scmp.eq.s32.totalorder %s79, 0
    %s82 = sadd.s32 %s81, 1
    %s83 = scalar_select %p80, %s81, %s82
    %p86 = pneg %p80
    %p87 = scmp.eq.s32.totalorder %s8, 1
    %p88 = por %p86, %p87
    %p89 = scmp.ne.s32.totalorder %s81, %s84
    %p90 = scmp.eq.s32.totalorder %s8, 0
    %p91 = por %p89, %p90
    %p92 = scmp.ne.s32.totalorder %s81, %s84
    %p93 = scmp.eq.s32.totalorder %s13, 1
    %p94 = por %p92, %p93
    %p95 = scmp.ne.s32.totalorder %s84, %s85
    %p96 = scmp.eq.s32.totalorder %s13, 0
    %p97 = por %p95, %p96
    %p98 = scmp.ne.s32.totalorder %s84, %s85
    %p99 = scmp.eq.s32.totalorder %s14, 1
    %p100 = por %p98, %p99
    %p102 = scmp.ne.s32.totalorder %s85, %s101
    %p103 = scmp.eq.s32.totalorder %s14, 0
    %p104 = por %p102, %p103
    %p105 = scmp.le.s32.totalorder 1, %s8
    %p106 = scmp.lt.s32.totalorder %s8, 3
    %p107 = pnand %p105, %p106
    %p108 = pneg %p107
    // Predicated region
    $region9: #{_lambda_.7} parent=5 // pred_check
      _
    $region10: #{_lambda_.7} parent=5 // pred_check_branch
      %110 = sbr.rel (%p107) target = $region12
    $region11: #{_lambda_.7} parent=5 // pred_region
      %s111 = ssub.s32 %s8, 1
      // Predicated region
      $region13: #{_lambda_.7} parent=11 // pred_check
        %p112 = pneg %p69
      $region14: #{_lambda_.7} parent=11 // pred_check_branch
        %114 = sbr.rel (%p112) target = $region16
      $region15: #{_lambda_.7} parent=11 // pred_region
        _
      $region16: #{_lambda_.7} parent=11 // pred_fallthru
        _
    $region12: #{_lambda_.7} parent=5 // pred_fallthru
      _
    %p115 = scmp.lt.s32.totalorder %s8, 2
    // Predicated region
    $region17: #{_lambda_.7} parent=5 // pred_check
      %p116 = pneg %p115
    $region18: #{_lambda_.7} parent=5 // pred_check_branch
      %118 = sbr.rel (%p116) target = $region20
    $region19: #{_lambda_.7} parent=5 // pred_region
      // Predicated region
      $region21: #{_lambda_.7} parent=19 // pred_check
        %p119 = pneg %p42
      $region22: #{_lambda_.7} parent=19 // pred_check_branch
        %121 = sbr.rel (%p119) target = $region24
      $region23: #{_lambda_.7} parent=19 // pred_region
        %s122 = smul.u32 2, %s16
        %p123 = scmp.lt.s32.totalorder %s15, 1
        %s124 = scalar_select %p123, %s15, 1
        %p125 = scmp.lt.s32.totalorder %s122, 1
        %s126 = scalar_select %p125, %s122, 1
        %s127 = smul.addr %s126, 2
        %s128 = smul.addr %s124, 4
        %s129 = sadd.s32 %s127, %s128
        %s130 = smul.addr %s129, 4
        %s131 = scalar_lea.vmem %s0, %s130
        %s132 = smul.u32 2, %s16
      $region24: #{_lambda_.7} parent=19 // pred_fallthru
        _
    $region20: #{_lambda_.7} parent=5 // pred_fallthru
      _
    %p133 = scmp.le.s32.totalorder 1, %s8
    %p134 = scmp.lt.s32.totalorder %s8, 3
    %p135 = pnand %p133, %p134
    %p136 = pneg %p135
    // Predicated region
    $region25: #{_lambda_.7} parent=5 // pred_check
      _
    $region26: #{_lambda_.7} parent=5 // pred_check_branch
      %138 = sbr.rel (%p135) target = $region28
    $region27: #{_lambda_.7} parent=5 // pred_region
      %s139 = ssub.s32 %s8, 1
      %s140 = smul.u32 2, %s18
      %p141 = scmp.lt.s32.totalorder %s17, 1
      %s142 = scalar_select %p141, %s17, 1
      %p143 = scmp.lt.s32.totalorder %s140, 1
      %s144 = scalar_select %p143, %s140, 1
      %s145 = smul.addr %s144, 2
      %s146 = smul.addr %s142, 4
      %s147 = sadd.s32 %s145, %s146
      %s148 = smul.addr %s147, 4
      %s149 = scalar_lea.vmem %s0, %s148
      %p150 = pneg %p48
      %p151 = pneg %p45
      %p152 = pneg %p69
      %p153 = pneg %p66
      %p154 = pneg %p97
      %p155 = pneg %p94
      %s156 = smul.u32 2, %s18
      %p157 = scmp.lt.s32.totalorder %s17, 1
      %s158 = scalar_select %p157, %s17, 1
      %p159 = scmp.lt.s32.totalorder %s156, 1
      %s160 = scalar_select %p159, %s156, 1
      %s161 = smul.addr %s158, 2
      %s162 = sadd.s32 %s160, %s161
      %s163 = smul.addr %s162, 8
      %s164 = scalar_lea.vmem %s2, %s163
      %s165 = smul.u32 2, %s18
      %p166 = scmp.lt.s32.totalorder %s17, 1
      %s167 = scalar_select %p166, %s17, 1
      %p168 = scmp.lt.s32.totalorder %s165, 1
      %s169 = scalar_select %p168, %s165, 1
      %s170 = smul.addr %s169, 2
      %s171 = smul.addr %s167, 4
      %s172 = sadd.s32 %s170, %s171
      %s173 = smul.addr %s172, 4
      %s174 = scalar_lea.vmem %s0, %s173
      %s175 = smul.u32 2, %s18
      %s176 = smul.u32 2, %s18
      %p177 = scmp.lt.s32.totalorder %s17, 1
      %s178 = scalar_select %p177, %s17, 1
      %p179 = scmp.lt.s32.totalorder %s176, 1
      %s180 = scalar_select %p179, %s176, 1
      %s181 = smul.addr %s178, 2
      %s182 = sadd.s32 %s180, %s181
      %s183 = smul.addr %s182, 8
      %s184 = scalar_lea.vmem %s2, %s183
      %s185 = smul.u32 2, %s18
      %v187 = vld [vmem:[%s174] sm:$0xff]
      %v188 = vld [vmem:[%s174 + $0x8] sm:$0xff]
      %v189 = vld [vmem:[%s1] sm:$0xf]
      %v190 = vld [vmem:[%s1 + $0x4] sm:$0xf]
      %v191 = vld [vmem:[%s1 + $0x8] sm:$0xf]
      %v192 = vld [vmem:[%s1 + $0xc] sm:$0xf]
      %v193 = vld [vmem:[%s1 + $0x10] sm:$0xf]
      %v194 = vld [vmem:[%s1 + $0x14] sm:$0xf]
      %v195 = vld [vmem:[%s1 + $0x18] sm:$0xf]
      %v196 = vld [vmem:[%s1 + $0x1c] sm:$0xf]
      %v197 = vld [vmem:[%s1 + $0x20] sm:$0xf]
      %v198 = vld [vmem:[%s1 + $0x24] sm:$0xf]
      %v199 = vld [vmem:[%s1 + $0x28] sm:$0xf]
      %v200 = vld [vmem:[%s1 + $0x2c] sm:$0xf]
      %v201 = vld [vmem:[%s1 + $0x30] sm:$0xf]
      %v202 = vld [vmem:[%s1 + $0x34] sm:$0xf]
      %v203 = vld [vmem:[%s1 + $0x38] sm:$0xf]
      %v204 = vld [vmem:[%s1 + $0x3c] sm:$0xf]
      %v205 = vld [vmem:[%s1 + $0x40] sm:$0xf]
      %v206 = vld [vmem:[%s1 + $0x44] sm:$0xf]
      %v207 = vld [vmem:[%s1 + $0x48] sm:$0xf]
      %v208 = vld [vmem:[%s1 + $0x4c] sm:$0xf]
      %v209 = vld [vmem:[%s1 + $0x50] sm:$0xf]
      %v210 = vld [vmem:[%s1 + $0x54] sm:$0xf]
      %v211 = vld [vmem:[%s1 + $0x58] sm:$0xf]
      %v212 = vld [vmem:[%s1 + $0x5c] sm:$0xf]
      %v213 = vld [vmem:[%s1 + $0x60] sm:$0xf]
      %v214 = vld [vmem:[%s1 + $0x64] sm:$0xf]
      %v215 = vld [vmem:[%s1 + $0x68] sm:$0xf]
      %v216 = vld [vmem:[%s1 + $0x6c] sm:$0xf]
      %v217 = vld [vmem:[%s1 + $0x70] sm:$0xf]
      %v218 = vld [vmem:[%s1 + $0x74] sm:$0xf]
      %v219 = vld [vmem:[%s1 + $0x78] sm:$0xf]
      %v220 = vld [vmem:[%s1 + $0x7c] sm:$0xf]
      %v223 = vunpack.c.l.b16 %v187
      %v224 = vunpack.c.h.b16 %v187
      %v225 = vunpack.c.l.b16 %v188
      %v226 = vunpack.c.h.b16 %v188
      %v227 = vpack.c.b16 %v225, %v223
      %v228 = vpack.c.b16 %v226, %v224
      %v263 = vunpack.c.l.b16 %v189
      %v264 = vunpack.c.l.b16 %v190
      %v265 = vunpack.c.l.b16 %v191
      %v266 = vunpack.c.l.b16 %v192
      %v267 = vunpack.c.l.b16 %v193
      %v268 = vunpack.c.l.b16 %v194
      %v269 = vunpack.c.l.b16 %v195
      %v270 = vunpack.c.l.b16 %v196
      %v271 = vunpack.c.l.b16 %v197
      %v272 = vunpack.c.l.b16 %v198
      %v273 = vunpack.c.l.b16 %v199
      %v274 = vunpack.c.l.b16 %v200
      %v275 = vunpack.c.l.b16 %v201
      %v276 = vunpack.c.l.b16 %v202
      %v277 = vunpack.c.l.b16 %v203
      %v278 = vunpack.c.l.b16 %v204
      %v279 = vunpack.c.l.b16 %v205
      %v280 = vunpack.c.l.b16 %v206
      %v281 = vunpack.c.l.b16 %v207
      %v282 = vunpack.c.l.b16 %v208
      %v283 = vunpack.c.l.b16 %v209
      %v284 = vunpack.c.l.b16 %v210
      %v285 = vunpack.c.l.b16 %v211
      %v286 = vunpack.c.l.b16 %v212
      %v287 = vunpack.c.l.b16 %v213
      %v288 = vunpack.c.l.b16 %v214
      %v289 = vunpack.c.l.b16 %v215
      %v290 = vunpack.c.l.b16 %v216
      %v291 = vunpack.c.l.b16 %v217
      %v292 = vunpack.c.l.b16 %v218
      %v293 = vunpack.c.l.b16 %v219
      %v294 = vunpack.c.l.b16 %v220
      %v295 = vpack.c.b16 %v264, %v263
      %v296 = vpack.c.b16 %v266, %v265
      %v297 = vpack.c.b16 %v268, %v267
      %v298 = vpack.c.b16 %v270, %v269
      %v299 = vpack.c.b16 %v272, %v271
      %v300 = vpack.c.b16 %v274, %v273
      %v301 = vpack.c.b16 %v276, %v275
      %v302 = vpack.c.b16 %v278, %v277
      %v303 = vpack.c.b16 %v280, %v279
      %v304 = vpack.c.b16 %v282, %v281
      %v305 = vpack.c.b16 %v284, %v283
      %v306 = vpack.c.b16 %v286, %v285
      %v307 = vpack.c.b16 %v288, %v287
      %v308 = vpack.c.b16 %v290, %v289
      %v309 = vpack.c.b16 %v292, %v291
      %v310 = vpack.c.b16 %v294, %v293
      %327 = vmatprep.subr.bf16.mxu0 0
      %328 = vmatpush1.bf16.msra.mxu0 %v295
      %329 = vmatprep.subr.bf16.mxu0 0
      %330 = vmatpush1.bf16.msra.mxu0 %v296
      %331 = vmatprep.subr.bf16.mxu0 0
      %332 = vmatpush1.bf16.msra.mxu0 %v297
      %333 = vmatprep.subr.bf16.mxu0 0
      %334 = vmatpush1.bf16.msra.mxu0 %v298
      %335 = vmatprep.subr.bf16.mxu0 0
      %336 = vmatpush1.bf16.msra.mxu0 %v299
      %337 = vmatprep.subr.bf16.mxu0 0
      %338 = vmatpush1.bf16.msra.mxu0 %v300
      %339 = vmatprep.subr.bf16.mxu0 0
      %340 = vmatpush1.bf16.msra.mxu0 %v301
      %341 = vmatprep.subr.bf16.mxu0 0
      %342 = vmatpush1.bf16.msra.mxu0 %v302
      %343 = vmatprep.subr.bf16.mxu0 0
      %344 = vmatpush1.bf16.msra.mxu0 %v303
      %345 = vmatprep.subr.bf16.mxu0 0
      %346 = vmatpush1.bf16.msra.mxu0 %v304
      %347 = vmatprep.subr.bf16.mxu0 0
      %348 = vmatpush1.bf16.msra.mxu0 %v305
      %349 = vmatprep.subr.bf16.mxu0 0
      %350 = vmatpush1.bf16.msra.mxu0 %v306
      %351 = vmatprep.subr.bf16.mxu0 0
      %352 = vmatpush1.bf16.msra.mxu0 %v307
      %353 = vmatprep.subr.bf16.mxu0 0
      %354 = vmatpush1.bf16.msra.mxu0 %v308
      %355 = vmatprep.subr.bf16.mxu0 0
      %356 = vmatpush1.bf16.msra.mxu0 %v309
      %357 = vmatprep.subr.bf16.mxu0 0
      %358 = vmatpush1.bf16.msra.mxu0 %v310
      %359 = vmatprep.mubr.bf16.mxu0 %v228
      %360 = vmatmul.mubr.bf16.gmra.mrb[0].mxu0 %v227
      %v361 = vpop.f32.mrb[0].mxu0
      %v362 = vadd.f32 0.0, %v361
      %v363 = vpop.f32.mrb[0].mxu0
      %v364 = vpop.f32.mrb[0].mxu0
      %v365 = vadd.f32 0.0, %v364
      %v366 = vpop.f32.mrb[0].mxu0
      %367 = vdwg.mxu0
      %v368 = vmul.f32 %v362, 0.70710677
      %v369 = vmul.f32 %v365, 0.70710677
      %v370 = vand.u32 2147483647, %v368
      %v371 = vand.u32 2147483647, %v369
      %v372 = vmul.f32 %v370, 0.3275911
      %v373 = vmul.f32 %v371, 0.3275911
      %v374 = vadd.f32 %v372, 1.0
      %v375 = vadd.f32 %v373, 1.0
      %v376 = vrcp.pop %v374
      %v377 = vrcp.pop %v375
      %v378 = vmul.f32 %v376, 1.0614054
      %v379 = vmul.f32 %v377, 1.0614054
      %v380 = vsub.f32 %v378, 1.4531521
      %v381 = vsub.f32 %v379, 1.4531521
      %v382 = vmul.f32 %v380, %v376
      %v383 = vmul.f32 %v381, %v377
      %v384 = vadd.f32 %v382, 1.4214138
      %v385 = vadd.f32 %v383, 1.4214138
      %v386 = vmul.f32 %v384, %v376
      %v387 = vmul.f32 %v385, %v377
      %v388 = vsub.f32 %v386, 0.28449672
      %v389 = vsub.f32 %v387, 0.28449672
      %v390 = vmul.f32 %v388, %v376
      %v391 = vmul.f32 %v389, %v377
      %v392 = vadd.f32 %v390, 0.2548296
      %v393 = vadd.f32 %v391, 0.2548296
      %v394 = vmul.f32 %v392, %v376
      %v395 = vmul.f32 %v393, %v377
      %v396 = vsub.f32 0.0, %v370
      %v397 = vsub.f32 0.0, %v371
      %v398 = vmul.f32 %v396, %v370
      %v399 = vmul.f32 %v397, %v371
      %v400 = vmul.f32 %v398, 1.442695
      %v401 = vpow.pop %v400
      %v402 = vmul.f32 %v399, 1.442695
      %v403 = vpow.pop %v402
      %v404 = vmul.f32 %v394, %v401
      %v405 = vmul.f32 %v395, %v403
      %v406 = vsub.f32 1.0, %v404
      %v407 = vsub.f32 1.0, %v405
      %vm408 = vcmp.ge.f32.partialorder %v368, 0.0
      %vm409 = vcmp.ge.f32.partialorder %v369, 0.0
      %v410 = vsub.f32 0.0, %v406
      %v411 = vsub.f32 0.0, %v407
      %v412 = vsel %vm408, %v406, %v410
      %v413 = vsel %vm409, %v407, %v411
      %v414 = vmul.f32 %v362, 0.5
      %v415 = vmul.f32 %v365, 0.5
      %v416 = vadd.f32 %v412, 1.0
      %v417 = vadd.f32 %v413, 1.0
      %v418 = vmul.f32 %v414, %v416
      %v419 = vmul.f32 %v415, %v417
      %420 = vst [vmem:[%s184] sm:$0xff] %v418
      %421 = vst [vmem:[%s184 + $0x8] sm:$0xff] %v419
      %s422 = smul.u32 2, %s18
      %p423 = scmp.lt.s32.totalorder %s17, 1
      %s424 = scalar_select %p423, %s17, 1
      %p425 = scmp.lt.s32.totalorder %s422, 1
      %s426 = scalar_select %p425, %s422, 1
      %s427 = smul.addr %s424, 2
      %s428 = sadd.s32 %s426, %s427
      %s429 = smul.addr %s428, 8
      %s430 = scalar_lea.vmem %s2, %s429
      // Predicated region
      $region29: #{_lambda_.7} parent=27 // pred_check
        %p431 = pneg %p94
      $region30: #{_lambda_.7} parent=27 // pred_check_branch
        %433 = sbr.rel (%p431) target = $region32
      $region31: #{_lambda_.7} parent=27 // pred_region
        %s434 = smul.u32 2, %s18
      $region32: #{_lambda_.7} parent=27 // pred_fallthru
        _
    $region28: #{_lambda_.7} parent=5 // pred_fallthru
      _
    %p435 = scmp.le.s32.totalorder 2, %s8
    // Predicated region
    $region33: #{_lambda_.7} parent=5 // pred_check
      %p436 = pneg %p435
    $region34: #{_lambda_.7} parent=5 // pred_check_branch
      %438 = sbr.rel (%p436) target = $region36
    $region35: #{_lambda_.7} parent=5 // pred_region
      %s439 = ssub.s32 %s8, 2
      // Predicated region
      $region37: #{_lambda_.7} parent=35 // pred_check
        %p440 = pneg %p100
      $region38: #{_lambda_.7} parent=35 // pred_check_branch
        %442 = sbr.rel (%p440) target = $region40
      $region39: #{_lambda_.7} parent=35 // pred_region
        %s443 = smul.u32 2, %s20
        %p444 = scmp.lt.s32.totalorder %s19, 1
        %s445 = scalar_select %p444, %s19, 1
        %p446 = scmp.lt.s32.totalorder %s443, 1
        %s447 = scalar_select %p446, %s443, 1
        %s448 = smul.addr %s445, 2
        %s449 = sadd.s32 %s447, %s448
        %s450 = smul.addr %s449, 8
        %s451 = scalar_lea.vmem %s2, %s450
      $region40: #{_lambda_.7} parent=35 // pred_fallthru
        _
    $region36: #{_lambda_.7} parent=5 // pred_fallthru
      _
  $region6: #{_lambda_.7} parent=0 // loop_footer
    %s12 = sadd.s32 1, %s8
  $region7: #{_lambda_.7} parent=0 // loop_footer_branch
    %7 = sbr.rel target = $region3
  $region8: #{_lambda_.7} parent=0 // loop_exit
    _

</llo_original>
